<compile_context>
chip_gen: v7x
topology: tpu7x:2x2x1
jax: 0.10.0
libtpu: 0.0.40
codegen_flags: <defaults>
</compile_context>

<pallas_src>
import functools

import jax
import jax.numpy as jnp
from jax import lax
from jax.experimental import pallas as pl
from jax.experimental.pallas import tpu as pltpu


def _round_up(x, m):
    return (x + m - 1) // m * m


# ---------------------------------------------------------------------------
# Kernel
# ---------------------------------------------------------------------------
def _bilstm_kernel(x_ref, wih_ref, bias_ref, whh_f_ref, whh_b_ref, wemb_ref, bemb_ref,
                   out_ref, pre_ref, hs_ref, *, T, Bb, Hp, unroll):
    """One batch block.  x_ref: (T*Bb, nIn) time-major rows.  out_ref: (T*Bb, nOutp)."""
    f32 = jnp.float32
    G4 = 4 * Hp

    # (1) Hoisted input->gate matmul for ALL timesteps & both directions, biases folded.
    pre_ref[...] = (jnp.dot(x_ref[...], wih_ref[...], preferred_element_type=f32)
                    + bias_ref[...]).astype(pre_ref.dtype)

    whh_f = whh_f_ref[...]                       # (Hp, 4Hp) dense forward recurrent weight
    whh_b = whh_b_ref[...]                       # (Hp, 4Hp) dense backward recurrent weight
    cdt = whh_f.dtype

    def cell(gates, c):
        # PyTorch gate order i, f, g, o; every slice is Hp wide -> 128-lane aligned.
        i = jax.nn.sigmoid(gates[:, 0:Hp])
        f = jax.nn.sigmoid(gates[:, Hp:2 * Hp])
        g = jnp.tanh(gates[:, 2 * Hp:3 * Hp])
        o = jax.nn.sigmoid(gates[:, 3 * Hp:4 * Hp])
        c_new = f * c + i * g                    # cell state kept in f32
        return o * jnp.tanh(c_new), c_new

    def body(s, carry):
        h_f, c_f, h_b, c_b = carry               # each (Bb, Hp) float32
        tb = T - 1 - s
        rf = pl.multiple_of(s * Bb, 8)           # sublane-aligned row offsets
        rb = pl.multiple_of(tb * Bb, 8)

        # (2) fwd|bwd-split layout: load only the half each direction needs.
        pre_f = pre_ref[pl.ds(rf, Bb), 0:G4].astype(f32)        # (Bb, 4Hp) @ time s
        pre_b = pre_ref[pl.ds(rb, Bb), G4:2 * G4].astype(f32)   # (Bb, 4Hp) @ time T-1-s

        # (1) two dense recurrent matmuls per timestep (no block-diagonal zero FLOPs).
        g_f = pre_f + jnp.dot(h_f.astype(cdt), whh_f, preferred_element_type=f32)
        g_b = pre_b + jnp.dot(h_b.astype(cdt), whh_b, preferred_element_type=f32)

        h_f, c_f = cell(g_f, c_f)
        h_b, c_b = cell(g_b, c_b)

        # Stash hidden states; projection is deferred past the loop.
        hs_ref[pl.ds(rf, Bb), 0:Hp] = h_f.astype(hs_ref.dtype)       # forward @ time s
        hs_ref[pl.ds(rb, Bb), Hp:2 * Hp] = h_b.astype(hs_ref.dtype)  # backward @ time T-1-s
        return h_f, c_f, h_b, c_b

    z = jnp.zeros((Bb, Hp), f32)
    lax.fori_loop(0, T, body, (z, z, z, z), unroll=unroll)

    # (4) deferred, lane-dense output projection: one big matmul + one dense store.
    out_ref[...] = (jnp.dot(hs_ref[...], wemb_ref[...], preferred_element_type=f32)
                    + bemb_ref[...]).astype(out_ref.dtype)


# ---------------------------------------------------------------------------
# Parameter packing (call ONCE at model init and cache the result)
# ---------------------------------------------------------------------------
def pack_params(raw, *, compute_dtype=jnp.bfloat16):
    """Pack PyTorch-layout weights into the fused, 128-padded kernel layout.

    Gate-column layout (width Hp each): [i_f, f_f, g_f, o_f | i_b, f_b, g_b, o_b].
    Padded rows/cols are zero, which keeps padded hidden units exactly 0 for all time
    (gates=0 -> c stays 0, h stays 0), so padding never leaks into real outputs.
    """
    nIn = raw["W_ih_f"].shape[1]
    H = raw["W_hh_f"].shape[1]
    nOut = raw["W_emb"].shape[0]
    Hp = _round_up(H, 128)
    nOutp = _round_up(nOut, 128)

    wih = jnp.zeros((nIn, 8 * Hp), jnp.float32)
    whh_f = jnp.zeros((Hp, 4 * Hp), jnp.float32)
    whh_b = jnp.zeros((Hp, 4 * Hp), jnp.float32)
    bias = jnp.zeros((1, 8 * Hp), jnp.float32)
    for k in range(4):                                  # gate order i, f, g, o
        rows = slice(k * H, (k + 1) * H)
        cf = k * Hp                                     # forward gate-k columns
        cb = 4 * Hp + k * Hp                            # backward gate-k columns
        wih = wih.at[:, cf:cf + H].set(raw["W_ih_f"][rows, :].T)
        wih = wih.at[:, cb:cb + H].set(raw["W_ih_b"][rows, :].T)
        whh_f = whh_f.at[0:H, cf:cf + H].set(raw["W_hh_f"][rows, :].T)
        whh_b = whh_b.at[0:H, cf:cf + H].set(raw["W_hh_b"][rows, :].T)
        bias = bias.at[0, cf:cf + H].set(raw["b_ih_f"][rows] + raw["b_hh_f"][rows])
        bias = bias.at[0, cb:cb + H].set(raw["b_ih_b"][rows] + raw["b_hh_b"][rows])

    wemb = jnp.zeros((2 * Hp, nOutp), jnp.float32)
    wemb = wemb.at[0:H, 0:nOut].set(raw["W_emb"][:, :H].T)
    wemb = wemb.at[Hp:Hp + H, 0:nOut].set(raw["W_emb"][:, H:].T)
    bemb = jnp.zeros((1, nOutp), jnp.float32).at[0, 0:nOut].set(raw["b_emb"])

    return {
        "wih": wih.astype(compute_dtype),
        "whh_f": whh_f.astype(compute_dtype),
        "whh_b": whh_b.astype(compute_dtype),
        "bias": bias,                                    # stays f32 (folded into f32 acc)
        "wemb": wemb.astype(compute_dtype),
        "bemb": bemb,                                    # stays f32
        "dims": {"nIn": nIn, "H": H, "nOut": nOut, "Hp": Hp, "nOutp": nOutp},
        "compute_dtype": compute_dtype,
    }


# ---------------------------------------------------------------------------
# Forward wrapper (hot path)
# ---------------------------------------------------------------------------
def bidirectional_lstm(x, packed, *, batch_block=None, unroll=True):
    """x: (T, B, nIn) float32.  packed: output of pack_params.  Returns (T, B, nOut) f32.

    batch_block: rows of the padded batch handled per grid step (multiple of 8).
    None -> single block.  Use >1 block on v7x so both TensorCores are used.
    """
    d = packed["dims"]
    nIn, nOut, Hp, nOutp = d["nIn"], d["nOut"], d["Hp"], d["nOutp"]
    cdt = packed["compute_dtype"]

    T, B, nIn_x = x.shape
    assert nIn_x == nIn

    if batch_block is None:
        Bb = _round_up(B, 8)
    else:
        assert batch_block % 8 == 0
        Bb = batch_block
    Bp = _round_up(B, Bb)
    n_blocks = Bp // Bb

    # Pad batch, then lay rows out as n_blocks contiguous time-major (T*Bb, nIn) slabs
    # so every block / per-step slice is sublane-aligned and lane-dense.
    xp = jnp.zeros((T, Bp, nIn), cdt).at[:, :B, :].set(x.astype(cdt))
    x2d = (xp.reshape(T, n_blocks, Bb, nIn)
             .transpose(1, 0, 2, 3)
             .reshape(n_blocks * T * Bb, nIn))

    # Explicit VMEM budget (default scoped limit is only 16/32 MiB).
    csize = jnp.dtype(cdt).itemsize
    est = (2 * T * Bb * nIn * csize                                     # x block (dbl-buf)
           + 2 * (nIn * 8 * Hp + 8 * Hp * Hp + 2 * Hp * nOutp) * csize  # weight tiles
           + 2 * (8 * Hp + nOutp) * 4                                   # f32 bias rows
           + 2 * T * Bb * nOutp * 4                                     # f32 output block
           + T * Bb * (8 * Hp + 2 * Hp) * csize)                        # pre + hs scratch
    vmem_limit = max(16 << 20, min(int(est * 1.5) + (2 << 20), 100 << 20))

    kernel = functools.partial(_bilstm_kernel, T=T, Bb=Bb, Hp=Hp, unroll=unroll)

    grid_spec = pltpu.PrefetchScalarGridSpec(
        num_scalar_prefetch=0,
        grid=(n_blocks,),
        in_specs=[
            pl.BlockSpec((T * Bb, nIn), lambda b: (b, 0)),       # x (streamed per block)
            pl.BlockSpec((nIn, 8 * Hp), lambda b: (0, 0)),       # wih (resident)
            pl.BlockSpec((1, 8 * Hp), lambda b: (0, 0)),         # fused biases
            pl.BlockSpec((Hp, 4 * Hp), lambda b: (0, 0)),        # whh forward
            pl.BlockSpec((Hp, 4 * Hp), lambda b: (0, 0)),        # whh backward
            pl.BlockSpec((2 * Hp, nOutp), lambda b: (0, 0)),     # embedding weight
            pl.BlockSpec((1, nOutp), lambda b: (0, 0)),          # embedding bias
        ],
        out_specs=pl.BlockSpec((T * Bb, nOutp), lambda b: (b, 0)),
        scratch_shapes=[
            pltpu.VMEM((T * Bb, 8 * Hp), cdt),    # pre-computed input gates (compute dtype)
            pltpu.VMEM((T * Bb, 2 * Hp), cdt),    # [fwd|bwd] hidden states (compute dtype)
        ],
    )

    out2d = pl.pallas_call(
        kernel,
        out_shape=jax.ShapeDtypeStruct((n_blocks * T * Bb, nOutp), jnp.float32),
        grid_spec=grid_spec,
        compiler_params=pltpu.CompilerParams(
            dimension_semantics=("parallel",),     # batch blocks are independent
            vmem_limit_bytes=vmem_limit,
        ),
    )(x2d, packed["wih"], packed["bias"], packed["whh_f"], packed["whh_b"],
      packed["wemb"], packed["bemb"])

    out = (out2d.reshape(n_blocks, T, Bb, nOutp)
                .transpose(1, 0, 2, 3)
                .reshape(T, Bp, nOutp))
    return out[:, :B, :nOut]


# ---------------------------------------------------------------------------
# Pure-JAX reference (mirrors PyTorch semantics exactly) for verification.
# ---------------------------------------------------------------------------
def _ref_bilstm(x, raw):
    def run_dir(x_seq, wih, whh, bih, bhh):
        H = whh.shape[1]
        B = x_seq.shape[1]

        def step(carry, x_t):
            h, c = carry
            gates = x_t @ wih.T + bih + h @ whh.T + bhh
            i, f, g, o = jnp.split(gates, 4, axis=-1)
            i, f, o = jax.nn.sigmoid(i), jax.nn.sigmoid(f), jax.nn.sigmoid(o)
            g = jnp.tanh(g)
            c = f * c + i * g
            h = o * jnp.tanh(c)
            return (h, c), h

        init = (jnp.zeros((B, H), jnp.float32), jnp.zeros((B, H), jnp.float32))
        _, hs = lax.scan(step, init, x_seq)
        return hs

    hf = run_dir(x, raw["W_ih_f"], raw["W_hh_f"], raw["b_ih_f"], raw["b_hh_f"])
    hb = run_dir(x[::-1], raw["W_ih_b"], raw["W_hh_b"], raw["b_ih_b"], raw["b_hh_b"])[::-1]
    rec = jnp.concatenate([hf, hb], axis=-1)          # (T, B, 2H)
    T, B, h2 = rec.shape
    out = rec.reshape(T * B, h2) @ raw["W_emb"].T + raw["b_emb"]
    return out.reshape(T, B, -1)


def _init_raw_params(key, nIn, H, nOut):
    ks = jax.random.split(key, 10)
    s = 1.0 / jnp.sqrt(H)          # PyTorch LSTM default init scale
    se = 1.0 / jnp.sqrt(2 * H)     # PyTorch Linear default init scale
    u = lambda k, shp, sc: jax.random.uniform(k, shp, jnp.float32, -sc, sc)
    return {
        "W_ih_f": u(ks[0], (4 * H, nIn), s), "W_hh_f": u(ks[1], (4 * H, H), s),
        "b_ih_f": u(ks[2], (4 * H,), s),     "b_hh_f": u(ks[3], (4 * H,), s),
        "W_ih_b": u(ks[4], (4 * H, nIn), s), "W_hh_b": u(ks[5], (4 * H, H), s),
        "b_ih_b": u(ks[6], (4 * H,), s),     "b_hh_b": u(ks[7], (4 * H,), s),
        "W_emb":  u(ks[8], (nOut, 2 * H), se),
        "b_emb":  u(ks[9], (nOut,), se),
    }


if __name__ == "__main__":
    T, B, nIn, H, nOut = 8, 2, 16, 32, 16

    key = jax.random.PRNGKey(0)
    k_x, k_p, k_x2 = jax.random.split(key, 3)
    x = jax.random.normal(k_x, (T, B, nIn), jnp.float32)
    raw = _init_raw_params(k_p, nIn, H, nOut)
    ref = _ref_bilstm(x, raw)

    # --- f32 compute path: bit-for-bit-style check against the reference -------------
    packed_f32 = pack_params(raw, compute_dtype=jnp.float32)
    out_f32 = jax.block_until_ready(bidirectional_lstm(x, packed_f32))
    assert out_f32.shape == (T, B, nOut)
    err32 = float(jnp.max(jnp.abs(out_f32 - ref)))
    assert jnp.allclose(out_f32, ref, atol=2e-3, rtol=2e-3), err32

    # --- bf16 compute path (default): MXU-rate operands, f32 accumulation ------------
    packed_bf16 = pack_params(raw)                      # compute_dtype defaults to bfloat16
    out_bf16 = jax.block_until_ready(bidirectional_lstm(x, packed_bf16))
    errbf = float(jnp.max(jnp.abs(out_bf16 - ref)))
    assert jnp.allclose(out_bf16, ref, atol=1e-1, rtol=1e-1), errbf

    # --- multi-block batch grid (the v7x dual-TensorCore path) -----------------------
    B2 = 16
    x2 = jax.random.normal(k_x2, (T, B2, nIn), jnp.float32)
    ref2 = _ref_bilstm(x2, raw)
    out2 = jax.block_until_ready(bidirectional_lstm(x2, packed_f32, batch_block=8))
    err2 = float(jnp.max(jnp.abs(out2 - ref2)))
    assert out2.shape == (T, B2, nOut)
    assert jnp.allclose(out2, ref2, atol=2e-3, rtol=2e-3), err2

    print("KERNEL_OK")
</pallas_src>

<mosaic_0001>
module attributes {stable_mosaic.version = 11 : i64} {
  func.func @_bilstm_kernel(%arg0: i32, %arg1: memref<64x16xf32, #tpu.memory_space<vmem>>, %arg2: memref<16x1024xf32, #tpu.memory_space<vmem>>, %arg3: memref<1x1024xf32, #tpu.memory_space<vmem>>, %arg4: memref<128x512xf32, #tpu.memory_space<vmem>>, %arg5: memref<128x512xf32, #tpu.memory_space<vmem>>, %arg6: memref<256x128xf32, #tpu.memory_space<vmem>>, %arg7: memref<1x128xf32, #tpu.memory_space<vmem>>, %arg8: memref<64x128xf32, #tpu.memory_space<vmem>>, %arg9: memref<64x1024xf32, #tpu.memory_space<vmem>>, %arg10: memref<64x256xf32, #tpu.memory_space<vmem>>) attributes {dimension_semantics = [#tpu.dimension_semantics<parallel>], iteration_bounds = array<i64: 1>, scalar_prefetch = 0 : i64, scratch_operands = 2 : i64, tpu.core_type = #tpu.core_type<tc>, window_params = [{transform_indices = @transform_0, window_bounds = array<i64: 64, 16>}, {pipeline_mode = #tpu.pipeline_mode<synchronous>, transform_indices = @transform_1, window_bounds = array<i64: 16, 1024>}, {pipeline_mode = #tpu.pipeline_mode<synchronous>, transform_indices = @transform_2, window_bounds = array<i64: 1, 1024>}, {pipeline_mode = #tpu.pipeline_mode<synchronous>, transform_indices = @transform_3, window_bounds = array<i64: 128, 512>}, {pipeline_mode = #tpu.pipeline_mode<synchronous>, transform_indices = @transform_4, window_bounds = array<i64: 128, 512>}, {pipeline_mode = #tpu.pipeline_mode<synchronous>, transform_indices = @transform_5, window_bounds = array<i64: 256, 128>}, {pipeline_mode = #tpu.pipeline_mode<synchronous>, transform_indices = @transform_6, window_bounds = array<i64: 1, 128>}, {transform_indices = @transform_7, window_bounds = array<i64: 64, 128>}]} {
    %c0 = arith.constant 0 : index
    %c0_0 = arith.constant 0 : index
    %0 = vector.load %arg1[%c0, %c0_0] : memref<64x16xf32, #tpu.memory_space<vmem>>, vector<64x16xf32>
    %c0_1 = arith.constant 0 : index
    %c0_2 = arith.constant 0 : index
    %1 = vector.load %arg2[%c0_1, %c0_2] : memref<16x1024xf32, #tpu.memory_space<vmem>>, vector<16x1024xf32>
    %cst = arith.constant dense<0.000000e+00> : vector<64x1024xf32>
    %2 = tpu.matmul %0, %1, %cst {dimension_numbers = #tpu.dot_dimension_numbers<[1], [0], [0], [1], [0, 0, 1, 1], [], []>} : vector<64x16xf32>, vector<16x1024xf32>, vector<64x1024xf32> -> vector<64x1024xf32>
    %c0_3 = arith.constant 0 : index
    %c0_4 = arith.constant 0 : index
    %3 = vector.load %arg3[%c0_3, %c0_4] : memref<1x1024xf32, #tpu.memory_space<vmem>>, vector<1x1024xf32>
    %4 = vector.broadcast %3 : vector<1x1024xf32> to vector<64x1024xf32>
    %5 = arith.addf %2, %4 : vector<64x1024xf32>
    %c0_5 = arith.constant 0 : index
    %c0_6 = arith.constant 0 : index
    %6 = vector.load %arg9[%c0_5, %c0_6] : memref<64x1024xf32, #tpu.memory_space<vmem>>, vector<64x1024xf32>
    tpu.vector_store %arg9[%c0_5, %c0_6], %5 {strides = array<i32>} : memref<64x1024xf32, #tpu.memory_space<vmem>>, vector<64x1024xf32>,
    %c0_7 = arith.constant 0 : index
    %c0_8 = arith.constant 0 : index
    %7 = vector.load %arg4[%c0_7, %c0_8] : memref<128x512xf32, #tpu.memory_space<vmem>>, vector<128x512xf32>
    %c0_9 = arith.constant 0 : index
    %c0_10 = arith.constant 0 : index
    %8 = vector.load %arg5[%c0_9, %c0_10] : memref<128x512xf32, #tpu.memory_space<vmem>>, vector<128x512xf32>
    %cst_11 = arith.constant 0.000000e+00 : f32
    %9 = vector.broadcast %cst_11 : f32 to vector<8x128xf32>
    %c0_i32 = arith.constant 0 : i32
    %c7_i32 = arith.constant 7 : i32
    %10 = arith.subi %c7_i32, %c0_i32 : i32
    %c8_i32 = arith.constant 8 : i32
    %11 = arith.muli %c0_i32, %c8_i32 : i32
    %12 = tpu.assume_multiple %11, 8 : i32
    %c8_i32_12 = arith.constant 8 : i32
    %13 = arith.muli %10, %c8_i32_12 : i32
    %14 = tpu.assume_multiple %13, 8 : i32
    %15 = arith.index_cast %12 : i32 to index
    %c0_13 = arith.constant 0 : index
    %16 = vector.load %arg9[%15, %c0_13] : memref<64x1024xf32, #tpu.memory_space<vmem>>, vector<8x512xf32>
    %17 = arith.index_cast %14 : i32 to index
    %c512 = arith.constant 512 : index
    %18 = vector.load %arg9[%17, %c512] : memref<64x1024xf32, #tpu.memory_space<vmem>>, vector<8x512xf32>
    %cst_14 = arith.constant dense<0.000000e+00> : vector<8x512xf32>
    %19 = tpu.matmul %9, %7, %cst_14 {dimension_numbers = #tpu.dot_dimension_numbers<[1], [0], [0], [1], [0, 0, 1, 1], [], []>} : vector<8x128xf32>, vector<128x512xf32>, vector<8x512xf32> -> vector<8x512xf32>
    %20 = arith.addf %16, %19 : vector<8x512xf32>
    %cst_15 = arith.constant dense<0.000000e+00> : vector<8x512xf32>
    %21 = tpu.matmul %9, %8, %cst_15 {dimension_numbers = #tpu.dot_dimension_numbers<[1], [0], [0], [1], [0, 0, 1, 1], [], []>} : vector<8x128xf32>, vector<128x512xf32>, vector<8x512xf32> -> vector<8x512xf32>
    %22 = arith.addf %18, %21 : vector<8x512xf32>
    %23 = vector.extract_strided_slice %20 {offsets = [0, 0], sizes = [8, 128], strides = [1, 1]} : vector<8x512xf32> to vector<8x128xf32>
    %24 = arith.negf %23 : vector<8x128xf32>
    %25 = math.exp %24 : vector<8x128xf32>
    %cst_16 = arith.constant 1.000000e+00 : f32
    %26 = vector.broadcast %cst_16 : f32 to vector<8x128xf32>
    %27 = arith.addf %26, %25 : vector<8x128xf32>
    %28 = arith.divf %26, %27 : vector<8x128xf32>
    %29 = vector.extract_strided_slice %20 {offsets = [0, 128], sizes = [8, 128], strides = [1, 1]} : vector<8x512xf32> to vector<8x128xf32>
    %30 = arith.negf %29 : vector<8x128xf32>
    %31 = math.exp %30 : vector<8x128xf32>
    %cst_17 = arith.constant 1.000000e+00 : f32
    %32 = vector.broadcast %cst_17 : f32 to vector<8x128xf32>
    %33 = arith.addf %32, %31 : vector<8x128xf32>
    %34 = arith.divf %32, %33 : vector<8x128xf32>
    %35 = vector.extract_strided_slice %20 {offsets = [0, 256], sizes = [8, 128], strides = [1, 1]} : vector<8x512xf32> to vector<8x128xf32>
    %36 = math.tanh %35 : vector<8x128xf32>
    %37 = vector.extract_strided_slice %20 {offsets = [0, 384], sizes = [8, 128], strides = [1, 1]} : vector<8x512xf32> to vector<8x128xf32>
    %38 = arith.negf %37 : vector<8x128xf32>
    %39 = math.exp %38 : vector<8x128xf32>
    %cst_18 = arith.constant 1.000000e+00 : f32
    %40 = vector.broadcast %cst_18 : f32 to vector<8x128xf32>
    %41 = arith.addf %40, %39 : vector<8x128xf32>
    %42 = arith.divf %40, %41 : vector<8x128xf32>
    %43 = arith.mulf %34, %9 : vector<8x128xf32>
    %44 = arith.mulf %28, %36 : vector<8x128xf32>
    %45 = arith.addf %43, %44 : vector<8x128xf32>
    %46 = math.tanh %45 : vector<8x128xf32>
    %47 = arith.mulf %42, %46 : vector<8x128xf32>
    %48 = vector.extract_strided_slice %22 {offsets = [0, 0], sizes = [8, 128], strides = [1, 1]} : vector<8x512xf32> to vector<8x128xf32>
    %49 = arith.negf %48 : vector<8x128xf32>
    %50 = math.exp %49 : vector<8x128xf32>
    %cst_19 = arith.constant 1.000000e+00 : f32
    %51 = vector.broadcast %cst_19 : f32 to vector<8x128xf32>
    %52 = arith.addf %51, %50 : vector<8x128xf32>
    %53 = arith.divf %51, %52 : vector<8x128xf32>
    %54 = vector.extract_strided_slice %22 {offsets = [0, 128], sizes = [8, 128], strides = [1, 1]} : vector<8x512xf32> to vector<8x128xf32>
    %55 = arith.negf %54 : vector<8x128xf32>
    %56 = math.exp %55 : vector<8x128xf32>
    %cst_20 = arith.constant 1.000000e+00 : f32
    %57 = vector.broadcast %cst_20 : f32 to vector<8x128xf32>
    %58 = arith.addf %57, %56 : vector<8x128xf32>
    %59 = arith.divf %57, %58 : vector<8x128xf32>
    %60 = vector.extract_strided_slice %22 {offsets = [0, 256], sizes = [8, 128], strides = [1, 1]} : vector<8x512xf32> to vector<8x128xf32>
    %61 = math.tanh %60 : vector<8x128xf32>
    %62 = vector.extract_strided_slice %22 {offsets = [0, 384], sizes = [8, 128], strides = [1, 1]} : vector<8x512xf32> to vector<8x128xf32>
    %63 = arith.negf %62 : vector<8x128xf32>
    %64 = math.exp %63 : vector<8x128xf32>
    %cst_21 = arith.constant 1.000000e+00 : f32
    %65 = vector.broadcast %cst_21 : f32 to vector<8x128xf32>
    %66 = arith.addf %65, %64 : vector<8x128xf32>
    %67 = arith.divf %65, %66 : vector<8x128xf32>
    %68 = arith.mulf %59, %9 : vector<8x128xf32>
    %69 = arith.mulf %53, %61 : vector<8x128xf32>
    %70 = arith.addf %68, %69 : vector<8x128xf32>
    %71 = math.tanh %70 : vector<8x128xf32>
    %72 = arith.mulf %67, %71 : vector<8x128xf32>
    %73 = arith.index_cast %12 : i32 to index
    %c0_22 = arith.constant 0 : index
    %74 = vector.load %arg10[%73, %c0_22] : memref<64x256xf32, #tpu.memory_space<vmem>>, vector<8x128xf32>
    tpu.vector_store %arg10[%73, %c0_22], %47 {strides = array<i32>} : memref<64x256xf32, #tpu.memory_space<vmem>>, vector<8x128xf32>,
    %75 = arith.index_cast %14 : i32 to index
    %c128 = arith.constant 128 : index
    %76 = vector.load %arg10[%75, %c128] : memref<64x256xf32, #tpu.memory_space<vmem>>, vector<8x128xf32>
    tpu.vector_store %arg10[%75, %c128], %72 {strides = array<i32>} : memref<64x256xf32, #tpu.memory_space<vmem>>, vector<8x128xf32>,
    %c1_i32 = arith.constant 1 : i32
    %c7_i32_23 = arith.constant 7 : i32
    %77 = arith.subi %c7_i32_23, %c1_i32 : i32
    %c8_i32_24 = arith.constant 8 : i32
    %78 = arith.muli %c1_i32, %c8_i32_24 : i32
    %79 = tpu.assume_multiple %78, 8 : i32
    %c8_i32_25 = arith.constant 8 : i32
    %80 = arith.muli %77, %c8_i32_25 : i32
    %81 = tpu.assume_multiple %80, 8 : i32
    %82 = arith.index_cast %79 : i32 to index
    %c0_26 = arith.constant 0 : index
    %83 = vector.load %arg9[%82, %c0_26] : memref<64x1024xf32, #tpu.memory_space<vmem>>, vector<8x512xf32>
    %84 = arith.index_cast %81 : i32 to index
    %c512_27 = arith.constant 512 : index
    %85 = vector.load %arg9[%84, %c512_27] : memref<64x1024xf32, #tpu.memory_space<vmem>>, vector<8x512xf32>
    %cst_28 = arith.constant dense<0.000000e+00> : vector<8x512xf32>
    %86 = tpu.matmul %47, %7, %cst_28 {dimension_numbers = #tpu.dot_dimension_numbers<[1], [0], [0], [1], [0, 0, 1, 1], [], []>} : vector<8x128xf32>, vector<128x512xf32>, vector<8x512xf32> -> vector<8x512xf32>
    %87 = arith.addf %83, %86 : vector<8x512xf32>
    %cst_29 = arith.constant dense<0.000000e+00> : vector<8x512xf32>
    %88 = tpu.matmul %72, %8, %cst_29 {dimension_numbers = #tpu.dot_dimension_numbers<[1], [0], [0], [1], [0, 0, 1, 1], [], []>} : vector<8x128xf32>, vector<128x512xf32>, vector<8x512xf32> -> vector<8x512xf32>
    %89 = arith.addf %85, %88 : vector<8x512xf32>
    %90 = vector.extract_strided_slice %87 {offsets = [0, 0], sizes = [8, 128], strides = [1, 1]} : vector<8x512xf32> to vector<8x128xf32>
    %91 = arith.negf %90 : vector<8x128xf32>
    %92 = math.exp %91 : vector<8x128xf32>
    %cst_30 = arith.constant 1.000000e+00 : f32
    %93 = vector.broadcast %cst_30 : f32 to vector<8x128xf32>
    %94 = arith.addf %93, %92 : vector<8x128xf32>
    %95 = arith.divf %93, %94 : vector<8x128xf32>
    %96 = vector.extract_strided_slice %87 {offsets = [0, 128], sizes = [8, 128], strides = [1, 1]} : vector<8x512xf32> to vector<8x128xf32>
    %97 = arith.negf %96 : vector<8x128xf32>
    %98 = math.exp %97 : vector<8x128xf32>
    %cst_31 = arith.constant 1.000000e+00 : f32
    %99 = vector.broadcast %cst_31 : f32 to vector<8x128xf32>
    %100 = arith.addf %99, %98 : vector<8x128xf32>
    %101 = arith.divf %99, %100 : vector<8x128xf32>
    %102 = vector.extract_strided_slice %87 {offsets = [0, 256], sizes = [8, 128], strides = [1, 1]} : vector<8x512xf32> to vector<8x128xf32>
    %103 = math.tanh %102 : vector<8x128xf32>
    %104 = vector.extract_strided_slice %87 {offsets = [0, 384], sizes = [8, 128], strides = [1, 1]} : vector<8x512xf32> to vector<8x128xf32>
    %105 = arith.negf %104 : vector<8x128xf32>
    %106 = math.exp %105 : vector<8x128xf32>
    %cst_32 = arith.constant 1.000000e+00 : f32
    %107 = vector.broadcast %cst_32 : f32 to vector<8x128xf32>
    %108 = arith.addf %107, %106 : vector<8x128xf32>
    %109 = arith.divf %107, %108 : vector<8x128xf32>
    %110 = arith.mulf %101, %45 : vector<8x128xf32>
    %111 = arith.mulf %95, %103 : vector<8x128xf32>
    %112 = arith.addf %110, %111 : vector<8x128xf32>
    %113 = math.tanh %112 : vector<8x128xf32>
    %114 = arith.mulf %109, %113 : vector<8x128xf32>
    %115 = vector.extract_strided_slice %89 {offsets = [0, 0], sizes = [8, 128], strides = [1, 1]} : vector<8x512xf32> to vector<8x128xf32>
    %116 = arith.negf %115 : vector<8x128xf32>
    %117 = math.exp %116 : vector<8x128xf32>
    %cst_33 = arith.constant 1.000000e+00 : f32
    %118 = vector.broadcast %cst_33 : f32 to vector<8x128xf32>
    %119 = arith.addf %118, %117 : vector<8x128xf32>
    %120 = arith.divf %118, %119 : vector<8x128xf32>
    %121 = vector.extract_strided_slice %89 {offsets = [0, 128], sizes = [8, 128], strides = [1, 1]} : vector<8x512xf32> to vector<8x128xf32>
    %122 = arith.negf %121 : vector<8x128xf32>
    %123 = math.exp %122 : vector<8x128xf32>
    %cst_34 = arith.constant 1.000000e+00 : f32
    %124 = vector.broadcast %cst_34 : f32 to vector<8x128xf32>
    %125 = arith.addf %124, %123 : vector<8x128xf32>
    %126 = arith.divf %124, %125 : vector<8x128xf32>
    %127 = vector.extract_strided_slice %89 {offsets = [0, 256], sizes = [8, 128], strides = [1, 1]} : vector<8x512xf32> to vector<8x128xf32>
    %128 = math.tanh %127 : vector<8x128xf32>
    %129 = vector.extract_strided_slice %89 {offsets = [0, 384], sizes = [8, 128], strides = [1, 1]} : vector<8x512xf32> to vector<8x128xf32>
    %130 = arith.negf %129 : vector<8x128xf32>
    %131 = math.exp %130 : vector<8x128xf32>
    %cst_35 = arith.constant 1.000000e+00 : f32
    %132 = vector.broadcast %cst_35 : f32 to vector<8x128xf32>
    %133 = arith.addf %132, %131 : vector<8x128xf32>
    %134 = arith.divf %132, %133 : vector<8x128xf32>
    %135 = arith.mulf %126, %70 : vector<8x128xf32>
    %136 = arith.mulf %120, %128 : vector<8x128xf32>
    %137 = arith.addf %135, %136 : vector<8x128xf32>
    %138 = math.tanh %137 : vector<8x128xf32>
    %139 = arith.mulf %134, %138 : vector<8x128xf32>
    %140 = arith.index_cast %79 : i32 to index
    %c0_36 = arith.constant 0 : index
    %141 = vector.load %arg10[%140, %c0_36] : memref<64x256xf32, #tpu.memory_space<vmem>>, vector<8x128xf32>
    tpu.vector_store %arg10[%140, %c0_36], %114 {strides = array<i32>} : memref<64x256xf32, #tpu.memory_space<vmem>>, vector<8x128xf32>,
    %142 = arith.index_cast %81 : i32 to index
    %c128_37 = arith.constant 128 : index
    %143 = vector.load %arg10[%142, %c128_37] : memref<64x256xf32, #tpu.memory_space<vmem>>, vector<8x128xf32>
    tpu.vector_store %arg10[%142, %c128_37], %139 {strides = array<i32>} : memref<64x256xf32, #tpu.memory_space<vmem>>, vector<8x128xf32>,
    %c2_i32 = arith.constant 2 : i32
    %c7_i32_38 = arith.constant 7 : i32
    %144 = arith.subi %c7_i32_38, %c2_i32 : i32
    %c8_i32_39 = arith.constant 8 : i32
    %145 = arith.muli %c2_i32, %c8_i32_39 : i32
    %146 = tpu.assume_multiple %145, 8 : i32
    %c8_i32_40 = arith.constant 8 : i32
    %147 = arith.muli %144, %c8_i32_40 : i32
    %148 = tpu.assume_multiple %147, 8 : i32
    %149 = arith.index_cast %146 : i32 to index
    %c0_41 = arith.constant 0 : index
    %150 = vector.load %arg9[%149, %c0_41] : memref<64x1024xf32, #tpu.memory_space<vmem>>, vector<8x512xf32>
    %151 = arith.index_cast %148 : i32 to index
    %c512_42 = arith.constant 512 : index
    %152 = vector.load %arg9[%151, %c512_42] : memref<64x1024xf32, #tpu.memory_space<vmem>>, vector<8x512xf32>
    %cst_43 = arith.constant dense<0.000000e+00> : vector<8x512xf32>
    %153 = tpu.matmul %114, %7, %cst_43 {dimension_numbers = #tpu.dot_dimension_numbers<[1], [0], [0], [1], [0, 0, 1, 1], [], []>} : vector<8x128xf32>, vector<128x512xf32>, vector<8x512xf32> -> vector<8x512xf32>
    %154 = arith.addf %150, %153 : vector<8x512xf32>
    %cst_44 = arith.constant dense<0.000000e+00> : vector<8x512xf32>
    %155 = tpu.matmul %139, %8, %cst_44 {dimension_numbers = #tpu.dot_dimension_numbers<[1], [0], [0], [1], [0, 0, 1, 1], [], []>} : vector<8x128xf32>, vector<128x512xf32>, vector<8x512xf32> -> vector<8x512xf32>
    %156 = arith.addf %152, %155 : vector<8x512xf32>
    %157 = vector.extract_strided_slice %154 {offsets = [0, 0], sizes = [8, 128], strides = [1, 1]} : vector<8x512xf32> to vector<8x128xf32>
    %158 = arith.negf %157 : vector<8x128xf32>
    %159 = math.exp %158 : vector<8x128xf32>
    %cst_45 = arith.constant 1.000000e+00 : f32
    %160 = vector.broadcast %cst_45 : f32 to vector<8x128xf32>
    %161 = arith.addf %160, %159 : vector<8x128xf32>
    %162 = arith.divf %160, %161 : vector<8x128xf32>
    %163 = vector.extract_strided_slice %154 {offsets = [0, 128], sizes = [8, 128], strides = [1, 1]} : vector<8x512xf32> to vector<8x128xf32>
    %164 = arith.negf %163 : vector<8x128xf32>
    %165 = math.exp %164 : vector<8x128xf32>
    %cst_46 = arith.constant 1.000000e+00 : f32
    %166 = vector.broadcast %cst_46 : f32 to vector<8x128xf32>
    %167 = arith.addf %166, %165 : vector<8x128xf32>
    %168 = arith.divf %166, %167 : vector<8x128xf32>
    %169 = vector.extract_strided_slice %154 {offsets = [0, 256], sizes = [8, 128], strides = [1, 1]} : vector<8x512xf32> to vector<8x128xf32>
    %170 = math.tanh %169 : vector<8x128xf32>
    %171 = vector.extract_strided_slice %154 {offsets = [0, 384], sizes = [8, 128], strides = [1, 1]} : vector<8x512xf32> to vector<8x128xf32>
    %172 = arith.negf %171 : vector<8x128xf32>
    %173 = math.exp %172 : vector<8x128xf32>
    %cst_47 = arith.constant 1.000000e+00 : f32
    %174 = vector.broadcast %cst_47 : f32 to vector<8x128xf32>
    %175 = arith.addf %174, %173 : vector<8x128xf32>
    %176 = arith.divf %174, %175 : vector<8x128xf32>
    %177 = arith.mulf %168, %112 : vector<8x128xf32>
    %178 = arith.mulf %162, %170 : vector<8x128xf32>
    %179 = arith.addf %177, %178 : vector<8x128xf32>
    %180 = math.tanh %179 : vector<8x128xf32>
    %181 = arith.mulf %176, %180 : vector<8x128xf32>
    %182 = vector.extract_strided_slice %156 {offsets = [0, 0], sizes = [8, 128], strides = [1, 1]} : vector<8x512xf32> to vector<8x128xf32>
    %183 = arith.negf %182 : vector<8x128xf32>
    %184 = math.exp %183 : vector<8x128xf32>
    %cst_48 = arith.constant 1.000000e+00 : f32
    %185 = vector.broadcast %cst_48 : f32 to vector<8x128xf32>
    %186 = arith.addf %185, %184 : vector<8x128xf32>
    %187 = arith.divf %185, %186 : vector<8x128xf32>
    %188 = vector.extract_strided_slice %156 {offsets = [0, 128], sizes = [8, 128], strides = [1, 1]} : vector<8x512xf32> to vector<8x128xf32>
    %189 = arith.negf %188 : vector<8x128xf32>
    %190 = math.exp %189 : vector<8x128xf32>
    %cst_49 = arith.constant 1.000000e+00 : f32
    %191 = vector.broadcast %cst_49 : f32 to vector<8x128xf32>
    %192 = arith.addf %191, %190 : vector<8x128xf32>
    %193 = arith.divf %191, %192 : vector<8x128xf32>
    %194 = vector.extract_strided_slice %156 {offsets = [0, 256], sizes = [8, 128], strides = [1, 1]} : vector<8x512xf32> to vector<8x128xf32>
    %195 = math.tanh %194 : vector<8x128xf32>
    %196 = vector.extract_strided_slice %156 {offsets = [0, 384], sizes = [8, 128], strides = [1, 1]} : vector<8x512xf32> to vector<8x128xf32>
    %197 = arith.negf %196 : vector<8x128xf32>
    %198 = math.exp %197 : vector<8x128xf32>
    %cst_50 = arith.constant 1.000000e+00 : f32
    %199 = vector.broadcast %cst_50 : f32 to vector<8x128xf32>
    %200 = arith.addf %199, %198 : vector<8x128xf32>
    %201 = arith.divf %199, %200 : vector<8x128xf32>
    %202 = arith.mulf %193, %137 : vector<8x128xf32>
    %203 = arith.mulf %187, %195 : vector<8x128xf32>
    %204 = arith.addf %202, %203 : vector<8x128xf32>
    %205 = math.tanh %204 : vector<8x128xf32>
    %206 = arith.mulf %201, %205 : vector<8x128xf32>
    %207 = arith.index_cast %146 : i32 to index
    %c0_51 = arith.constant 0 : index
    %208 = vector.load %arg10[%207, %c0_51] : memref<64x256xf32, #tpu.memory_space<vmem>>, vector<8x128xf32>
    tpu.vector_store %arg10[%207, %c0_51], %181 {strides = array<i32>} : memref<64x256xf32, #tpu.memory_space<vmem>>, vector<8x128xf32>,
    %209 = arith.index_cast %148 : i32 to index
    %c128_52 = arith.constant 128 : index
    %210 = vector.load %arg10[%209, %c128_52] : memref<64x256xf32, #tpu.memory_space<vmem>>, vector<8x128xf32>
    tpu.vector_store %arg10[%209, %c128_52], %206 {strides = array<i32>} : memref<64x256xf32, #tpu.memory_space<vmem>>, vector<8x128xf32>,
    %c3_i32 = arith.constant 3 : i32
    %c7_i32_53 = arith.constant 7 : i32
    %211 = arith.subi %c7_i32_53, %c3_i32 : i32
    %c8_i32_54 = arith.constant 8 : i32
    %212 = arith.muli %c3_i32, %c8_i32_54 : i32
    %213 = tpu.assume_multiple %212, 8 : i32
    %c8_i32_55 = arith.constant 8 : i32
    %214 = arith.muli %211, %c8_i32_55 : i32
    %215 = tpu.assume_multiple %214, 8 : i32
    %216 = arith.index_cast %213 : i32 to index
    %c0_56 = arith.constant 0 : index
    %217 = vector.load %arg9[%216, %c0_56] : memref<64x1024xf32, #tpu.memory_space<vmem>>, vector<8x512xf32>
    %218 = arith.index_cast %215 : i32 to index
    %c512_57 = arith.constant 512 : index
    %219 = vector.load %arg9[%218, %c512_57] : memref<64x1024xf32, #tpu.memory_space<vmem>>, vector<8x512xf32>
    %cst_58 = arith.constant dense<0.000000e+00> : vector<8x512xf32>
    %220 = tpu.matmul %181, %7, %cst_58 {dimension_numbers = #tpu.dot_dimension_numbers<[1], [0], [0], [1], [0, 0, 1, 1], [], []>} : vector<8x128xf32>, vector<128x512xf32>, vector<8x512xf32> -> vector<8x512xf32>
    %221 = arith.addf %217, %220 : vector<8x512xf32>
    %cst_59 = arith.constant dense<0.000000e+00> : vector<8x512xf32>
    %222 = tpu.matmul %206, %8, %cst_59 {dimension_numbers = #tpu.dot_dimension_numbers<[1], [0], [0], [1], [0, 0, 1, 1], [], []>} : vector<8x128xf32>, vector<128x512xf32>, vector<8x512xf32> -> vector<8x512xf32>
    %223 = arith.addf %219, %222 : vector<8x512xf32>
    %224 = vector.extract_strided_slice %221 {offsets = [0, 0], sizes = [8, 128], strides = [1, 1]} : vector<8x512xf32> to vector<8x128xf32>
    %225 = arith.negf %224 : vector<8x128xf32>
    %226 = math.exp %225 : vector<8x128xf32>
    %cst_60 = arith.constant 1.000000e+00 : f32
    %227 = vector.broadcast %cst_60 : f32 to vector<8x128xf32>
    %228 = arith.addf %227, %226 : vector<8x128xf32>
    %229 = arith.divf %227, %228 : vector<8x128xf32>
    %230 = vector.extract_strided_slice %221 {offsets = [0, 128], sizes = [8, 128], strides = [1, 1]} : vector<8x512xf32> to vector<8x128xf32>
    %231 = arith.negf %230 : vector<8x128xf32>
    %232 = math.exp %231 : vector<8x128xf32>
    %cst_61 = arith.constant 1.000000e+00 : f32
    %233 = vector.broadcast %cst_61 : f32 to vector<8x128xf32>
    %234 = arith.addf %233, %232 : vector<8x128xf32>
    %235 = arith.divf %233, %234 : vector<8x128xf32>
    %236 = vector.extract_strided_slice %221 {offsets = [0, 256], sizes = [8, 128], strides = [1, 1]} : vector<8x512xf32> to vector<8x128xf32>
    %237 = math.tanh %236 : vector<8x128xf32>
    %238 = vector.extract_strided_slice %221 {offsets = [0, 384], sizes = [8, 128], strides = [1, 1]} : vector<8x512xf32> to vector<8x128xf32>
    %239 = arith.negf %238 : vector<8x128xf32>
    %240 = math.exp %239 : vector<8x128xf32>
    %cst_62 = arith.constant 1.000000e+00 : f32
    %241 = vector.broadcast %cst_62 : f32 to vector<8x128xf32>
    %242 = arith.addf %241, %240 : vector<8x128xf32>
    %243 = arith.divf %241, %242 : vector<8x128xf32>
    %244 = arith.mulf %235, %179 : vector<8x128xf32>
    %245 = arith.mulf %229, %237 : vector<8x128xf32>
    %246 = arith.addf %244, %245 : vector<8x128xf32>
    %247 = math.tanh %246 : vector<8x128xf32>
    %248 = arith.mulf %243, %247 : vector<8x128xf32>
    %249 = vector.extract_strided_slice %223 {offsets = [0, 0], sizes = [8, 128], strides = [1, 1]} : vector<8x512xf32> to vector<8x128xf32>
    %250 = arith.negf %249 : vector<8x128xf32>
    %251 = math.exp %250 : vector<8x128xf32>
    %cst_63 = arith.constant 1.000000e+00 : f32
    %252 = vector.broadcast %cst_63 : f32 to vector<8x128xf32>
    %253 = arith.addf %252, %251 : vector<8x128xf32>
    %254 = arith.divf %252, %253 : vector<8x128xf32>
    %255 = vector.extract_strided_slice %223 {offsets = [0, 128], sizes = [8, 128], strides = [1, 1]} : vector<8x512xf32> to vector<8x128xf32>
    %256 = arith.negf %255 : vector<8x128xf32>
    %257 = math.exp %256 : vector<8x128xf32>
    %cst_64 = arith.constant 1.000000e+00 : f32
    %258 = vector.broadcast %cst_64 : f32 to vector<8x128xf32>
    %259 = arith.addf %258, %257 : vector<8x128xf32>
    %260 = arith.divf %258, %259 : vector<8x128xf32>
    %261 = vector.extract_strided_slice %223 {offsets = [0, 256], sizes = [8, 128], strides = [1, 1]} : vector<8x512xf32> to vector<8x128xf32>
    %262 = math.tanh %261 : vector<8x128xf32>
    %263 = vector.extract_strided_slice %223 {offsets = [0, 384], sizes = [8, 128], strides = [1, 1]} : vector<8x512xf32> to vector<8x128xf32>
    %264 = arith.negf %263 : vector<8x128xf32>
    %265 = math.exp %264 : vector<8x128xf32>
    %cst_65 = arith.constant 1.000000e+00 : f32
    %266 = vector.broadcast %cst_65 : f32 to vector<8x128xf32>
    %267 = arith.addf %266, %265 : vector<8x128xf32>
    %268 = arith.divf %266, %267 : vector<8x128xf32>
    %269 = arith.mulf %260, %204 : vector<8x128xf32>
    %270 = arith.mulf %254, %262 : vector<8x128xf32>
    %271 = arith.addf %269, %270 : vector<8x128xf32>
    %272 = math.tanh %271 : vector<8x128xf32>
    %273 = arith.mulf %268, %272 : vector<8x128xf32>
    %274 = arith.index_cast %213 : i32 to index
    %c0_66 = arith.constant 0 : index
    %275 = vector.load %arg10[%274, %c0_66] : memref<64x256xf32, #tpu.memory_space<vmem>>, vector<8x128xf32>
    tpu.vector_store %arg10[%274, %c0_66], %248 {strides = array<i32>} : memref<64x256xf32, #tpu.memory_space<vmem>>, vector<8x128xf32>,
    %276 = arith.index_cast %215 : i32 to index
    %c128_67 = arith.constant 128 : index
    %277 = vector.load %arg10[%276, %c128_67] : memref<64x256xf32, #tpu.memory_space<vmem>>, vector<8x128xf32>
    tpu.vector_store %arg10[%276, %c128_67], %273 {strides = array<i32>} : memref<64x256xf32, #tpu.memory_space<vmem>>, vector<8x128xf32>,
    %c4_i32 = arith.constant 4 : i32
    %c7_i32_68 = arith.constant 7 : i32
    %278 = arith.subi %c7_i32_68, %c4_i32 : i32
    %c8_i32_69 = arith.constant 8 : i32
    %279 = arith.muli %c4_i32, %c8_i32_69 : i32
    %280 = tpu.assume_multiple %279, 8 : i32
    %c8_i32_70 = arith.constant 8 : i32
    %281 = arith.muli %278, %c8_i32_70 : i32
    %282 = tpu.assume_multiple %281, 8 : i32
    %283 = arith.index_cast %280 : i32 to index
    %c0_71 = arith.constant 0 : index
    %284 = vector.load %arg9[%283, %c0_71] : memref<64x1024xf32, #tpu.memory_space<vmem>>, vector<8x512xf32>
    %285 = arith.index_cast %282 : i32 to index
    %c512_72 = arith.constant 512 : index
    %286 = vector.load %arg9[%285, %c512_72] : memref<64x1024xf32, #tpu.memory_space<vmem>>, vector<8x512xf32>
    %cst_73 = arith.constant dense<0.000000e+00> : vector<8x512xf32>
    %287 = tpu.matmul %248, %7, %cst_73 {dimension_numbers = #tpu.dot_dimension_numbers<[1], [0], [0], [1], [0, 0, 1, 1], [], []>} : vector<8x128xf32>, vector<128x512xf32>, vector<8x512xf32> -> vector<8x512xf32>
    %288 = arith.addf %284, %287 : vector<8x512xf32>
    %cst_74 = arith.constant dense<0.000000e+00> : vector<8x512xf32>
    %289 = tpu.matmul %273, %8, %cst_74 {dimension_numbers = #tpu.dot_dimension_numbers<[1], [0], [0], [1], [0, 0, 1, 1], [], []>} : vector<8x128xf32>, vector<128x512xf32>, vector<8x512xf32> -> vector<8x512xf32>
    %290 = arith.addf %286, %289 : vector<8x512xf32>
    %291 = vector.extract_strided_slice %288 {offsets = [0, 0], sizes = [8, 128], strides = [1, 1]} : vector<8x512xf32> to vector<8x128xf32>
    %292 = arith.negf %291 : vector<8x128xf32>
    %293 = math.exp %292 : vector<8x128xf32>
    %cst_75 = arith.constant 1.000000e+00 : f32
    %294 = vector.broadcast %cst_75 : f32 to vector<8x128xf32>
    %295 = arith.addf %294, %293 : vector<8x128xf32>
    %296 = arith.divf %294, %295 : vector<8x128xf32>
    %297 = vector.extract_strided_slice %288 {offsets = [0, 128], sizes = [8, 128], strides = [1, 1]} : vector<8x512xf32> to vector<8x128xf32>
    %298 = arith.negf %297 : vector<8x128xf32>
    %299 = math.exp %298 : vector<8x128xf32>
    %cst_76 = arith.constant 1.000000e+00 : f32
    %300 = vector.broadcast %cst_76 : f32 to vector<8x128xf32>
    %301 = arith.addf %300, %299 : vector<8x128xf32>
    %302 = arith.divf %300, %301 : vector<8x128xf32>
    %303 = vector.extract_strided_slice %288 {offsets = [0, 256], sizes = [8, 128], strides = [1, 1]} : vector<8x512xf32> to vector<8x128xf32>
    %304 = math.tanh %303 : vector<8x128xf32>
    %305 = vector.extract_strided_slice %288 {offsets = [0, 384], sizes = [8, 128], strides = [1, 1]} : vector<8x512xf32> to vector<8x128xf32>
    %306 = arith.negf %305 : vector<8x128xf32>
    %307 = math.exp %306 : vector<8x128xf32>
    %cst_77 = arith.constant 1.000000e+00 : f32
    %308 = vector.broadcast %cst_77 : f32 to vector<8x128xf32>
    %309 = arith.addf %308, %307 : vector<8x128xf32>
    %310 = arith.divf %308, %309 : vector<8x128xf32>
    %311 = arith.mulf %302, %246 : vector<8x128xf32>
    %312 = arith.mulf %296, %304 : vector<8x128xf32>
    %313 = arith.addf %311, %312 : vector<8x128xf32>
    %314 = math.tanh %313 : vector<8x128xf32>
    %315 = arith.mulf %310, %314 : vector<8x128xf32>
    %316 = vector.extract_strided_slice %290 {offsets = [0, 0], sizes = [8, 128], strides = [1, 1]} : vector<8x512xf32> to vector<8x128xf32>
    %317 = arith.negf %316 : vector<8x128xf32>
    %318 = math.exp %317 : vector<8x128xf32>
    %cst_78 = arith.constant 1.000000e+00 : f32
    %319 = vector.broadcast %cst_78 : f32 to vector<8x128xf32>
    %320 = arith.addf %319, %318 : vector<8x128xf32>
    %321 = arith.divf %319, %320 : vector<8x128xf32>
    %322 = vector.extract_strided_slice %290 {offsets = [0, 128], sizes = [8, 128], strides = [1, 1]} : vector<8x512xf32> to vector<8x128xf32>
    %323 = arith.negf %322 : vector<8x128xf32>
    %324 = math.exp %323 : vector<8x128xf32>
    %cst_79 = arith.constant 1.000000e+00 : f32
    %325 = vector.broadcast %cst_79 : f32 to vector<8x128xf32>
    %326 = arith.addf %325, %324 : vector<8x128xf32>
    %327 = arith.divf %325, %326 : vector<8x128xf32>
    %328 = vector.extract_strided_slice %290 {offsets = [0, 256], sizes = [8, 128], strides = [1, 1]} : vector<8x512xf32> to vector<8x128xf32>
    %329 = math.tanh %328 : vector<8x128xf32>
    %330 = vector.extract_strided_slice %290 {offsets = [0, 384], sizes = [8, 128], strides = [1, 1]} : vector<8x512xf32> to vector<8x128xf32>
    %331 = arith.negf %330 : vector<8x128xf32>
    %332 = math.exp %331 : vector<8x128xf32>
    %cst_80 = arith.constant 1.000000e+00 : f32
    %333 = vector.broadcast %cst_80 : f32 to vector<8x128xf32>
    %334 = arith.addf %333, %332 : vector<8x128xf32>
    %335 = arith.divf %333, %334 : vector<8x128xf32>
    %336 = arith.mulf %327, %271 : vector<8x128xf32>
    %337 = arith.mulf %321, %329 : vector<8x128xf32>
    %338 = arith.addf %336, %337 : vector<8x128xf32>
    %339 = math.tanh %338 : vector<8x128xf32>
    %340 = arith.mulf %335, %339 : vector<8x128xf32>
    %341 = arith.index_cast %280 : i32 to index
    %c0_81 = arith.constant 0 : index
    %342 = vector.load %arg10[%341, %c0_81] : memref<64x256xf32, #tpu.memory_space<vmem>>, vector<8x128xf32>
    tpu.vector_store %arg10[%341, %c0_81], %315 {strides = array<i32>} : memref<64x256xf32, #tpu.memory_space<vmem>>, vector<8x128xf32>,
    %343 = arith.index_cast %282 : i32 to index
    %c128_82 = arith.constant 128 : index
    %344 = vector.load %arg10[%343, %c128_82] : memref<64x256xf32, #tpu.memory_space<vmem>>, vector<8x128xf32>
    tpu.vector_store %arg10[%343, %c128_82], %340 {strides = array<i32>} : memref<64x256xf32, #tpu.memory_space<vmem>>, vector<8x128xf32>,
    %c5_i32 = arith.constant 5 : i32
    %c7_i32_83 = arith.constant 7 : i32
    %345 = arith.subi %c7_i32_83, %c5_i32 : i32
    %c8_i32_84 = arith.constant 8 : i32
    %346 = arith.muli %c5_i32, %c8_i32_84 : i32
    %347 = tpu.assume_multiple %346, 8 : i32
    %c8_i32_85 = arith.constant 8 : i32
    %348 = arith.muli %345, %c8_i32_85 : i32
    %349 = tpu.assume_multiple %348, 8 : i32
    %350 = arith.index_cast %347 : i32 to index
    %c0_86 = arith.constant 0 : index
    %351 = vector.load %arg9[%350, %c0_86] : memref<64x1024xf32, #tpu.memory_space<vmem>>, vector<8x512xf32>
    %352 = arith.index_cast %349 : i32 to index
    %c512_87 = arith.constant 512 : index
    %353 = vector.load %arg9[%352, %c512_87] : memref<64x1024xf32, #tpu.memory_space<vmem>>, vector<8x512xf32>
    %cst_88 = arith.constant dense<0.000000e+00> : vector<8x512xf32>
    %354 = tpu.matmul %315, %7, %cst_88 {dimension_numbers = #tpu.dot_dimension_numbers<[1], [0], [0], [1], [0, 0, 1, 1], [], []>} : vector<8x128xf32>, vector<128x512xf32>, vector<8x512xf32> -> vector<8x512xf32>
    %355 = arith.addf %351, %354 : vector<8x512xf32>
    %cst_89 = arith.constant dense<0.000000e+00> : vector<8x512xf32>
    %356 = tpu.matmul %340, %8, %cst_89 {dimension_numbers = #tpu.dot_dimension_numbers<[1], [0], [0], [1], [0, 0, 1, 1], [], []>} : vector<8x128xf32>, vector<128x512xf32>, vector<8x512xf32> -> vector<8x512xf32>
    %357 = arith.addf %353, %356 : vector<8x512xf32>
    %358 = vector.extract_strided_slice %355 {offsets = [0, 0], sizes = [8, 128], strides = [1, 1]} : vector<8x512xf32> to vector<8x128xf32>
    %359 = arith.negf %358 : vector<8x128xf32>
    %360 = math.exp %359 : vector<8x128xf32>
    %cst_90 = arith.constant 1.000000e+00 : f32
    %361 = vector.broadcast %cst_90 : f32 to vector<8x128xf32>
    %362 = arith.addf %361, %360 : vector<8x128xf32>
    %363 = arith.divf %361, %362 : vector<8x128xf32>
    %364 = vector.extract_strided_slice %355 {offsets = [0, 128], sizes = [8, 128], strides = [1, 1]} : vector<8x512xf32> to vector<8x128xf32>
    %365 = arith.negf %364 : vector<8x128xf32>
    %366 = math.exp %365 : vector<8x128xf32>
    %cst_91 = arith.constant 1.000000e+00 : f32
    %367 = vector.broadcast %cst_91 : f32 to vector<8x128xf32>
    %368 = arith.addf %367, %366 : vector<8x128xf32>
    %369 = arith.divf %367, %368 : vector<8x128xf32>
    %370 = vector.extract_strided_slice %355 {offsets = [0, 256], sizes = [8, 128], strides = [1, 1]} : vector<8x512xf32> to vector<8x128xf32>
    %371 = math.tanh %370 : vector<8x128xf32>
    %372 = vector.extract_strided_slice %355 {offsets = [0, 384], sizes = [8, 128], strides = [1, 1]} : vector<8x512xf32> to vector<8x128xf32>
    %373 = arith.negf %372 : vector<8x128xf32>
    %374 = math.exp %373 : vector<8x128xf32>
    %cst_92 = arith.constant 1.000000e+00 : f32
    %375 = vector.broadcast %cst_92 : f32 to vector<8x128xf32>
    %376 = arith.addf %375, %374 : vector<8x128xf32>
    %377 = arith.divf %375, %376 : vector<8x128xf32>
    %378 = arith.mulf %369, %313 : vector<8x128xf32>
    %379 = arith.mulf %363, %371 : vector<8x128xf32>
    %380 = arith.addf %378, %379 : vector<8x128xf32>
    %381 = math.tanh %380 : vector<8x128xf32>
    %382 = arith.mulf %377, %381 : vector<8x128xf32>
    %383 = vector.extract_strided_slice %357 {offsets = [0, 0], sizes = [8, 128], strides = [1, 1]} : vector<8x512xf32> to vector<8x128xf32>
    %384 = arith.negf %383 : vector<8x128xf32>
    %385 = math.exp %384 : vector<8x128xf32>
    %cst_93 = arith.constant 1.000000e+00 : f32
    %386 = vector.broadcast %cst_93 : f32 to vector<8x128xf32>
    %387 = arith.addf %386, %385 : vector<8x128xf32>
    %388 = arith.divf %386, %387 : vector<8x128xf32>
    %389 = vector.extract_strided_slice %357 {offsets = [0, 128], sizes = [8, 128], strides = [1, 1]} : vector<8x512xf32> to vector<8x128xf32>
    %390 = arith.negf %389 : vector<8x128xf32>
    %391 = math.exp %390 : vector<8x128xf32>
    %cst_94 = arith.constant 1.000000e+00 : f32
    %392 = vector.broadcast %cst_94 : f32 to vector<8x128xf32>
    %393 = arith.addf %392, %391 : vector<8x128xf32>
    %394 = arith.divf %392, %393 : vector<8x128xf32>
    %395 = vector.extract_strided_slice %357 {offsets = [0, 256], sizes = [8, 128], strides = [1, 1]} : vector<8x512xf32> to vector<8x128xf32>
    %396 = math.tanh %395 : vector<8x128xf32>
    %397 = vector.extract_strided_slice %357 {offsets = [0, 384], sizes = [8, 128], strides = [1, 1]} : vector<8x512xf32> to vector<8x128xf32>
    %398 = arith.negf %397 : vector<8x128xf32>
    %399 = math.exp %398 : vector<8x128xf32>
    %cst_95 = arith.constant 1.000000e+00 : f32
    %400 = vector.broadcast %cst_95 : f32 to vector<8x128xf32>
    %401 = arith.addf %400, %399 : vector<8x128xf32>
    %402 = arith.divf %400, %401 : vector<8x128xf32>
    %403 = arith.mulf %394, %338 : vector<8x128xf32>
    %404 = arith.mulf %388, %396 : vector<8x128xf32>
    %405 = arith.addf %403, %404 : vector<8x128xf32>
    %406 = math.tanh %405 : vector<8x128xf32>
    %407 = arith.mulf %402, %406 : vector<8x128xf32>
    %408 = arith.index_cast %347 : i32 to index
    %c0_96 = arith.constant 0 : index
    %409 = vector.load %arg10[%408, %c0_96] : memref<64x256xf32, #tpu.memory_space<vmem>>, vector<8x128xf32>
    tpu.vector_store %arg10[%408, %c0_96], %382 {strides = array<i32>} : memref<64x256xf32, #tpu.memory_space<vmem>>, vector<8x128xf32>,
    %410 = arith.index_cast %349 : i32 to index
    %c128_97 = arith.constant 128 : index
    %411 = vector.load %arg10[%410, %c128_97] : memref<64x256xf32, #tpu.memory_space<vmem>>, vector<8x128xf32>
    tpu.vector_store %arg10[%410, %c128_97], %407 {strides = array<i32>} : memref<64x256xf32, #tpu.memory_space<vmem>>, vector<8x128xf32>,
    %c6_i32 = arith.constant 6 : i32
    %c7_i32_98 = arith.constant 7 : i32
    %412 = arith.subi %c7_i32_98, %c6_i32 : i32
    %c8_i32_99 = arith.constant 8 : i32
    %413 = arith.muli %c6_i32, %c8_i32_99 : i32
    %414 = tpu.assume_multiple %413, 8 : i32
    %c8_i32_100 = arith.constant 8 : i32
    %415 = arith.muli %412, %c8_i32_100 : i32
    %416 = tpu.assume_multiple %415, 8 : i32
    %417 = arith.index_cast %414 : i32 to index
    %c0_101 = arith.constant 0 : index
    %418 = vector.load %arg9[%417, %c0_101] : memref<64x1024xf32, #tpu.memory_space<vmem>>, vector<8x512xf32>
    %419 = arith.index_cast %416 : i32 to index
    %c512_102 = arith.constant 512 : index
    %420 = vector.load %arg9[%419, %c512_102] : memref<64x1024xf32, #tpu.memory_space<vmem>>, vector<8x512xf32>
    %cst_103 = arith.constant dense<0.000000e+00> : vector<8x512xf32>
    %421 = tpu.matmul %382, %7, %cst_103 {dimension_numbers = #tpu.dot_dimension_numbers<[1], [0], [0], [1], [0, 0, 1, 1], [], []>} : vector<8x128xf32>, vector<128x512xf32>, vector<8x512xf32> -> vector<8x512xf32>
    %422 = arith.addf %418, %421 : vector<8x512xf32>
    %cst_104 = arith.constant dense<0.000000e+00> : vector<8x512xf32>
    %423 = tpu.matmul %407, %8, %cst_104 {dimension_numbers = #tpu.dot_dimension_numbers<[1], [0], [0], [1], [0, 0, 1, 1], [], []>} : vector<8x128xf32>, vector<128x512xf32>, vector<8x512xf32> -> vector<8x512xf32>
    %424 = arith.addf %420, %423 : vector<8x512xf32>
    %425 = vector.extract_strided_slice %422 {offsets = [0, 0], sizes = [8, 128], strides = [1, 1]} : vector<8x512xf32> to vector<8x128xf32>
    %426 = arith.negf %425 : vector<8x128xf32>
    %427 = math.exp %426 : vector<8x128xf32>
    %cst_105 = arith.constant 1.000000e+00 : f32
    %428 = vector.broadcast %cst_105 : f32 to vector<8x128xf32>
    %429 = arith.addf %428, %427 : vector<8x128xf32>
    %430 = arith.divf %428, %429 : vector<8x128xf32>
    %431 = vector.extract_strided_slice %422 {offsets = [0, 128], sizes = [8, 128], strides = [1, 1]} : vector<8x512xf32> to vector<8x128xf32>
    %432 = arith.negf %431 : vector<8x128xf32>
    %433 = math.exp %432 : vector<8x128xf32>
    %cst_106 = arith.constant 1.000000e+00 : f32
    %434 = vector.broadcast %cst_106 : f32 to vector<8x128xf32>
    %435 = arith.addf %434, %433 : vector<8x128xf32>
    %436 = arith.divf %434, %435 : vector<8x128xf32>
    %437 = vector.extract_strided_slice %422 {offsets = [0, 256], sizes = [8, 128], strides = [1, 1]} : vector<8x512xf32> to vector<8x128xf32>
    %438 = math.tanh %437 : vector<8x128xf32>
    %439 = vector.extract_strided_slice %422 {offsets = [0, 384], sizes = [8, 128], strides = [1, 1]} : vector<8x512xf32> to vector<8x128xf32>
    %440 = arith.negf %439 : vector<8x128xf32>
    %441 = math.exp %440 : vector<8x128xf32>
    %cst_107 = arith.constant 1.000000e+00 : f32
    %442 = vector.broadcast %cst_107 : f32 to vector<8x128xf32>
    %443 = arith.addf %442, %441 : vector<8x128xf32>
    %444 = arith.divf %442, %443 : vector<8x128xf32>
    %445 = arith.mulf %436, %380 : vector<8x128xf32>
    %446 = arith.mulf %430, %438 : vector<8x128xf32>
    %447 = arith.addf %445, %446 : vector<8x128xf32>
    %448 = math.tanh %447 : vector<8x128xf32>
    %449 = arith.mulf %444, %448 : vector<8x128xf32>
    %450 = vector.extract_strided_slice %424 {offsets = [0, 0], sizes = [8, 128], strides = [1, 1]} : vector<8x512xf32> to vector<8x128xf32>
    %451 = arith.negf %450 : vector<8x128xf32>
    %452 = math.exp %451 : vector<8x128xf32>
    %cst_108 = arith.constant 1.000000e+00 : f32
    %453 = vector.broadcast %cst_108 : f32 to vector<8x128xf32>
    %454 = arith.addf %453, %452 : vector<8x128xf32>
    %455 = arith.divf %453, %454 : vector<8x128xf32>
    %456 = vector.extract_strided_slice %424 {offsets = [0, 128], sizes = [8, 128], strides = [1, 1]} : vector<8x512xf32> to vector<8x128xf32>
    %457 = arith.negf %456 : vector<8x128xf32>
    %458 = math.exp %457 : vector<8x128xf32>
    %cst_109 = arith.constant 1.000000e+00 : f32
    %459 = vector.broadcast %cst_109 : f32 to vector<8x128xf32>
    %460 = arith.addf %459, %458 : vector<8x128xf32>
    %461 = arith.divf %459, %460 : vector<8x128xf32>
    %462 = vector.extract_strided_slice %424 {offsets = [0, 256], sizes = [8, 128], strides = [1, 1]} : vector<8x512xf32> to vector<8x128xf32>
    %463 = math.tanh %462 : vector<8x128xf32>
    %464 = vector.extract_strided_slice %424 {offsets = [0, 384], sizes = [8, 128], strides = [1, 1]} : vector<8x512xf32> to vector<8x128xf32>
    %465 = arith.negf %464 : vector<8x128xf32>
    %466 = math.exp %465 : vector<8x128xf32>
    %cst_110 = arith.constant 1.000000e+00 : f32
    %467 = vector.broadcast %cst_110 : f32 to vector<8x128xf32>
    %468 = arith.addf %467, %466 : vector<8x128xf32>
    %469 = arith.divf %467, %468 : vector<8x128xf32>
    %470 = arith.mulf %461, %405 : vector<8x128xf32>
    %471 = arith.mulf %455, %463 : vector<8x128xf32>
    %472 = arith.addf %470, %471 : vector<8x128xf32>
    %473 = math.tanh %472 : vector<8x128xf32>
    %474 = arith.mulf %469, %473 : vector<8x128xf32>
    %475 = arith.index_cast %414 : i32 to index
    %c0_111 = arith.constant 0 : index
    %476 = vector.load %arg10[%475, %c0_111] : memref<64x256xf32, #tpu.memory_space<vmem>>, vector<8x128xf32>
    tpu.vector_store %arg10[%475, %c0_111], %449 {strides = array<i32>} : memref<64x256xf32, #tpu.memory_space<vmem>>, vector<8x128xf32>,
    %477 = arith.index_cast %416 : i32 to index
    %c128_112 = arith.constant 128 : index
    %478 = vector.load %arg10[%477, %c128_112] : memref<64x256xf32, #tpu.memory_space<vmem>>, vector<8x128xf32>
    tpu.vector_store %arg10[%477, %c128_112], %474 {strides = array<i32>} : memref<64x256xf32, #tpu.memory_space<vmem>>, vector<8x128xf32>,
    %c7_i32_113 = arith.constant 7 : i32
    %c7_i32_114 = arith.constant 7 : i32
    %479 = arith.subi %c7_i32_114, %c7_i32_113 : i32
    %c8_i32_115 = arith.constant 8 : i32
    %480 = arith.muli %c7_i32_113, %c8_i32_115 : i32
    %481 = tpu.assume_multiple %480, 8 : i32
    %c8_i32_116 = arith.constant 8 : i32
    %482 = arith.muli %479, %c8_i32_116 : i32
    %483 = tpu.assume_multiple %482, 8 : i32
    %484 = arith.index_cast %481 : i32 to index
    %c0_117 = arith.constant 0 : index
    %485 = vector.load %arg9[%484, %c0_117] : memref<64x1024xf32, #tpu.memory_space<vmem>>, vector<8x512xf32>
    %486 = arith.index_cast %483 : i32 to index
    %c512_118 = arith.constant 512 : index
    %487 = vector.load %arg9[%486, %c512_118] : memref<64x1024xf32, #tpu.memory_space<vmem>>, vector<8x512xf32>
    %cst_119 = arith.constant dense<0.000000e+00> : vector<8x512xf32>
    %488 = tpu.matmul %449, %7, %cst_119 {dimension_numbers = #tpu.dot_dimension_numbers<[1], [0], [0], [1], [0, 0, 1, 1], [], []>} : vector<8x128xf32>, vector<128x512xf32>, vector<8x512xf32> -> vector<8x512xf32>
    %489 = arith.addf %485, %488 : vector<8x512xf32>
    %cst_120 = arith.constant dense<0.000000e+00> : vector<8x512xf32>
    %490 = tpu.matmul %474, %8, %cst_120 {dimension_numbers = #tpu.dot_dimension_numbers<[1], [0], [0], [1], [0, 0, 1, 1], [], []>} : vector<8x128xf32>, vector<128x512xf32>, vector<8x512xf32> -> vector<8x512xf32>
    %491 = arith.addf %487, %490 : vector<8x512xf32>
    %492 = vector.extract_strided_slice %489 {offsets = [0, 0], sizes = [8, 128], strides = [1, 1]} : vector<8x512xf32> to vector<8x128xf32>
    %493 = arith.negf %492 : vector<8x128xf32>
    %494 = math.exp %493 : vector<8x128xf32>
    %cst_121 = arith.constant 1.000000e+00 : f32
    %495 = vector.broadcast %cst_121 : f32 to vector<8x128xf32>
    %496 = arith.addf %495, %494 : vector<8x128xf32>
    %497 = arith.divf %495, %496 : vector<8x128xf32>
    %498 = vector.extract_strided_slice %489 {offsets = [0, 128], sizes = [8, 128], strides = [1, 1]} : vector<8x512xf32> to vector<8x128xf32>
    %499 = arith.negf %498 : vector<8x128xf32>
    %500 = math.exp %499 : vector<8x128xf32>
    %cst_122 = arith.constant 1.000000e+00 : f32
    %501 = vector.broadcast %cst_122 : f32 to vector<8x128xf32>
    %502 = arith.addf %501, %500 : vector<8x128xf32>
    %503 = arith.divf %501, %502 : vector<8x128xf32>
    %504 = vector.extract_strided_slice %489 {offsets = [0, 256], sizes = [8, 128], strides = [1, 1]} : vector<8x512xf32> to vector<8x128xf32>
    %505 = math.tanh %504 : vector<8x128xf32>
    %506 = vector.extract_strided_slice %489 {offsets = [0, 384], sizes = [8, 128], strides = [1, 1]} : vector<8x512xf32> to vector<8x128xf32>
    %507 = arith.negf %506 : vector<8x128xf32>
    %508 = math.exp %507 : vector<8x128xf32>
    %cst_123 = arith.constant 1.000000e+00 : f32
    %509 = vector.broadcast %cst_123 : f32 to vector<8x128xf32>
    %510 = arith.addf %509, %508 : vector<8x128xf32>
    %511 = arith.divf %509, %510 : vector<8x128xf32>
    %512 = arith.mulf %503, %447 : vector<8x128xf32>
    %513 = arith.mulf %497, %505 : vector<8x128xf32>
    %514 = arith.addf %512, %513 : vector<8x128xf32>
    %515 = math.tanh %514 : vector<8x128xf32>
    %516 = arith.mulf %511, %515 : vector<8x128xf32>
    %517 = vector.extract_strided_slice %491 {offsets = [0, 0], sizes = [8, 128], strides = [1, 1]} : vector<8x512xf32> to vector<8x128xf32>
    %518 = arith.negf %517 : vector<8x128xf32>
    %519 = math.exp %518 : vector<8x128xf32>
    %cst_124 = arith.constant 1.000000e+00 : f32
    %520 = vector.broadcast %cst_124 : f32 to vector<8x128xf32>
    %521 = arith.addf %520, %519 : vector<8x128xf32>
    %522 = arith.divf %520, %521 : vector<8x128xf32>
    %523 = vector.extract_strided_slice %491 {offsets = [0, 128], sizes = [8, 128], strides = [1, 1]} : vector<8x512xf32> to vector<8x128xf32>
    %524 = arith.negf %523 : vector<8x128xf32>
    %525 = math.exp %524 : vector<8x128xf32>
    %cst_125 = arith.constant 1.000000e+00 : f32
    %526 = vector.broadcast %cst_125 : f32 to vector<8x128xf32>
    %527 = arith.addf %526, %525 : vector<8x128xf32>
    %528 = arith.divf %526, %527 : vector<8x128xf32>
    %529 = vector.extract_strided_slice %491 {offsets = [0, 256], sizes = [8, 128], strides = [1, 1]} : vector<8x512xf32> to vector<8x128xf32>
    %530 = math.tanh %529 : vector<8x128xf32>
    %531 = vector.extract_strided_slice %491 {offsets = [0, 384], sizes = [8, 128], strides = [1, 1]} : vector<8x512xf32> to vector<8x128xf32>
    %532 = arith.negf %531 : vector<8x128xf32>
    %533 = math.exp %532 : vector<8x128xf32>
    %cst_126 = arith.constant 1.000000e+00 : f32
    %534 = vector.broadcast %cst_126 : f32 to vector<8x128xf32>
    %535 = arith.addf %534, %533 : vector<8x128xf32>
    %536 = arith.divf %534, %535 : vector<8x128xf32>
    %537 = arith.mulf %528, %472 : vector<8x128xf32>
    %538 = arith.mulf %522, %530 : vector<8x128xf32>
    %539 = arith.addf %537, %538 : vector<8x128xf32>
    %540 = math.tanh %539 : vector<8x128xf32>
    %541 = arith.mulf %536, %540 : vector<8x128xf32>
    %542 = arith.index_cast %481 : i32 to index
    %c0_127 = arith.constant 0 : index
    %543 = vector.load %arg10[%542, %c0_127] : memref<64x256xf32, #tpu.memory_space<vmem>>, vector<8x128xf32>
    tpu.vector_store %arg10[%542, %c0_127], %516 {strides = array<i32>} : memref<64x256xf32, #tpu.memory_space<vmem>>, vector<8x128xf32>,
    %544 = arith.index_cast %483 : i32 to index
    %c128_128 = arith.constant 128 : index
    %545 = vector.load %arg10[%544, %c128_128] : memref<64x256xf32, #tpu.memory_space<vmem>>, vector<8x128xf32>
    tpu.vector_store %arg10[%544, %c128_128], %541 {strides = array<i32>} : memref<64x256xf32, #tpu.memory_space<vmem>>, vector<8x128xf32>,
    %c8_i32_129 = arith.constant 8 : i32
    %c0_130 = arith.constant 0 : index
    %c0_131 = arith.constant 0 : index
    %546 = vector.load %arg10[%c0_130, %c0_131] : memref<64x256xf32, #tpu.memory_space<vmem>>, vector<64x256xf32>
    %c0_132 = arith.constant 0 : index
    %c0_133 = arith.constant 0 : index
    %547 = vector.load %arg6[%c0_132, %c0_133] : memref<256x128xf32, #tpu.memory_space<vmem>>, vector<256x128xf32>
    %cst_134 = arith.constant dense<0.000000e+00> : vector<64x128xf32>
    %548 = tpu.matmul %546, %547, %cst_134 {dimension_numbers = #tpu.dot_dimension_numbers<[1], [0], [0], [1], [0, 0, 1, 1], [], []>} : vector<64x256xf32>, vector<256x128xf32>, vector<64x128xf32> -> vector<64x128xf32>
    %c0_135 = arith.constant 0 : index
    %c0_136 = arith.constant 0 : index
    %549 = vector.load %arg7[%c0_135, %c0_136] : memref<1x128xf32, #tpu.memory_space<vmem>>, vector<1x128xf32>
    %550 = vector.broadcast %549 : vector<1x128xf32> to vector<64x128xf32>
    %551 = arith.addf %548, %550 : vector<64x128xf32>
    %c0_137 = arith.constant 0 : index
    %c0_138 = arith.constant 0 : index
    %552 = vector.load %arg8[%c0_137, %c0_138] : memref<64x128xf32, #tpu.memory_space<vmem>>, vector<64x128xf32>
    tpu.vector_store %arg8[%c0_137, %c0_138], %551 {strides = array<i32>} : memref<64x128xf32, #tpu.memory_space<vmem>>, vector<64x128xf32>,
    return
  }
  func.func @transform_0(%arg0: i32) -> (i32, i32) {
    %c0_i32 = arith.constant 0 : i32
    %c0_i32_0 = arith.constant 0 : i32
    return %arg0, %c0_i32 : i32, i32
  }
  func.func @transform_1(%arg0: i32) -> (i32, i32) {
    %c0_i32 = arith.constant 0 : i32
    %c0_i32_0 = arith.constant 0 : i32
    %c0_i32_1 = arith.constant 0 : i32
    return %c0_i32, %c0_i32_0 : i32, i32
  }
  func.func @transform_2(%arg0: i32) -> (i32, i32) {
    %c0_i32 = arith.constant 0 : i32
    %c0_i32_0 = arith.constant 0 : i32
    %c0_i32_1 = arith.constant 0 : i32
    return %c0_i32, %c0_i32_0 : i32, i32
  }
  func.func @transform_3(%arg0: i32) -> (i32, i32) {
    %c0_i32 = arith.constant 0 : i32
    %c0_i32_0 = arith.constant 0 : i32
    %c0_i32_1 = arith.constant 0 : i32
    return %c0_i32, %c0_i32_0 : i32, i32
  }
  func.func @transform_4(%arg0: i32) -> (i32, i32) {
    %c0_i32 = arith.constant 0 : i32
    %c0_i32_0 = arith.constant 0 : i32
    %c0_i32_1 = arith.constant 0 : i32
    return %c0_i32, %c0_i32_0 : i32, i32
  }
  func.func @transform_5(%arg0: i32) -> (i32, i32) {
    %c0_i32 = arith.constant 0 : i32
    %c0_i32_0 = arith.constant 0 : i32
    %c0_i32_1 = arith.constant 0 : i32
    return %c0_i32, %c0_i32_0 : i32, i32
  }
  func.func @transform_6(%arg0: i32) -> (i32, i32) {
    %c0_i32 = arith.constant 0 : i32
    %c0_i32_0 = arith.constant 0 : i32
    %c0_i32_1 = arith.constant 0 : i32
    return %c0_i32, %c0_i32_0 : i32, i32
  }
  func.func @transform_7(%arg0: i32) -> (i32, i32) {
    %c0_i32 = arith.constant 0 : i32
    %c0_i32_0 = arith.constant 0 : i32
    return %arg0, %c0_i32 : i32, i32
  }
}

</mosaic_0001>

<llo_original>
// kernel: tpu_custom_call.1
$region0: #{tpu_custom_call.1}
  #allocation0 [shape = 'u32[]', space=smem, size = 0x4, offset = 0x4, fixed_abs, tag = 'smem constant byte address 0x4 - core index']
  #allocation1 [shape = 'u32[144,128]{1,0:T(1,128)}', space=vmem, size = 0x12000, scoped, tag = 'internal scratch']
  #allocation2 [shape = 'f32[64,1024]{1,0:T(8,128)}', space=vmem, size = 0x40000, scoped, tag = 'scratch operand']
  #allocation3 [shape = 'f32[64,256]{1,0:T(8,128)}', space=vmem, size = 0x10000, scoped, tag = 'scratch operand']
  %s0 = inlined_call_operand.vmem [shape: f32[64,16], index: 0, kind: input, shape index: {}]
  %s1 = inlined_call_operand.hbm [shape: f32[16,1024], index: 1, kind: input, shape index: {}]
  %s2 = inlined_call_operand.vmem [shape: f32[1,1024], index: 2, kind: input, shape index: {}]
  %s3 = inlined_call_operand.hbm [shape: f32[128,512], index: 3, kind: input, shape index: {}]
  %s4 = inlined_call_operand.hbm [shape: f32[128,512], index: 4, kind: input, shape index: {}]
  %s5 = inlined_call_operand.hbm [shape: f32[256,128], index: 5, kind: input, shape index: {}]
  %s6 = inlined_call_operand.vmem [shape: f32[1,128], index: 6, kind: input, shape index: {}]
  %s7 = inlined_call_operand.hbm [shape: f32[64,128], index: 7, kind: output, shape index: {}]
  %s8 = sld [smem:[#allocation0]]
  $region54: #{tpu_custom_call.1} parent=0
    _
  %s10 = ssub.s32 1, %s8
  %s11 = scalar_select 0, %s10, %s8
  $region1: #{tpu_custom_call.1} parent=0
    #allocation4 [shape = 'u8[65536]{0}', space=vmem, size = 0x10000, scoped, tag = 'input window, operand 1, single buffered']
    #allocation5 [shape = 's32[1]{0}', space=sflag, size = 0x4, scoped, tag = 'scoped memory for tpu_custom_call.1']
    #allocation6 [shape = 's32[1]{0}', space=sflag, size = 0x4, scoped, tag = 'scoped memory for tpu_custom_call.1']
    #allocation7 [shape = 'u8[262144]{0}', space=vmem, size = 0x40000, scoped, tag = 'input window, operand 3, single buffered']
    #allocation8 [shape = 's32[1]{0}', space=sflag, size = 0x4, scoped, tag = 'scoped memory for tpu_custom_call.1']
    #allocation9 [shape = 'u8[262144]{0}', space=vmem, size = 0x40000, scoped, tag = 'input window, operand 4, single buffered']
    #allocation10 [shape = 'u8[131072]{0}', space=vmem, size = 0x20000, scoped, tag = 'input window, operand 5, single buffered']
    #allocation11 [shape = 's32[1]{0}', space=sflag, size = 0x4, scoped, tag = 'scoped memory for tpu_custom_call.1']
    #allocation12 [shape = 'u8[32768]{0}', space=vmem, size = 0x8000, scoped, tag = 'output window, operand 0, single buffered']
    %12 = vsyncpa [#allocation5], 0
    %13 = vsyncpa [#allocation8], 0
    %14 = vsyncpa [#allocation11], 0
    %15 = vsyncpa [#allocation6], 0
    // Predicated region
    $region2: #{tpu_custom_call.1} parent=1 // pred_check
      _
    $region3: #{tpu_custom_call.1} parent=1 // pred_check_branch
      %17 = sbr.rel (0) target = $region5
    $region4: #{tpu_custom_call.1} parent=1 // pred_region
      _
    $region5: #{tpu_custom_call.1} parent=1 // pred_fallthru
      _
    // Predicated region
    $region6: #{tpu_custom_call.1} parent=1 // pred_check
      _
    $region7: #{tpu_custom_call.1} parent=1 // pred_check_branch
      %19 = sbr.rel (0) target = $region9
    $region8: #{tpu_custom_call.1} parent=1 // pred_region
      %s21 = ssub.s32 2048, 2048
      %22 = vsyncadd [#allocation5], %s21
      %s23 = sshll.u32 [#allocation4], 4
      %s24 = int_to_ptr.vmem [resolvable:$true] %s23
      %29 = dma.hbm_to_vmem [thread:$0]  %s1, 2048, %s24, [#allocation5], 1024, 1024, 64
    $region9: #{tpu_custom_call.1} parent=1 // pred_fallthru
      _
    // Predicated region
    $region10: #{tpu_custom_call.1} parent=1 // pred_check
      _
    $region11: #{tpu_custom_call.1} parent=1 // pred_check_branch
      %31 = sbr.rel (0) target = $region13
    $region12: #{tpu_custom_call.1} parent=1 // pred_region
      _
    $region13: #{tpu_custom_call.1} parent=1 // pred_fallthru
      _
    // Predicated region
    $region14: #{tpu_custom_call.1} parent=1 // pred_check
      _
    $region15: #{tpu_custom_call.1} parent=1 // pred_check_branch
      %33 = sbr.rel (0) target = $region17
    $region16: #{tpu_custom_call.1} parent=1 // pred_region
      %s35 = ssub.s32 8192, 8192
      %36 = vsyncadd [#allocation8], %s35
      %s37 = sshll.u32 [#allocation7], 4
      %s38 = int_to_ptr.vmem [resolvable:$true] %s37
      %43 = dma.hbm_to_vmem [thread:$0]  %s3, 8192, %s38, [#allocation8], 512, 512, 32
    $region17: #{tpu_custom_call.1} parent=1 // pred_fallthru
      _
    // Predicated region
    $region18: #{tpu_custom_call.1} parent=1 // pred_check
      _
    $region19: #{tpu_custom_call.1} parent=1 // pred_check_branch
      %45 = sbr.rel (0) target = $region21
    $region20: #{tpu_custom_call.1} parent=1 // pred_region
      %s47 = ssub.s32 8192, 8192
      %48 = vsyncadd [#allocation8], %s47
      %s49 = sshll.u32 [#allocation9], 4
      %s50 = int_to_ptr.vmem [resolvable:$true] %s49
      %55 = dma.hbm_to_vmem [thread:$0]  %s4, 8192, %s50, [#allocation8], 512, 512, 32
    $region21: #{tpu_custom_call.1} parent=1 // pred_fallthru
      _
    // Predicated region
    $region22: #{tpu_custom_call.1} parent=1 // pred_check
      _
    $region23: #{tpu_custom_call.1} parent=1 // pred_check_branch
      %57 = sbr.rel (0) target = $region25
    $region24: #{tpu_custom_call.1} parent=1 // pred_region
      %s59 = ssub.s32 4096, 4096
      %60 = vsyncadd [#allocation11], %s59
      %s61 = sshll.u32 [#allocation10], 4
      %s62 = int_to_ptr.vmem [resolvable:$true] %s61
      %67 = dma.hbm_to_vmem [thread:$0]  %s5, 4096, %s62, [#allocation11], 128, 128, 8
    $region25: #{tpu_custom_call.1} parent=1 // pred_fallthru
      _
    // Predicated region
    $region26: #{tpu_custom_call.1} parent=1 // pred_check
      _
    $region27: #{tpu_custom_call.1} parent=1 // pred_check_branch
      %69 = sbr.rel (0) target = $region29
    $region28: #{tpu_custom_call.1} parent=1 // pred_region
      _
    $region29: #{tpu_custom_call.1} parent=1 // pred_fallthru
      _
    // Predicated region
    $region30: #{tpu_custom_call.1} parent=1 // pred_check
      _
    $region31: #{tpu_custom_call.1} parent=1 // pred_check_branch
      %71 = sbr.rel (0) target = $region33
    $region32: #{tpu_custom_call.1} parent=1 // pred_region
      %72 = dma.done [#allocation5], 2048
    $region33: #{tpu_custom_call.1} parent=1 // pred_fallthru
      _
    // Predicated region
    $region34: #{tpu_custom_call.1} parent=1 // pred_check
      _
    $region35: #{tpu_custom_call.1} parent=1 // pred_check_branch
      %74 = sbr.rel (0) target = $region37
    $region36: #{tpu_custom_call.1} parent=1 // pred_region
      %75 = dma.done [#allocation8], 8192
    $region37: #{tpu_custom_call.1} parent=1 // pred_fallthru
      _
    // Predicated region
    $region38: #{tpu_custom_call.1} parent=1 // pred_check
      _
    $region39: #{tpu_custom_call.1} parent=1 // pred_check_branch
      %77 = sbr.rel (0) target = $region41
    $region40: #{tpu_custom_call.1} parent=1 // pred_region
      %78 = dma.done [#allocation8], 8192
    $region41: #{tpu_custom_call.1} parent=1 // pred_fallthru
      _
    // Predicated region
    $region42: #{tpu_custom_call.1} parent=1 // pred_check
      _
    $region43: #{tpu_custom_call.1} parent=1 // pred_check_branch
      %80 = sbr.rel (0) target = $region45
    $region44: #{tpu_custom_call.1} parent=1 // pred_region
      %81 = dma.done [#allocation11], 4096
    $region45: #{tpu_custom_call.1} parent=1 // pred_fallthru
      _
    %v82 = vld [vmem:[%s0] sm:$0xff]
    %v83 = vld [vmem:[%s0 + $0x8] sm:$0xff]
    %v84 = vld [vmem:[%s0 + $0x10] sm:$0xff]
    %v85 = vld [vmem:[%s0 + $0x18] sm:$0xff]
    %v86 = vld [vmem:[%s0 + $0x20] sm:$0xff]
    %v87 = vld [vmem:[%s0 + $0x28] sm:$0xff]
    %v88 = vld [vmem:[%s0 + $0x30] sm:$0xff]
    %v89 = vld [vmem:[%s0 + $0x38] sm:$0xff]
    %v90 = vld [vmem:[#allocation4] sm:$0xff]
    %v91 = vld [vmem:[#allocation4 + $0x8] sm:$0xff]
    %v92 = vld [vmem:[#allocation4 + $0x10] sm:$0xff]
    %v93 = vld [vmem:[#allocation4 + $0x18] sm:$0xff]
    %v94 = vld [vmem:[#allocation4 + $0x20] sm:$0xff]
    %v95 = vld [vmem:[#allocation4 + $0x28] sm:$0xff]
    %v96 = vld [vmem:[#allocation4 + $0x30] sm:$0xff]
    %v97 = vld [vmem:[#allocation4 + $0x38] sm:$0xff]
    %v98 = vld [vmem:[#allocation4 + $0x40] sm:$0xff]
    %v99 = vld [vmem:[#allocation4 + $0x48] sm:$0xff]
    %v100 = vld [vmem:[#allocation4 + $0x50] sm:$0xff]
    %v101 = vld [vmem:[#allocation4 + $0x58] sm:$0xff]
    %v102 = vld [vmem:[#allocation4 + $0x60] sm:$0xff]
    %v103 = vld [vmem:[#allocation4 + $0x68] sm:$0xff]
    %v104 = vld [vmem:[#allocation4 + $0x70] sm:$0xff]
    %v105 = vld [vmem:[#allocation4 + $0x78] sm:$0xff]
    %v106 = vld [vmem:[%s2] sm:$0xff]
    %v108 = vlaneseq
    %v109 = vshrl.u32 %v108, 7
    %v110 = vsub.s32 0, %v109
    %v111 = vrot.slane %v106, %v110
    %v112 = vlaneseq
    %v113 = vshrl.u32 %v112, 7
    %v114 = vsub.s32 1, %v113
    %v115 = vrot.slane %v106, %v114
    %v116 = vlaneseq
    %v117 = vshrl.u32 %v116, 7
    %v118 = vsub.s32 2, %v117
    %v119 = vrot.slane %v106, %v118
    %v120 = vlaneseq
    %v121 = vshrl.u32 %v120, 7
    %v122 = vsub.s32 3, %v121
    %v123 = vrot.slane %v106, %v122
    %v124 = vlaneseq
    %v125 = vshrl.u32 %v124, 7
    %v126 = vsub.s32 4, %v125
    %v127 = vrot.slane %v106, %v126
    %v128 = vlaneseq
    %v129 = vshrl.u32 %v128, 7
    %v130 = vsub.s32 5, %v129
    %v131 = vrot.slane %v106, %v130
    %v132 = vlaneseq
    %v133 = vshrl.u32 %v132, 7
    %v134 = vsub.s32 6, %v133
    %v135 = vrot.slane %v106, %v134
    %v136 = vlaneseq
    %v137 = vshrl.u32 %v136, 7
    %v138 = vsub.s32 7, %v137
    %v139 = vrot.slane %v106, %v138
    %vm148 = vcmask 130048
    %v150 = vsel %vm148, %v82, 0
    %v153 = vsel %vm148, %v83, 0
    %v156 = vsel %vm148, %v84, 0
    %v159 = vsel %vm148, %v85, 0
    %v162 = vsel %vm148, %v86, 0
    %v165 = vsel %vm148, %v87, 0
    %v168 = vsel %vm148, %v88, 0
    %v171 = vsel %vm148, %v89, 0
    %173 = vmatprep.subr.mxu0 %v91
    %174 = vmatpush1.msra.mxu0 %v90
    %175 = vmatprep.subr.mxu0 %v99
    %176 = vmatpush1.msra.mxu0 %v98
    %177 = vmatprep.subr.mxu0 0.0
    %178 = vmatpush1.msra.mxu0 0.0
    %179 = vmatprep.subr.mxu0 0.0
    %180 = vmatpush1.msra.mxu0 0.0
    %181 = vmatprep.subr.mxu0 0.0
    %182 = vmatpush1.msra.mxu0 0.0
    %183 = vmatprep.subr.mxu0 0.0
    %184 = vmatpush1.msra.mxu0 0.0
    %185 = vmatprep.subr.mxu0 0.0
    %186 = vmatpush1.msra.mxu0 0.0
    %187 = vmatprep.subr.mxu0 0.0
    %188 = vmatpush1.msra.mxu0 0.0
    %189 = vmatprep.subr.mxu0 0.0
    %190 = vmatpush1.msra.mxu0 0.0
    %191 = vmatprep.subr.mxu0 0.0
    %192 = vmatpush1.msra.mxu0 0.0
    %193 = vmatprep.subr.mxu0 0.0
    %194 = vmatpush1.msra.mxu0 0.0
    %195 = vmatprep.subr.mxu0 0.0
    %196 = vmatpush1.msra.mxu0 0.0
    %197 = vmatprep.subr.mxu0 0.0
    %198 = vmatpush1.msra.mxu0 0.0
    %199 = vmatprep.subr.mxu0 0.0
    %200 = vmatpush1.msra.mxu0 0.0
    %201 = vmatprep.subr.mxu0 0.0
    %202 = vmatpush1.msra.mxu0 0.0
    %203 = vmatprep.subr.mxu0 0.0
    %204 = vmatpush1.msra.mxu0 0.0
    %205 = vmatprep.subr.mxu0 0.0
    %206 = vmatpush1.msra.mxu0 0.0
    %207 = vmatprep.subr.mxu0 0.0
    %208 = vmatpush1.msra.mxu0 0.0
    %209 = vmatprep.subr.mxu0 0.0
    %210 = vmatpush1.msra.mxu0 0.0
    %211 = vmatprep.subr.mxu0 0.0
    %212 = vmatpush1.msra.mxu0 0.0
    %213 = vmatprep.subr.mxu0 0.0
    %214 = vmatpush1.msra.mxu0 0.0
    %215 = vmatprep.subr.mxu0 0.0
    %216 = vmatpush1.msra.mxu0 0.0
    %217 = vmatprep.subr.mxu0 0.0
    %218 = vmatpush1.msra.mxu0 0.0
    %219 = vmatprep.subr.mxu0 0.0
    %220 = vmatpush1.msra.mxu0 0.0
    %221 = vmatprep.subr.mxu0 0.0
    %222 = vmatpush1.msra.mxu0 0.0
    %223 = vmatprep.subr.mxu0 0.0
    %224 = vmatpush1.msra.mxu0 0.0
    %225 = vmatprep.subr.mxu0 0.0
    %226 = vmatpush1.msra.mxu0 0.0
    %227 = vmatprep.subr.mxu0 0.0
    %228 = vmatpush1.msra.mxu0 0.0
    %229 = vmatprep.subr.mxu0 0.0
    %230 = vmatpush1.msra.mxu0 0.0
    %231 = vmatprep.subr.mxu0 0.0
    %232 = vmatpush1.msra.mxu0 0.0
    %233 = vmatprep.subr.mxu0 0.0
    %234 = vmatpush1.msra.mxu0 0.0
    %235 = vmatprep.subr.mxu0 0.0
    %236 = vmatpush1.msra.mxu0 0.0
    %237 = vmatprep.mubr.f32.mxu0 0.0
    %238 = vmatmul.mubr.f32.gmra.mrb[0].mxu0 %v150
    %v239 = vpop.f32.mrb[0].mxu0
    %v240 = vadd.f32 %v111, %v239
    %v241 = vpop.f32.mrb[0].mxu0
    %v242 = vadd.f32 %v115, %v241
    %243 = vmatprep.mubr.f32.mxu0 0.0
    %244 = vmatmul.mubr.f32.gmra.mrb[0].mxu0 %v153
    %v245 = vpop.f32.mrb[0].mxu0
    %v246 = vadd.f32 %v111, %v245
    %v247 = vpop.f32.mrb[0].mxu0
    %v248 = vadd.f32 %v115, %v247
    %249 = vmatprep.mubr.f32.mxu0 0.0
    %250 = vmatmul.mubr.f32.gmra.mrb[0].mxu0 %v156
    %v251 = vpop.f32.mrb[0].mxu0
    %v252 = vadd.f32 %v111, %v251
    %v253 = vpop.f32.mrb[0].mxu0
    %v254 = vadd.f32 %v115, %v253
    %255 = vmatprep.mubr.f32.mxu0 0.0
    %256 = vmatmul.mubr.f32.gmra.mrb[0].mxu0 %v159
    %v257 = vpop.f32.mrb[0].mxu0
    %v258 = vadd.f32 %v111, %v257
    %v259 = vpop.f32.mrb[0].mxu0
    %v260 = vadd.f32 %v115, %v259
    %261 = vmatprep.mubr.f32.mxu0 0.0
    %262 = vmatmul.mubr.f32.gmra.mrb[0].mxu0 %v162
    %v263 = vpop.f32.mrb[0].mxu0
    %v264 = vadd.f32 %v111, %v263
    %v265 = vpop.f32.mrb[0].mxu0
    %v266 = vadd.f32 %v115, %v265
    %267 = vmatprep.mubr.f32.mxu0 0.0
    %268 = vmatmul.mubr.f32.gmra.mrb[0].mxu0 %v165
    %v269 = vpop.f32.mrb[0].mxu0
    %v270 = vadd.f32 %v111, %v269
    %v271 = vpop.f32.mrb[0].mxu0
    %v272 = vadd.f32 %v115, %v271
    %273 = vmatprep.mubr.f32.mxu0 0.0
    %274 = vmatmul.mubr.f32.gmra.mrb[0].mxu0 %v168
    %v275 = vpop.f32.mrb[0].mxu0
    %v276 = vadd.f32 %v111, %v275
    %v277 = vpop.f32.mrb[0].mxu0
    %v278 = vadd.f32 %v115, %v277
    %279 = vmatprep.mubr.f32.mxu0 0.0
    %280 = vmatmul.mubr.f32.gmra.mrb[0].mxu0 %v171
    %v281 = vpop.f32.mrb[0].mxu0
    %v282 = vadd.f32 %v111, %v281
    %v283 = vpop.f32.mrb[0].mxu0
    %v284 = vadd.f32 %v115, %v283
    %285 = vdwg.mxu0
    %286 = vmatprep.subr.mxu0 %v93
    %287 = vmatpush1.msra.mxu0 %v92
    %288 = vmatprep.subr.mxu0 %v101
    %289 = vmatpush1.msra.mxu0 %v100
    %290 = vmatprep.subr.mxu0 0.0
    %291 = vmatpush1.msra.mxu0 0.0
    %292 = vmatprep.subr.mxu0 0.0
    %293 = vmatpush1.msra.mxu0 0.0
    %294 = vmatprep.subr.mxu0 0.0
    %295 = vmatpush1.msra.mxu0 0.0
    %296 = vmatprep.subr.mxu0 0.0
    %297 = vmatpush1.msra.mxu0 0.0
    %298 = vmatprep.subr.mxu0 0.0
    %299 = vmatpush1.msra.mxu0 0.0
    %300 = vmatprep.subr.mxu0 0.0
    %301 = vmatpush1.msra.mxu0 0.0
    %302 = vmatprep.subr.mxu0 0.0
    %303 = vmatpush1.msra.mxu0 0.0
    %304 = vmatprep.subr.mxu0 0.0
    %305 = vmatpush1.msra.mxu0 0.0
    %306 = vmatprep.subr.mxu0 0.0
    %307 = vmatpush1.msra.mxu0 0.0
    %308 = vmatprep.subr.mxu0 0.0
    %309 = vmatpush1.msra.mxu0 0.0
    %310 = vmatprep.subr.mxu0 0.0
    %311 = vmatpush1.msra.mxu0 0.0
    %312 = vmatprep.subr.mxu0 0.0
    %313 = vmatpush1.msra.mxu0 0.0
    %314 = vmatprep.subr.mxu0 0.0
    %315 = vmatpush1.msra.mxu0 0.0
    %316 = vmatprep.subr.mxu0 0.0
    %317 = vmatpush1.msra.mxu0 0.0
    %318 = vmatprep.subr.mxu0 0.0
    %319 = vmatpush1.msra.mxu0 0.0
    %320 = vmatprep.subr.mxu0 0.0
    %321 = vmatpush1.msra.mxu0 0.0
    %322 = vmatprep.subr.mxu0 0.0
    %323 = vmatpush1.msra.mxu0 0.0
    %324 = vmatprep.subr.mxu0 0.0
    %325 = vmatpush1.msra.mxu0 0.0
    %326 = vmatprep.subr.mxu0 0.0
    %327 = vmatpush1.msra.mxu0 0.0
    %328 = vmatprep.subr.mxu0 0.0
    %329 = vmatpush1.msra.mxu0 0.0
    %330 = vmatprep.subr.mxu0 0.0
    %331 = vmatpush1.msra.mxu0 0.0
    %332 = vmatprep.subr.mxu0 0.0
    %333 = vmatpush1.msra.mxu0 0.0
    %334 = vmatprep.subr.mxu0 0.0
    %335 = vmatpush1.msra.mxu0 0.0
    %336 = vmatprep.subr.mxu0 0.0
    %337 = vmatpush1.msra.mxu0 0.0
    %338 = vmatprep.subr.mxu0 0.0
    %339 = vmatpush1.msra.mxu0 0.0
    %340 = vmatprep.subr.mxu0 0.0
    %341 = vmatpush1.msra.mxu0 0.0
    %342 = vmatprep.subr.mxu0 0.0
    %343 = vmatpush1.msra.mxu0 0.0
    %344 = vmatprep.subr.mxu0 0.0
    %345 = vmatpush1.msra.mxu0 0.0
    %346 = vmatprep.subr.mxu0 0.0
    %347 = vmatpush1.msra.mxu0 0.0
    %348 = vmatprep.subr.mxu0 0.0
    %349 = vmatpush1.msra.mxu0 0.0
    %350 = vmatprep.mubr.f32.mxu0 0.0
    %351 = vmatmul.mubr.f32.gmra.mrb[0].mxu0 %v150
    %v352 = vpop.f32.mrb[0].mxu0
    %v353 = vadd.f32 %v119, %v352
    %v354 = vpop.f32.mrb[0].mxu0
    %v355 = vadd.f32 %v123, %v354
    %356 = vmatprep.mubr.f32.mxu0 0.0
    %357 = vmatmul.mubr.f32.gmra.mrb[0].mxu0 %v153
    %v358 = vpop.f32.mrb[0].mxu0
    %v359 = vadd.f32 %v119, %v358
    %v360 = vpop.f32.mrb[0].mxu0
    %v361 = vadd.f32 %v123, %v360
    %362 = vmatprep.mubr.f32.mxu0 0.0
    %363 = vmatmul.mubr.f32.gmra.mrb[0].mxu0 %v156
    %v364 = vpop.f32.mrb[0].mxu0
    %v365 = vadd.f32 %v119, %v364
    %v366 = vpop.f32.mrb[0].mxu0
    %v367 = vadd.f32 %v123, %v366
    %368 = vmatprep.mubr.f32.mxu0 0.0
    %369 = vmatmul.mubr.f32.gmra.mrb[0].mxu0 %v159
    %v370 = vpop.f32.mrb[0].mxu0
    %v371 = vadd.f32 %v119, %v370
    %v372 = vpop.f32.mrb[0].mxu0
    %v373 = vadd.f32 %v123, %v372
    %374 = vmatprep.mubr.f32.mxu0 0.0
    %375 = vmatmul.mubr.f32.gmra.mrb[0].mxu0 %v162
    %v376 = vpop.f32.mrb[0].mxu0
    %v377 = vadd.f32 %v119, %v376
    %v378 = vpop.f32.mrb[0].mxu0
    %v379 = vadd.f32 %v123, %v378
    %380 = vmatprep.mubr.f32.mxu0 0.0
    %381 = vmatmul.mubr.f32.gmra.mrb[0].mxu0 %v165
    %v382 = vpop.f32.mrb[0].mxu0
    %v383 = vadd.f32 %v119, %v382
    %v384 = vpop.f32.mrb[0].mxu0
    %v385 = vadd.f32 %v123, %v384
    %386 = vmatprep.mubr.f32.mxu0 0.0
    %387 = vmatmul.mubr.f32.gmra.mrb[0].mxu0 %v168
    %v388 = vpop.f32.mrb[0].mxu0
    %v389 = vadd.f32 %v119, %v388
    %v390 = vpop.f32.mrb[0].mxu0
    %v391 = vadd.f32 %v123, %v390
    %392 = vmatprep.mubr.f32.mxu0 0.0
    %393 = vmatmul.mubr.f32.gmra.mrb[0].mxu0 %v171
    %v394 = vpop.f32.mrb[0].mxu0
    %v395 = vadd.f32 %v119, %v394
    %v396 = vpop.f32.mrb[0].mxu0
    %v397 = vadd.f32 %v123, %v396
    %398 = vdwg.mxu0
    %399 = vmatprep.subr.mxu0 %v95
    %400 = vmatpush1.msra.mxu0 %v94
    %401 = vmatprep.subr.mxu0 %v103
    %402 = vmatpush1.msra.mxu0 %v102
    %403 = vmatprep.subr.mxu0 0.0
    %404 = vmatpush1.msra.mxu0 0.0
    %405 = vmatprep.subr.mxu0 0.0
    %406 = vmatpush1.msra.mxu0 0.0
    %407 = vmatprep.subr.mxu0 0.0
    %408 = vmatpush1.msra.mxu0 0.0
    %409 = vmatprep.subr.mxu0 0.0
    %410 = vmatpush1.msra.mxu0 0.0
    %411 = vmatprep.subr.mxu0 0.0
    %412 = vmatpush1.msra.mxu0 0.0
    %413 = vmatprep.subr.mxu0 0.0
    %414 = vmatpush1.msra.mxu0 0.0
    %415 = vmatprep.subr.mxu0 0.0
    %416 = vmatpush1.msra.mxu0 0.0
    %417 = vmatprep.subr.mxu0 0.0
    %418 = vmatpush1.msra.mxu0 0.0
    %419 = vmatprep.subr.mxu0 0.0
    %420 = vmatpush1.msra.mxu0 0.0
    %421 = vmatprep.subr.mxu0 0.0
    %422 = vmatpush1.msra.mxu0 0.0
    %423 = vmatprep.subr.mxu0 0.0
    %424 = vmatpush1.msra.mxu0 0.0
    %425 = vmatprep.subr.mxu0 0.0
    %426 = vmatpush1.msra.mxu0 0.0
    %427 = vmatprep.subr.mxu0 0.0
    %428 = vmatpush1.msra.mxu0 0.0
    %429 = vmatprep.subr.mxu0 0.0
    %430 = vmatpush1.msra.mxu0 0.0
    %431 = vmatprep.subr.mxu0 0.0
    %432 = vmatpush1.msra.mxu0 0.0
    %433 = vmatprep.subr.mxu0 0.0
    %434 = vmatpush1.msra.mxu0 0.0
    %435 = vmatprep.subr.mxu0 0.0
    %436 = vmatpush1.msra.mxu0 0.0
    %437 = vmatprep.subr.mxu0 0.0
    %438 = vmatpush1.msra.mxu0 0.0
    %439 = vmatprep.subr.mxu0 0.0
    %440 = vmatpush1.msra.mxu0 0.0
    %441 = vmatprep.subr.mxu0 0.0
    %442 = vmatpush1.msra.mxu0 0.0
    %443 = vmatprep.subr.mxu0 0.0
    %444 = vmatpush1.msra.mxu0 0.0
    %445 = vmatprep.subr.mxu0 0.0
    %446 = vmatpush1.msra.mxu0 0.0
    %447 = vmatprep.subr.mxu0 0.0
    %448 = vmatpush1.msra.mxu0 0.0
    %449 = vmatprep.subr.mxu0 0.0
    %450 = vmatpush1.msra.mxu0 0.0
    %451 = vmatprep.subr.mxu0 0.0
    %452 = vmatpush1.msra.mxu0 0.0
    %453 = vmatprep.subr.mxu0 0.0
    %454 = vmatpush1.msra.mxu0 0.0
    %455 = vmatprep.subr.mxu0 0.0
    %456 = vmatpush1.msra.mxu0 0.0
    %457 = vmatprep.subr.mxu0 0.0
    %458 = vmatpush1.msra.mxu0 0.0
    %459 = vmatprep.subr.mxu0 0.0
    %460 = vmatpush1.msra.mxu0 0.0
    %461 = vmatprep.subr.mxu0 0.0
    %462 = vmatpush1.msra.mxu0 0.0
    %463 = vmatprep.mubr.f32.mxu0 0.0
    %464 = vmatmul.mubr.f32.gmra.mrb[0].mxu0 %v150
    %v465 = vpop.f32.mrb[0].mxu0
    %v466 = vadd.f32 %v127, %v465
    %v467 = vpop.f32.mrb[0].mxu0
    %v468 = vadd.f32 %v131, %v467
    %469 = vmatprep.mubr.f32.mxu0 0.0
    %470 = vmatmul.mubr.f32.gmra.mrb[0].mxu0 %v153
    %v471 = vpop.f32.mrb[0].mxu0
    %v472 = vadd.f32 %v127, %v471
    %v473 = vpop.f32.mrb[0].mxu0
    %v474 = vadd.f32 %v131, %v473
    %475 = vmatprep.mubr.f32.mxu0 0.0
    %476 = vmatmul.mubr.f32.gmra.mrb[0].mxu0 %v156
    %v477 = vpop.f32.mrb[0].mxu0
    %v478 = vadd.f32 %v127, %v477
    %v479 = vpop.f32.mrb[0].mxu0
    %v480 = vadd.f32 %v131, %v479
    %481 = vmatprep.mubr.f32.mxu0 0.0
    %482 = vmatmul.mubr.f32.gmra.mrb[0].mxu0 %v159
    %v483 = vpop.f32.mrb[0].mxu0
    %v484 = vadd.f32 %v127, %v483
    %v485 = vpop.f32.mrb[0].mxu0
    %v486 = vadd.f32 %v131, %v485
    %487 = vmatprep.mubr.f32.mxu0 0.0
    %488 = vmatmul.mubr.f32.gmra.mrb[0].mxu0 %v162
    %v489 = vpop.f32.mrb[0].mxu0
    %v490 = vadd.f32 %v127, %v489
    %v491 = vpop.f32.mrb[0].mxu0
    %v492 = vadd.f32 %v131, %v491
    %493 = vmatprep.mubr.f32.mxu0 0.0
    %494 = vmatmul.mubr.f32.gmra.mrb[0].mxu0 %v165
    %v495 = vpop.f32.mrb[0].mxu0
    %v496 = vadd.f32 %v127, %v495
    %v497 = vpop.f32.mrb[0].mxu0
    %v498 = vadd.f32 %v131, %v497
    %499 = vmatprep.mubr.f32.mxu0 0.0
    %500 = vmatmul.mubr.f32.gmra.mrb[0].mxu0 %v168
    %v501 = vpop.f32.mrb[0].mxu0
    %v502 = vadd.f32 %v127, %v501
    %v503 = vpop.f32.mrb[0].mxu0
    %v504 = vadd.f32 %v131, %v503
    %505 = vmatprep.mubr.f32.mxu0 0.0
    %506 = vmatmul.mubr.f32.gmra.mrb[0].mxu0 %v171
    %v507 = vpop.f32.mrb[0].mxu0
    %v508 = vadd.f32 %v127, %v507
    %v509 = vpop.f32.mrb[0].mxu0
    %v510 = vadd.f32 %v131, %v509
    %511 = vdwg.mxu0
    %512 = vmatprep.subr.mxu0 %v97
    %513 = vmatpush1.msra.mxu0 %v96
    %514 = vmatprep.subr.mxu0 %v105
    %515 = vmatpush1.msra.mxu0 %v104
    %516 = vmatprep.subr.mxu0 0.0
    %517 = vmatpush1.msra.mxu0 0.0
    %518 = vmatprep.subr.mxu0 0.0
    %519 = vmatpush1.msra.mxu0 0.0
    %520 = vmatprep.subr.mxu0 0.0
    %521 = vmatpush1.msra.mxu0 0.0
    %522 = vmatprep.subr.mxu0 0.0
    %523 = vmatpush1.msra.mxu0 0.0
    %524 = vmatprep.subr.mxu0 0.0
    %525 = vmatpush1.msra.mxu0 0.0
    %526 = vmatprep.subr.mxu0 0.0
    %527 = vmatpush1.msra.mxu0 0.0
    %528 = vmatprep.subr.mxu0 0.0
    %529 = vmatpush1.msra.mxu0 0.0
    %530 = vmatprep.subr.mxu0 0.0
    %531 = vmatpush1.msra.mxu0 0.0
    %532 = vmatprep.subr.mxu0 0.0
    %533 = vmatpush1.msra.mxu0 0.0
    %534 = vmatprep.subr.mxu0 0.0
    %535 = vmatpush1.msra.mxu0 0.0
    %536 = vmatprep.subr.mxu0 0.0
    %537 = vmatpush1.msra.mxu0 0.0
    %538 = vmatprep.subr.mxu0 0.0
    %539 = vmatpush1.msra.mxu0 0.0
    %540 = vmatprep.subr.mxu0 0.0
    %541 = vmatpush1.msra.mxu0 0.0
    %542 = vmatprep.subr.mxu0 0.0
    %543 = vmatpush1.msra.mxu0 0.0
    %544 = vmatprep.subr.mxu0 0.0
    %545 = vmatpush1.msra.mxu0 0.0
    %546 = vmatprep.subr.mxu0 0.0
    %547 = vmatpush1.msra.mxu0 0.0
    %548 = vmatprep.subr.mxu0 0.0
    %549 = vmatpush1.msra.mxu0 0.0
    %550 = vmatprep.subr.mxu0 0.0
    %551 = vmatpush1.msra.mxu0 0.0
    %552 = vmatprep.subr.mxu0 0.0
    %553 = vmatpush1.msra.mxu0 0.0
    %554 = vmatprep.subr.mxu0 0.0
    %555 = vmatpush1.msra.mxu0 0.0
    %556 = vmatprep.subr.mxu0 0.0
    %557 = vmatpush1.msra.mxu0 0.0
    %558 = vmatprep.subr.mxu0 0.0
    %559 = vmatpush1.msra.mxu0 0.0
    %560 = vmatprep.subr.mxu0 0.0
    %561 = vmatpush1.msra.mxu0 0.0
    %562 = vmatprep.subr.mxu0 0.0
    %563 = vmatpush1.msra.mxu0 0.0
    %564 = vmatprep.subr.mxu0 0.0
    %565 = vmatpush1.msra.mxu0 0.0
    %566 = vmatprep.subr.mxu0 0.0
    %567 = vmatpush1.msra.mxu0 0.0
    %568 = vmatprep.subr.mxu0 0.0
    %569 = vmatpush1.msra.mxu0 0.0
    %570 = vmatprep.subr.mxu0 0.0
    %571 = vmatpush1.msra.mxu0 0.0
    %572 = vmatprep.subr.mxu0 0.0
    %573 = vmatpush1.msra.mxu0 0.0
    %574 = vmatprep.subr.mxu0 0.0
    %575 = vmatpush1.msra.mxu0 0.0
    %576 = vmatprep.mubr.f32.mxu0 0.0
    %577 = vmatmul.mubr.f32.gmra.mrb[0].mxu0 %v150
    %v578 = vpop.f32.mrb[0].mxu0
    %v579 = vadd.f32 %v135, %v578
    %v580 = vpop.f32.mrb[0].mxu0
    %v581 = vadd.f32 %v139, %v580
    %582 = vmatprep.mubr.f32.mxu0 0.0
    %583 = vmatmul.mubr.f32.gmra.mrb[0].mxu0 %v153
    %v584 = vpop.f32.mrb[0].mxu0
    %v585 = vadd.f32 %v135, %v584
    %v586 = vpop.f32.mrb[0].mxu0
    %v587 = vadd.f32 %v139, %v586
    %588 = vmatprep.mubr.f32.mxu0 0.0
    %589 = vmatmul.mubr.f32.gmra.mrb[0].mxu0 %v156
    %v590 = vpop.f32.mrb[0].mxu0
    %v591 = vadd.f32 %v135, %v590
    %v592 = vpop.f32.mrb[0].mxu0
    %v593 = vadd.f32 %v139, %v592
    %594 = vmatprep.mubr.f32.mxu0 0.0
    %595 = vmatmul.mubr.f32.gmra.mrb[0].mxu0 %v159
    %v596 = vpop.f32.mrb[0].mxu0
    %v597 = vadd.f32 %v135, %v596
    %v598 = vpop.f32.mrb[0].mxu0
    %v599 = vadd.f32 %v139, %v598
    %600 = vmatprep.mubr.f32.mxu0 0.0
    %601 = vmatmul.mubr.f32.gmra.mrb[0].mxu0 %v162
    %v602 = vpop.f32.mrb[0].mxu0
    %v603 = vadd.f32 %v135, %v602
    %v604 = vpop.f32.mrb[0].mxu0
    %v605 = vadd.f32 %v139, %v604
    %606 = vmatprep.mubr.f32.mxu0 0.0
    %607 = vmatmul.mubr.f32.gmra.mrb[0].mxu0 %v165
    %v608 = vpop.f32.mrb[0].mxu0
    %v609 = vadd.f32 %v135, %v608
    %v610 = vpop.f32.mrb[0].mxu0
    %v611 = vadd.f32 %v139, %v610
    %612 = vmatprep.mubr.f32.mxu0 0.0
    %613 = vmatmul.mubr.f32.gmra.mrb[0].mxu0 %v168
    %v614 = vpop.f32.mrb[0].mxu0
    %v615 = vadd.f32 %v135, %v614
    %v616 = vpop.f32.mrb[0].mxu0
    %v617 = vadd.f32 %v139, %v616
    %618 = vmatprep.mubr.f32.mxu0 0.0
    %619 = vmatmul.mubr.f32.gmra.mrb[0].mxu0 %v171
    %v620 = vpop.f32.mrb[0].mxu0
    %v621 = vadd.f32 %v135, %v620
    %v622 = vpop.f32.mrb[0].mxu0
    %v623 = vadd.f32 %v139, %v622
    %624 = vdwg.mxu0
    %625 = vst [vmem:[#allocation2] sm:$0xff] %v240
    %626 = vst [vmem:[#allocation2 + $0x8] sm:$0xff] %v242
    %627 = vst [vmem:[#allocation2 + $0x10] sm:$0xff] %v353
    %628 = vst [vmem:[#allocation2 + $0x18] sm:$0xff] %v355
    %629 = vst [vmem:[#allocation2 + $0x20] sm:$0xff] %v466
    %630 = vst [vmem:[#allocation2 + $0x28] sm:$0xff] %v468
    %631 = vst [vmem:[#allocation2 + $0x30] sm:$0xff] %v579
    %632 = vst [vmem:[#allocation2 + $0x38] sm:$0xff] %v581
    %633 = vst [vmem:[#allocation2 + $0x40] sm:$0xff] %v246
    %634 = vst [vmem:[#allocation2 + $0x48] sm:$0xff] %v248
    %635 = vst [vmem:[#allocation2 + $0x50] sm:$0xff] %v359
    %636 = vst [vmem:[#allocation2 + $0x58] sm:$0xff] %v361
    %637 = vst [vmem:[#allocation2 + $0x60] sm:$0xff] %v472
    %638 = vst [vmem:[#allocation2 + $0x68] sm:$0xff] %v474
    %639 = vst [vmem:[#allocation2 + $0x70] sm:$0xff] %v585
    %640 = vst [vmem:[#allocation2 + $0x78] sm:$0xff] %v587
    %641 = vst [vmem:[#allocation2 + $0x80] sm:$0xff] %v252
    %642 = vst [vmem:[#allocation2 + $0x88] sm:$0xff] %v254
    %643 = vst [vmem:[#allocation2 + $0x90] sm:$0xff] %v365
    %644 = vst [vmem:[#allocation2 + $0x98] sm:$0xff] %v367
    %645 = vst [vmem:[#allocation2 + $0xa0] sm:$0xff] %v478
    %646 = vst [vmem:[#allocation2 + $0xa8] sm:$0xff] %v480
    %647 = vst [vmem:[#allocation2 + $0xb0] sm:$0xff] %v591
    %648 = vst [vmem:[#allocation2 + $0xb8] sm:$0xff] %v593
    %649 = vst [vmem:[#allocation2 + $0xc0] sm:$0xff] %v258
    %650 = vst [vmem:[#allocation2 + $0xc8] sm:$0xff] %v260
    %651 = vst [vmem:[#allocation2 + $0xd0] sm:$0xff] %v371
    %652 = vst [vmem:[#allocation2 + $0xd8] sm:$0xff] %v373
    %653 = vst [vmem:[#allocation2 + $0xe0] sm:$0xff] %v484
    %654 = vst [vmem:[#allocation2 + $0xe8] sm:$0xff] %v486
    %655 = vst [vmem:[#allocation2 + $0xf0] sm:$0xff] %v597
    %656 = vst [vmem:[#allocation2 + $0xf8] sm:$0xff] %v599
    %657 = vst [vmem:[#allocation2 + $0x100] sm:$0xff] %v264
    %658 = vst [vmem:[#allocation2 + $0x108] sm:$0xff] %v266
    %659 = vst [vmem:[#allocation2 + $0x110] sm:$0xff] %v377
    %660 = vst [vmem:[#allocation2 + $0x118] sm:$0xff] %v379
    %661 = vst [vmem:[#allocation2 + $0x120] sm:$0xff] %v490
    %662 = vst [vmem:[#allocation2 + $0x128] sm:$0xff] %v492
    %663 = vst [vmem:[#allocation2 + $0x130] sm:$0xff] %v603
    %664 = vst [vmem:[#allocation2 + $0x138] sm:$0xff] %v605
    %665 = vst [vmem:[#allocation2 + $0x140] sm:$0xff] %v270
    %666 = vst [vmem:[#allocation2 + $0x148] sm:$0xff] %v272
    %667 = vst [vmem:[#allocation2 + $0x150] sm:$0xff] %v383
    %668 = vst [vmem:[#allocation2 + $0x158] sm:$0xff] %v385
    %669 = vst [vmem:[#allocation2 + $0x160] sm:$0xff] %v496
    %670 = vst [vmem:[#allocation2 + $0x168] sm:$0xff] %v498
    %671 = vst [vmem:[#allocation2 + $0x170] sm:$0xff] %v609
    %672 = vst [vmem:[#allocation2 + $0x178] sm:$0xff] %v611
    %673 = vst [vmem:[#allocation2 + $0x180] sm:$0xff] %v276
    %674 = vst [vmem:[#allocation2 + $0x188] sm:$0xff] %v278
    %675 = vst [vmem:[#allocation2 + $0x190] sm:$0xff] %v389
    %676 = vst [vmem:[#allocation2 + $0x198] sm:$0xff] %v391
    %677 = vst [vmem:[#allocation2 + $0x1a0] sm:$0xff] %v502
    %678 = vst [vmem:[#allocation2 + $0x1a8] sm:$0xff] %v504
    %679 = vst [vmem:[#allocation2 + $0x1b0] sm:$0xff] %v615
    %680 = vst [vmem:[#allocation2 + $0x1b8] sm:$0xff] %v617
    %681 = vst [vmem:[#allocation2 + $0x1c0] sm:$0xff] %v282
    %682 = vst [vmem:[#allocation2 + $0x1c8] sm:$0xff] %v284
    %683 = vst [vmem:[#allocation2 + $0x1d0] sm:$0xff] %v395
    %684 = vst [vmem:[#allocation2 + $0x1d8] sm:$0xff] %v397
    %685 = vst [vmem:[#allocation2 + $0x1e0] sm:$0xff] %v508
    %686 = vst [vmem:[#allocation2 + $0x1e8] sm:$0xff] %v510
    %687 = vst [vmem:[#allocation2 + $0x1f0] sm:$0xff] %v621
    %688 = vst [vmem:[#allocation2 + $0x1f8] sm:$0xff] %v623
    %v689 = vld [vmem:[#allocation7] sm:$0xff]
    %v690 = vld [vmem:[#allocation7 + $0x8] sm:$0xff]
    %v691 = vld [vmem:[#allocation7 + $0x10] sm:$0xff]
    %v692 = vld [vmem:[#allocation7 + $0x18] sm:$0xff]
    %v693 = vld [vmem:[#allocation7 + $0x20] sm:$0xff]
    %v694 = vld [vmem:[#allocation7 + $0x28] sm:$0xff]
    %v695 = vld [vmem:[#allocation7 + $0x30] sm:$0xff]
    %v696 = vld [vmem:[#allocation7 + $0x38] sm:$0xff]
    %v697 = vld [vmem:[#allocation7 + $0x40] sm:$0xff]
    %v698 = vld [vmem:[#allocation7 + $0x48] sm:$0xff]
    %v699 = vld [vmem:[#allocation7 + $0x50] sm:$0xff]
    %v700 = vld [vmem:[#allocation7 + $0x58] sm:$0xff]
    %v701 = vld [vmem:[#allocation7 + $0x60] sm:$0xff]
    %v702 = vld [vmem:[#allocation7 + $0x68] sm:$0xff]
    %v703 = vld [vmem:[#allocation7 + $0x70] sm:$0xff]
    %v704 = vld [vmem:[#allocation7 + $0x78] sm:$0xff]
    %v705 = vld [vmem:[#allocation7 + $0x80] sm:$0xff]
    %v706 = vld [vmem:[#allocation7 + $0x88] sm:$0xff]
    %v707 = vld [vmem:[#allocation7 + $0x90] sm:$0xff]
    %v708 = vld [vmem:[#allocation7 + $0x98] sm:$0xff]
    %v709 = vld [vmem:[#allocation7 + $0xa0] sm:$0xff]
    %v710 = vld [vmem:[#allocation7 + $0xa8] sm:$0xff]
    %v711 = vld [vmem:[#allocation7 + $0xb0] sm:$0xff]
    %v712 = vld [vmem:[#allocation7 + $0xb8] sm:$0xff]
    %v713 = vld [vmem:[#allocation7 + $0xc0] sm:$0xff]
    %v714 = vld [vmem:[#allocation7 + $0xc8] sm:$0xff]
    %v715 = vld [vmem:[#allocation7 + $0xd0] sm:$0xff]
    %v716 = vld [vmem:[#allocation7 + $0xd8] sm:$0xff]
    %v717 = vld [vmem:[#allocation7 + $0xe0] sm:$0xff]
    %v718 = vld [vmem:[#allocation7 + $0xe8] sm:$0xff]
    %v719 = vld [vmem:[#allocation7 + $0xf0] sm:$0xff]
    %v720 = vld [vmem:[#allocation7 + $0xf8] sm:$0xff]
    %v721 = vld [vmem:[#allocation7 + $0x100] sm:$0xff]
    %v722 = vld [vmem:[#allocation7 + $0x108] sm:$0xff]
    %v723 = vld [vmem:[#allocation7 + $0x110] sm:$0xff]
    %v724 = vld [vmem:[#allocation7 + $0x118] sm:$0xff]
    %v725 = vld [vmem:[#allocation7 + $0x120] sm:$0xff]
    %v726 = vld [vmem:[#allocation7 + $0x128] sm:$0xff]
    %v727 = vld [vmem:[#allocation7 + $0x130] sm:$0xff]
    %v728 = vld [vmem:[#allocation7 + $0x138] sm:$0xff]
    %v729 = vld [vmem:[#allocation7 + $0x140] sm:$0xff]
    %v730 = vld [vmem:[#allocation7 + $0x148] sm:$0xff]
    %v731 = vld [vmem:[#allocation7 + $0x150] sm:$0xff]
    %v732 = vld [vmem:[#allocation7 + $0x158] sm:$0xff]
    %v733 = vld [vmem:[#allocation7 + $0x160] sm:$0xff]
    %v734 = vld [vmem:[#allocation7 + $0x168] sm:$0xff]
    %v735 = vld [vmem:[#allocation7 + $0x170] sm:$0xff]
    %v736 = vld [vmem:[#allocation7 + $0x178] sm:$0xff]
    %v737 = vld [vmem:[#allocation7 + $0x180] sm:$0xff]
    %v738 = vld [vmem:[#allocation7 + $0x188] sm:$0xff]
    %v739 = vld [vmem:[#allocation7 + $0x190] sm:$0xff]
    %v740 = vld [vmem:[#allocation7 + $0x198] sm:$0xff]
    %v741 = vld [vmem:[#allocation7 + $0x1a0] sm:$0xff]
    %v742 = vld [vmem:[#allocation7 + $0x1a8] sm:$0xff]
    %v743 = vld [vmem:[#allocation7 + $0x1b0] sm:$0xff]
    %v744 = vld [vmem:[#allocation7 + $0x1b8] sm:$0xff]
    %v745 = vld [vmem:[#allocation7 + $0x1c0] sm:$0xff]
    %v746 = vld [vmem:[#allocation7 + $0x1c8] sm:$0xff]
    %v747 = vld [vmem:[#allocation7 + $0x1d0] sm:$0xff]
    %v748 = vld [vmem:[#allocation7 + $0x1d8] sm:$0xff]
    %v749 = vld [vmem:[#allocation7 + $0x1e0] sm:$0xff]
    %v750 = vld [vmem:[#allocation7 + $0x1e8] sm:$0xff]
    %v751 = vld [vmem:[#allocation7 + $0x1f0] sm:$0xff]
    %v752 = vld [vmem:[#allocation7 + $0x1f8] sm:$0xff]
    %v753 = vld [vmem:[#allocation9] sm:$0xff]
    %v754 = vld [vmem:[#allocation9 + $0x8] sm:$0xff]
    %v755 = vld [vmem:[#allocation9 + $0x10] sm:$0xff]
    %v756 = vld [vmem:[#allocation9 + $0x18] sm:$0xff]
    %v757 = vld [vmem:[#allocation9 + $0x20] sm:$0xff]
    %v758 = vld [vmem:[#allocation9 + $0x28] sm:$0xff]
    %v759 = vld [vmem:[#allocation9 + $0x30] sm:$0xff]
    %v760 = vld [vmem:[#allocation9 + $0x38] sm:$0xff]
    %v761 = vld [vmem:[#allocation9 + $0x40] sm:$0xff]
    %v762 = vld [vmem:[#allocation9 + $0x48] sm:$0xff]
    %v763 = vld [vmem:[#allocation9 + $0x50] sm:$0xff]
    %v764 = vld [vmem:[#allocation9 + $0x58] sm:$0xff]
    %v765 = vld [vmem:[#allocation9 + $0x60] sm:$0xff]
    %v766 = vld [vmem:[#allocation9 + $0x68] sm:$0xff]
    %v767 = vld [vmem:[#allocation9 + $0x70] sm:$0xff]
    %v768 = vld [vmem:[#allocation9 + $0x78] sm:$0xff]
    %v769 = vld [vmem:[#allocation9 + $0x80] sm:$0xff]
    %v770 = vld [vmem:[#allocation9 + $0x88] sm:$0xff]
    %v771 = vld [vmem:[#allocation9 + $0x90] sm:$0xff]
    %v772 = vld [vmem:[#allocation9 + $0x98] sm:$0xff]
    %v773 = vld [vmem:[#allocation9 + $0xa0] sm:$0xff]
    %v774 = vld [vmem:[#allocation9 + $0xa8] sm:$0xff]
    %v775 = vld [vmem:[#allocation9 + $0xb0] sm:$0xff]
    %v776 = vld [vmem:[#allocation9 + $0xb8] sm:$0xff]
    %v777 = vld [vmem:[#allocation9 + $0xc0] sm:$0xff]
    %v778 = vld [vmem:[#allocation9 + $0xc8] sm:$0xff]
    %v779 = vld [vmem:[#allocation9 + $0xd0] sm:$0xff]
    %v780 = vld [vmem:[#allocation9 + $0xd8] sm:$0xff]
    %v781 = vld [vmem:[#allocation9 + $0xe0] sm:$0xff]
    %v782 = vld [vmem:[#allocation9 + $0xe8] sm:$0xff]
    %v783 = vld [vmem:[#allocation9 + $0xf0] sm:$0xff]
    %v784 = vld [vmem:[#allocation9 + $0xf8] sm:$0xff]
    %v785 = vld [vmem:[#allocation9 + $0x100] sm:$0xff]
    %v786 = vld [vmem:[#allocation9 + $0x108] sm:$0xff]
    %v787 = vld [vmem:[#allocation9 + $0x110] sm:$0xff]
    %v788 = vld [vmem:[#allocation9 + $0x118] sm:$0xff]
    %v789 = vld [vmem:[#allocation9 + $0x120] sm:$0xff]
    %v790 = vld [vmem:[#allocation9 + $0x128] sm:$0xff]
    %v791 = vld [vmem:[#allocation9 + $0x130] sm:$0xff]
    %v792 = vld [vmem:[#allocation9 + $0x138] sm:$0xff]
    %v793 = vld [vmem:[#allocation9 + $0x140] sm:$0xff]
    %v794 = vld [vmem:[#allocation9 + $0x148] sm:$0xff]
    %v795 = vld [vmem:[#allocation9 + $0x150] sm:$0xff]
    %v796 = vld [vmem:[#allocation9 + $0x158] sm:$0xff]
    %v797 = vld [vmem:[#allocation9 + $0x160] sm:$0xff]
    %v798 = vld [vmem:[#allocation9 + $0x168] sm:$0xff]
    %v799 = vld [vmem:[#allocation9 + $0x170] sm:$0xff]
    %v800 = vld [vmem:[#allocation9 + $0x178] sm:$0xff]
    %v801 = vld [vmem:[#allocation9 + $0x180] sm:$0xff]
    %v802 = vld [vmem:[#allocation9 + $0x188] sm:$0xff]
    %v803 = vld [vmem:[#allocation9 + $0x190] sm:$0xff]
    %v804 = vld [vmem:[#allocation9 + $0x198] sm:$0xff]
    %v805 = vld [vmem:[#allocation9 + $0x1a0] sm:$0xff]
    %v806 = vld [vmem:[#allocation9 + $0x1a8] sm:$0xff]
    %v807 = vld [vmem:[#allocation9 + $0x1b0] sm:$0xff]
    %v808 = vld [vmem:[#allocation9 + $0x1b8] sm:$0xff]
    %v809 = vld [vmem:[#allocation9 + $0x1c0] sm:$0xff]
    %v810 = vld [vmem:[#allocation9 + $0x1c8] sm:$0xff]
    %v811 = vld [vmem:[#allocation9 + $0x1d0] sm:$0xff]
    %v812 = vld [vmem:[#allocation9 + $0x1d8] sm:$0xff]
    %v813 = vld [vmem:[#allocation9 + $0x1e0] sm:$0xff]
    %v814 = vld [vmem:[#allocation9 + $0x1e8] sm:$0xff]
    %v815 = vld [vmem:[#allocation9 + $0x1f0] sm:$0xff]
    %v816 = vld [vmem:[#allocation9 + $0x1f8] sm:$0xff]
    %s817 = smul.u32 0, 8
    %s818 = smul.addr %s817, 8
    %s819 = scalar_lea.vmem [#allocation2], %s818
    %v820 = vld [vmem:[%s819] sm:$0xff]
    %v821 = vld [vmem:[%s819 + $0x8] sm:$0xff]
    %v822 = vld [vmem:[%s819 + $0x10] sm:$0xff]
    %v823 = vld [vmem:[%s819 + $0x18] sm:$0xff]
    %s824 = smul.u32 7, 8
    %s825 = smul.addr %s824, 8
    %s826 = scalar_lea.vmem [#allocation2], %s825
    %v827 = vld [vmem:[%s826 + $0x20] sm:$0xff]
    %v828 = vld [vmem:[%s826 + $0x28] sm:$0xff]
    %v829 = vld [vmem:[%s826 + $0x30] sm:$0xff]
    %v830 = vld [vmem:[%s826 + $0x38] sm:$0xff]
    %831 = vmatprep.subr.mxu0 %v690
    %832 = vmatpush1.msra.mxu0 %v689
    %833 = vmatprep.subr.mxu0 %v694
    %834 = vmatpush1.msra.mxu0 %v693
    %835 = vmatprep.subr.mxu0 %v698
    %836 = vmatpush1.msra.mxu0 %v697
    %837 = vmatprep.subr.mxu0 %v702
    %838 = vmatpush1.msra.mxu0 %v701
    %839 = vmatprep.subr.mxu0 %v706
    %840 = vmatpush1.msra.mxu0 %v705
    %841 = vmatprep.subr.mxu0 %v710
    %842 = vmatpush1.msra.mxu0 %v709
    %843 = vmatprep.subr.mxu0 %v714
    %844 = vmatpush1.msra.mxu0 %v713
    %845 = vmatprep.subr.mxu0 %v718
    %846 = vmatpush1.msra.mxu0 %v717
    %847 = vmatprep.subr.mxu0 %v722
    %848 = vmatpush1.msra.mxu0 %v721
    %849 = vmatprep.subr.mxu0 %v726
    %850 = vmatpush1.msra.mxu0 %v725
    %851 = vmatprep.subr.mxu0 %v730
    %852 = vmatpush1.msra.mxu0 %v729
    %853 = vmatprep.subr.mxu0 %v734
    %854 = vmatpush1.msra.mxu0 %v733
    %855 = vmatprep.subr.mxu0 %v738
    %856 = vmatpush1.msra.mxu0 %v737
    %857 = vmatprep.subr.mxu0 %v742
    %858 = vmatpush1.msra.mxu0 %v741
    %859 = vmatprep.subr.mxu0 %v746
    %860 = vmatpush1.msra.mxu0 %v745
    %861 = vmatprep.subr.mxu0 %v750
    %862 = vmatpush1.msra.mxu0 %v749
    %863 = vmatprep.subr.mxu0 0.0
    %864 = vmatpush1.msra.mxu0 0.0
    %865 = vmatprep.subr.mxu0 0.0
    %866 = vmatpush1.msra.mxu0 0.0
    %867 = vmatprep.subr.mxu0 0.0
    %868 = vmatpush1.msra.mxu0 0.0
    %869 = vmatprep.subr.mxu0 0.0
    %870 = vmatpush1.msra.mxu0 0.0
    %871 = vmatprep.subr.mxu0 0.0
    %872 = vmatpush1.msra.mxu0 0.0
    %873 = vmatprep.subr.mxu0 0.0
    %874 = vmatpush1.msra.mxu0 0.0
    %875 = vmatprep.subr.mxu0 0.0
    %876 = vmatpush1.msra.mxu0 0.0
    %877 = vmatprep.subr.mxu0 0.0
    %878 = vmatpush1.msra.mxu0 0.0
    %879 = vmatprep.subr.mxu0 0.0
    %880 = vmatpush1.msra.mxu0 0.0
    %881 = vmatprep.subr.mxu0 0.0
    %882 = vmatpush1.msra.mxu0 0.0
    %883 = vmatprep.subr.mxu0 0.0
    %884 = vmatpush1.msra.mxu0 0.0
    %885 = vmatprep.subr.mxu0 0.0
    %886 = vmatpush1.msra.mxu0 0.0
    %887 = vmatprep.subr.mxu0 0.0
    %888 = vmatpush1.msra.mxu0 0.0
    %889 = vmatprep.subr.mxu0 0.0
    %890 = vmatpush1.msra.mxu0 0.0
    %891 = vmatprep.subr.mxu0 0.0
    %892 = vmatpush1.msra.mxu0 0.0
    %893 = vmatprep.subr.mxu0 0.0
    %894 = vmatpush1.msra.mxu0 0.0
    %895 = vmatprep.mubr.f32.mxu0 0.0
    %896 = vmatmul.mubr.f32.gmra.mrb[0].mxu0 0.0
    %v897 = vpop.f32.mrb[0].mxu0
    %v898 = vadd.f32 0.0, %v897
    %v899 = vpop.f32.mrb[0].mxu0
    %v900 = vadd.f32 0.0, %v899
    %901 = vdwg.mxu0
    %902 = vmatprep.subr.mxu0 %v692
    %903 = vmatpush1.msra.mxu0 %v691
    %904 = vmatprep.subr.mxu0 %v696
    %905 = vmatpush1.msra.mxu0 %v695
    %906 = vmatprep.subr.mxu0 %v700
    %907 = vmatpush1.msra.mxu0 %v699
    %908 = vmatprep.subr.mxu0 %v704
    %909 = vmatpush1.msra.mxu0 %v703
    %910 = vmatprep.subr.mxu0 %v708
    %911 = vmatpush1.msra.mxu0 %v707
    %912 = vmatprep.subr.mxu0 %v712
    %913 = vmatpush1.msra.mxu0 %v711
    %914 = vmatprep.subr.mxu0 %v716
    %915 = vmatpush1.msra.mxu0 %v715
    %916 = vmatprep.subr.mxu0 %v720
    %917 = vmatpush1.msra.mxu0 %v719
    %918 = vmatprep.subr.mxu0 %v724
    %919 = vmatpush1.msra.mxu0 %v723
    %920 = vmatprep.subr.mxu0 %v728
    %921 = vmatpush1.msra.mxu0 %v727
    %922 = vmatprep.subr.mxu0 %v732
    %923 = vmatpush1.msra.mxu0 %v731
    %924 = vmatprep.subr.mxu0 %v736
    %925 = vmatpush1.msra.mxu0 %v735
    %926 = vmatprep.subr.mxu0 %v740
    %927 = vmatpush1.msra.mxu0 %v739
    %928 = vmatprep.subr.mxu0 %v744
    %929 = vmatpush1.msra.mxu0 %v743
    %930 = vmatprep.subr.mxu0 %v748
    %931 = vmatpush1.msra.mxu0 %v747
    %932 = vmatprep.subr.mxu0 %v752
    %933 = vmatpush1.msra.mxu0 %v751
    %934 = vmatprep.subr.mxu0 0.0
    %935 = vmatpush1.msra.mxu0 0.0
    %936 = vmatprep.subr.mxu0 0.0
    %937 = vmatpush1.msra.mxu0 0.0
    %938 = vmatprep.subr.mxu0 0.0
    %939 = vmatpush1.msra.mxu0 0.0
    %940 = vmatprep.subr.mxu0 0.0
    %941 = vmatpush1.msra.mxu0 0.0
    %942 = vmatprep.subr.mxu0 0.0
    %943 = vmatpush1.msra.mxu0 0.0
    %944 = vmatprep.subr.mxu0 0.0
    %945 = vmatpush1.msra.mxu0 0.0
    %946 = vmatprep.subr.mxu0 0.0
    %947 = vmatpush1.msra.mxu0 0.0
    %948 = vmatprep.subr.mxu0 0.0
    %949 = vmatpush1.msra.mxu0 0.0
    %950 = vmatprep.subr.mxu0 0.0
    %951 = vmatpush1.msra.mxu0 0.0
    %952 = vmatprep.subr.mxu0 0.0
    %953 = vmatpush1.msra.mxu0 0.0
    %954 = vmatprep.subr.mxu0 0.0
    %955 = vmatpush1.msra.mxu0 0.0
    %956 = vmatprep.subr.mxu0 0.0
    %957 = vmatpush1.msra.mxu0 0.0
    %958 = vmatprep.subr.mxu0 0.0
    %959 = vmatpush1.msra.mxu0 0.0
    %960 = vmatprep.subr.mxu0 0.0
    %961 = vmatpush1.msra.mxu0 0.0
    %962 = vmatprep.subr.mxu0 0.0
    %963 = vmatpush1.msra.mxu0 0.0
    %964 = vmatprep.subr.mxu0 0.0
    %965 = vmatpush1.msra.mxu0 0.0
    %966 = vmatprep.mubr.f32.mxu0 0.0
    %967 = vmatmul.mubr.f32.gmra.mrb[0].mxu0 0.0
    %v968 = vpop.f32.mrb[0].mxu0
    %v969 = vadd.f32 0.0, %v968
    %v970 = vpop.f32.mrb[0].mxu0
    %v971 = vadd.f32 0.0, %v970
    %972 = vdwg.mxu0
    %v973 = vadd.f32 %v820, %v898
    %v974 = vadd.f32 %v821, %v900
    %v975 = vadd.f32 %v822, %v969
    %v976 = vadd.f32 %v823, %v971
    %977 = vmatprep.subr.mxu0 %v754
    %978 = vmatpush1.msra.mxu0 %v753
    %979 = vmatprep.subr.mxu0 %v758
    %980 = vmatpush1.msra.mxu0 %v757
    %981 = vmatprep.subr.mxu0 %v762
    %982 = vmatpush1.msra.mxu0 %v761
    %983 = vmatprep.subr.mxu0 %v766
    %984 = vmatpush1.msra.mxu0 %v765
    %985 = vmatprep.subr.mxu0 %v770
    %986 = vmatpush1.msra.mxu0 %v769
    %987 = vmatprep.subr.mxu0 %v774
    %988 = vmatpush1.msra.mxu0 %v773
    %989 = vmatprep.subr.mxu0 %v778
    %990 = vmatpush1.msra.mxu0 %v777
    %991 = vmatprep.subr.mxu0 %v782
    %992 = vmatpush1.msra.mxu0 %v781
    %993 = vmatprep.subr.mxu0 %v786
    %994 = vmatpush1.msra.mxu0 %v785
    %995 = vmatprep.subr.mxu0 %v790
    %996 = vmatpush1.msra.mxu0 %v789
    %997 = vmatprep.subr.mxu0 %v794
    %998 = vmatpush1.msra.mxu0 %v793
    %999 = vmatprep.subr.mxu0 %v798
    %1000 = vmatpush1.msra.mxu0 %v797
    %1001 = vmatprep.subr.mxu0 %v802
    %1002 = vmatpush1.msra.mxu0 %v801
    %1003 = vmatprep.subr.mxu0 %v806
    %1004 = vmatpush1.msra.mxu0 %v805
    %1005 = vmatprep.subr.mxu0 %v810
    %1006 = vmatpush1.msra.mxu0 %v809
    %1007 = vmatprep.subr.mxu0 %v814
    %1008 = vmatpush1.msra.mxu0 %v813
    %1009 = vmatprep.subr.mxu0 0.0
    %1010 = vmatpush1.msra.mxu0 0.0
    %1011 = vmatprep.subr.mxu0 0.0
    %1012 = vmatpush1.msra.mxu0 0.0
    %1013 = vmatprep.subr.mxu0 0.0
    %1014 = vmatpush1.msra.mxu0 0.0
    %1015 = vmatprep.subr.mxu0 0.0
    %1016 = vmatpush1.msra.mxu0 0.0
    %1017 = vmatprep.subr.mxu0 0.0
    %1018 = vmatpush1.msra.mxu0 0.0
    %1019 = vmatprep.subr.mxu0 0.0
    %1020 = vmatpush1.msra.mxu0 0.0
    %1021 = vmatprep.subr.mxu0 0.0
    %1022 = vmatpush1.msra.mxu0 0.0
    %1023 = vmatprep.subr.mxu0 0.0
    %1024 = vmatpush1.msra.mxu0 0.0
    %1025 = vmatprep.subr.mxu0 0.0
    %1026 = vmatpush1.msra.mxu0 0.0
    %1027 = vmatprep.subr.mxu0 0.0
    %1028 = vmatpush1.msra.mxu0 0.0
    %1029 = vmatprep.subr.mxu0 0.0
    %1030 = vmatpush1.msra.mxu0 0.0
    %1031 = vmatprep.subr.mxu0 0.0
    %1032 = vmatpush1.msra.mxu0 0.0
    %1033 = vmatprep.subr.mxu0 0.0
    %1034 = vmatpush1.msra.mxu0 0.0
    %1035 = vmatprep.subr.mxu0 0.0
    %1036 = vmatpush1.msra.mxu0 0.0
    %1037 = vmatprep.subr.mxu0 0.0
    %1038 = vmatpush1.msra.mxu0 0.0
    %1039 = vmatprep.subr.mxu0 0.0
    %1040 = vmatpush1.msra.mxu0 0.0
    %1041 = vmatprep.mubr.f32.mxu0 0.0
    %1042 = vmatmul.mubr.f32.gmra.mrb[0].mxu0 0.0
    %v1043 = vpop.f32.mrb[0].mxu0
    %v1044 = vadd.f32 0.0, %v1043
    %v1045 = vpop.f32.mrb[0].mxu0
    %v1046 = vadd.f32 0.0, %v1045
    %1047 = vdwg.mxu0
    %1048 = vmatprep.subr.mxu0 %v756
    %1049 = vmatpush1.msra.mxu0 %v755
    %1050 = vmatprep.subr.mxu0 %v760
    %1051 = vmatpush1.msra.mxu0 %v759
    %1052 = vmatprep.subr.mxu0 %v764
    %1053 = vmatpush1.msra.mxu0 %v763
    %1054 = vmatprep.subr.mxu0 %v768
    %1055 = vmatpush1.msra.mxu0 %v767
    %1056 = vmatprep.subr.mxu0 %v772
    %1057 = vmatpush1.msra.mxu0 %v771
    %1058 = vmatprep.subr.mxu0 %v776
    %1059 = vmatpush1.msra.mxu0 %v775
    %1060 = vmatprep.subr.mxu0 %v780
    %1061 = vmatpush1.msra.mxu0 %v779
    %1062 = vmatprep.subr.mxu0 %v784
    %1063 = vmatpush1.msra.mxu0 %v783
    %1064 = vmatprep.subr.mxu0 %v788
    %1065 = vmatpush1.msra.mxu0 %v787
    %1066 = vmatprep.subr.mxu0 %v792
    %1067 = vmatpush1.msra.mxu0 %v791
    %1068 = vmatprep.subr.mxu0 %v796
    %1069 = vmatpush1.msra.mxu0 %v795
    %1070 = vmatprep.subr.mxu0 %v800
    %1071 = vmatpush1.msra.mxu0 %v799
    %1072 = vmatprep.subr.mxu0 %v804
    %1073 = vmatpush1.msra.mxu0 %v803
    %1074 = vmatprep.subr.mxu0 %v808
    %1075 = vmatpush1.msra.mxu0 %v807
    %1076 = vmatprep.subr.mxu0 %v812
    %1077 = vmatpush1.msra.mxu0 %v811
    %1078 = vmatprep.subr.mxu0 %v816
    %1079 = vmatpush1.msra.mxu0 %v815
    %1080 = vmatprep.subr.mxu0 0.0
    %1081 = vmatpush1.msra.mxu0 0.0
    %1082 = vmatprep.subr.mxu0 0.0
    %1083 = vmatpush1.msra.mxu0 0.0
    %1084 = vmatprep.subr.mxu0 0.0
    %1085 = vmatpush1.msra.mxu0 0.0
    %1086 = vmatprep.subr.mxu0 0.0
    %1087 = vmatpush1.msra.mxu0 0.0
    %1088 = vmatprep.subr.mxu0 0.0
    %1089 = vmatpush1.msra.mxu0 0.0
    %1090 = vmatprep.subr.mxu0 0.0
    %1091 = vmatpush1.msra.mxu0 0.0
    %1092 = vmatprep.subr.mxu0 0.0
    %1093 = vmatpush1.msra.mxu0 0.0
    %1094 = vmatprep.subr.mxu0 0.0
    %1095 = vmatpush1.msra.mxu0 0.0
    %1096 = vmatprep.subr.mxu0 0.0
    %1097 = vmatpush1.msra.mxu0 0.0
    %1098 = vmatprep.subr.mxu0 0.0
    %1099 = vmatpush1.msra.mxu0 0.0
    %1100 = vmatprep.subr.mxu0 0.0
    %1101 = vmatpush1.msra.mxu0 0.0
    %1102 = vmatprep.subr.mxu0 0.0
    %1103 = vmatpush1.msra.mxu0 0.0
    %1104 = vmatprep.subr.mxu0 0.0
    %1105 = vmatpush1.msra.mxu0 0.0
    %1106 = vmatprep.subr.mxu0 0.0
    %1107 = vmatpush1.msra.mxu0 0.0
    %1108 = vmatprep.subr.mxu0 0.0
    %1109 = vmatpush1.msra.mxu0 0.0
    %1110 = vmatprep.subr.mxu0 0.0
    %1111 = vmatpush1.msra.mxu0 0.0
    %1112 = vmatprep.mubr.f32.mxu0 0.0
    %1113 = vmatmul.mubr.f32.gmra.mrb[0].mxu0 0.0
    %v1114 = vpop.f32.mrb[0].mxu0
    %v1115 = vadd.f32 0.0, %v1114
    %v1116 = vpop.f32.mrb[0].mxu0
    %v1117 = vadd.f32 0.0, %v1116
    %1118 = vdwg.mxu0
    %v1119 = vadd.f32 %v827, %v1044
    %v1120 = vadd.f32 %v828, %v1046
    %v1121 = vadd.f32 %v829, %v1115
    %v1122 = vadd.f32 %v830, %v1117
    %v1123 = vxor.u32 %v973, 2147483648
    %v1124 = vmul.f32 %v1123, 1.442695
    %v1125 = vpow.pop %v1124
    %v1126 = vadd.f32 %v1125, 1.0
    %v1127 = vrcp.pop %v1126
    %v1128 = vmul.f32 1.0, %v1127
    %v1129 = vxor.u32 %v974, 2147483648
    %v1130 = vmul.f32 %v1129, 1.442695
    %v1131 = vpow.pop %v1130
    %v1132 = vadd.f32 %v1131, 1.0
    %v1133 = vrcp.pop %v1132
    %v1134 = vmul.f32 1.0, %v1133
    %v1135 = vtanh.pop %v975
    %v1136 = vxor.u32 %v976, 2147483648
    %v1137 = vmul.f32 %v1136, 1.442695
    %v1138 = vpow.pop %v1137
    %v1139 = vadd.f32 %v1138, 1.0
    %v1140 = vrcp.pop %v1139
    %v1141 = vmul.f32 1.0, %v1140
    %v1142 = vmul.f32 %v1134, 0.0
    %v1143 = vmul.f32 %v1128, %v1135
    %v1144 = vadd.f32 %v1142, %v1143
    %v1145 = vtanh.pop %v1144
    %v1146 = vmul.f32 %v1141, %v1145
    %v1147 = vxor.u32 %v1119, 2147483648
    %v1148 = vmul.f32 %v1147, 1.442695
    %v1149 = vpow.pop %v1148
    %v1150 = vadd.f32 %v1149, 1.0
    %v1151 = vrcp.pop %v1150
    %v1152 = vmul.f32 1.0, %v1151
    %v1153 = vxor.u32 %v1120, 2147483648
    %v1154 = vmul.f32 %v1153, 1.442695
    %v1155 = vpow.pop %v1154
    %v1156 = vadd.f32 %v1155, 1.0
    %v1157 = vrcp.pop %v1156
    %v1158 = vmul.f32 1.0, %v1157
    %v1159 = vtanh.pop %v1121
    %v1160 = vxor.u32 %v1122, 2147483648
    %v1161 = vmul.f32 %v1160, 1.442695
    %v1162 = vpow.pop %v1161
    %v1163 = vadd.f32 %v1162, 1.0
    %v1164 = vrcp.pop %v1163
    %v1165 = vmul.f32 1.0, %v1164
    %v1166 = vmul.f32 %v1158, 0.0
    %v1167 = vmul.f32 %v1152, %v1159
    %v1168 = vadd.f32 %v1166, %v1167
    %v1169 = vtanh.pop %v1168
    %v1170 = vmul.f32 %v1165, %v1169
    %s1171 = smul.u32 0, 2
    %s1172 = smul.addr %s1171, 8
    %s1173 = scalar_lea.vmem [#allocation3], %s1172
    %1174 = vst [vmem:[%s1173] sm:$0xff] %v1146
    %s1175 = smul.u32 7, 2
    %s1176 = smul.addr %s1175, 8
    %s1177 = scalar_lea.vmem [#allocation3], %s1176
    %1178 = vst [vmem:[%s1177 + $0x8] sm:$0xff] %v1170
    %s1179 = smul.u32 1, 8
    %s1180 = smul.addr %s1179, 8
    %s1181 = scalar_lea.vmem [#allocation2], %s1180
    %v1182 = vld [vmem:[%s1181] sm:$0xff]
    %v1183 = vld [vmem:[%s1181 + $0x8] sm:$0xff]
    %v1184 = vld [vmem:[%s1181 + $0x10] sm:$0xff]
    %v1185 = vld [vmem:[%s1181 + $0x18] sm:$0xff]
    %s1186 = smul.u32 6, 8
    %s1187 = smul.addr %s1186, 8
    %s1188 = scalar_lea.vmem [#allocation2], %s1187
    %v1189 = vld [vmem:[%s1188 + $0x20] sm:$0xff]
    %v1190 = vld [vmem:[%s1188 + $0x28] sm:$0xff]
    %v1191 = vld [vmem:[%s1188 + $0x30] sm:$0xff]
    %v1192 = vld [vmem:[%s1188 + $0x38] sm:$0xff]
    %1193 = vmatprep.subr.mxu0 %v690
    %1194 = vmatpush1.msra.mxu0 %v689
    %1195 = vmatprep.subr.mxu0 %v694
    %1196 = vmatpush1.msra.mxu0 %v693
    %1197 = vmatprep.subr.mxu0 %v698
    %1198 = vmatpush1.msra.mxu0 %v697
    %1199 = vmatprep.subr.mxu0 %v702
    %1200 = vmatpush1.msra.mxu0 %v701
    %1201 = vmatprep.subr.mxu0 %v706
    %1202 = vmatpush1.msra.mxu0 %v705
    %1203 = vmatprep.subr.mxu0 %v710
    %1204 = vmatpush1.msra.mxu0 %v709
    %1205 = vmatprep.subr.mxu0 %v714
    %1206 = vmatpush1.msra.mxu0 %v713
    %1207 = vmatprep.subr.mxu0 %v718
    %1208 = vmatpush1.msra.mxu0 %v717
    %1209 = vmatprep.subr.mxu0 %v722
    %1210 = vmatpush1.msra.mxu0 %v721
    %1211 = vmatprep.subr.mxu0 %v726
    %1212 = vmatpush1.msra.mxu0 %v725
    %1213 = vmatprep.subr.mxu0 %v730
    %1214 = vmatpush1.msra.mxu0 %v729
    %1215 = vmatprep.subr.mxu0 %v734
    %1216 = vmatpush1.msra.mxu0 %v733
    %1217 = vmatprep.subr.mxu0 %v738
    %1218 = vmatpush1.msra.mxu0 %v737
    %1219 = vmatprep.subr.mxu0 %v742
    %1220 = vmatpush1.msra.mxu0 %v741
    %1221 = vmatprep.subr.mxu0 %v746
    %1222 = vmatpush1.msra.mxu0 %v745
    %1223 = vmatprep.subr.mxu0 %v750
    %1224 = vmatpush1.msra.mxu0 %v749
    %1225 = vmatprep.subr.mxu0 0.0
    %1226 = vmatpush1.msra.mxu0 0.0
    %1227 = vmatprep.subr.mxu0 0.0
    %1228 = vmatpush1.msra.mxu0 0.0
    %1229 = vmatprep.subr.mxu0 0.0
    %1230 = vmatpush1.msra.mxu0 0.0
    %1231 = vmatprep.subr.mxu0 0.0
    %1232 = vmatpush1.msra.mxu0 0.0
    %1233 = vmatprep.subr.mxu0 0.0
    %1234 = vmatpush1.msra.mxu0 0.0
    %1235 = vmatprep.subr.mxu0 0.0
    %1236 = vmatpush1.msra.mxu0 0.0
    %1237 = vmatprep.subr.mxu0 0.0
    %1238 = vmatpush1.msra.mxu0 0.0
    %1239 = vmatprep.subr.mxu0 0.0
    %1240 = vmatpush1.msra.mxu0 0.0
    %1241 = vmatprep.subr.mxu0 0.0
    %1242 = vmatpush1.msra.mxu0 0.0
    %1243 = vmatprep.subr.mxu0 0.0
    %1244 = vmatpush1.msra.mxu0 0.0
    %1245 = vmatprep.subr.mxu0 0.0
    %1246 = vmatpush1.msra.mxu0 0.0
    %1247 = vmatprep.subr.mxu0 0.0
    %1248 = vmatpush1.msra.mxu0 0.0
    %1249 = vmatprep.subr.mxu0 0.0
    %1250 = vmatpush1.msra.mxu0 0.0
    %1251 = vmatprep.subr.mxu0 0.0
    %1252 = vmatpush1.msra.mxu0 0.0
    %1253 = vmatprep.subr.mxu0 0.0
    %1254 = vmatpush1.msra.mxu0 0.0
    %1255 = vmatprep.subr.mxu0 0.0
    %1256 = vmatpush1.msra.mxu0 0.0
    %1257 = vmatprep.mubr.f32.mxu0 0.0
    %1258 = vmatmul.mubr.f32.gmra.mrb[0].mxu0 %v1146
    %v1259 = vpop.f32.mrb[0].mxu0
    %v1260 = vadd.f32 0.0, %v1259
    %v1261 = vpop.f32.mrb[0].mxu0
    %v1262 = vadd.f32 0.0, %v1261
    %1263 = vdwg.mxu0
    %1264 = vmatprep.subr.mxu0 %v692
    %1265 = vmatpush1.msra.mxu0 %v691
    %1266 = vmatprep.subr.mxu0 %v696
    %1267 = vmatpush1.msra.mxu0 %v695
    %1268 = vmatprep.subr.mxu0 %v700
    %1269 = vmatpush1.msra.mxu0 %v699
    %1270 = vmatprep.subr.mxu0 %v704
    %1271 = vmatpush1.msra.mxu0 %v703
    %1272 = vmatprep.subr.mxu0 %v708
    %1273 = vmatpush1.msra.mxu0 %v707
    %1274 = vmatprep.subr.mxu0 %v712
    %1275 = vmatpush1.msra.mxu0 %v711
    %1276 = vmatprep.subr.mxu0 %v716
    %1277 = vmatpush1.msra.mxu0 %v715
    %1278 = vmatprep.subr.mxu0 %v720
    %1279 = vmatpush1.msra.mxu0 %v719
    %1280 = vmatprep.subr.mxu0 %v724
    %1281 = vmatpush1.msra.mxu0 %v723
    %1282 = vmatprep.subr.mxu0 %v728
    %1283 = vmatpush1.msra.mxu0 %v727
    %1284 = vmatprep.subr.mxu0 %v732
    %1285 = vmatpush1.msra.mxu0 %v731
    %1286 = vmatprep.subr.mxu0 %v736
    %1287 = vmatpush1.msra.mxu0 %v735
    %1288 = vmatprep.subr.mxu0 %v740
    %1289 = vmatpush1.msra.mxu0 %v739
    %1290 = vmatprep.subr.mxu0 %v744
    %1291 = vmatpush1.msra.mxu0 %v743
    %1292 = vmatprep.subr.mxu0 %v748
    %1293 = vmatpush1.msra.mxu0 %v747
    %1294 = vmatprep.subr.mxu0 %v752
    %1295 = vmatpush1.msra.mxu0 %v751
    %1296 = vmatprep.subr.mxu0 0.0
    %1297 = vmatpush1.msra.mxu0 0.0
    %1298 = vmatprep.subr.mxu0 0.0
    %1299 = vmatpush1.msra.mxu0 0.0
    %1300 = vmatprep.subr.mxu0 0.0
    %1301 = vmatpush1.msra.mxu0 0.0
    %1302 = vmatprep.subr.mxu0 0.0
    %1303 = vmatpush1.msra.mxu0 0.0
    %1304 = vmatprep.subr.mxu0 0.0
    %1305 = vmatpush1.msra.mxu0 0.0
    %1306 = vmatprep.subr.mxu0 0.0
    %1307 = vmatpush1.msra.mxu0 0.0
    %1308 = vmatprep.subr.mxu0 0.0
    %1309 = vmatpush1.msra.mxu0 0.0
    %1310 = vmatprep.subr.mxu0 0.0
    %1311 = vmatpush1.msra.mxu0 0.0
    %1312 = vmatprep.subr.mxu0 0.0
    %1313 = vmatpush1.msra.mxu0 0.0
    %1314 = vmatprep.subr.mxu0 0.0
    %1315 = vmatpush1.msra.mxu0 0.0
    %1316 = vmatprep.subr.mxu0 0.0
    %1317 = vmatpush1.msra.mxu0 0.0
    %1318 = vmatprep.subr.mxu0 0.0
    %1319 = vmatpush1.msra.mxu0 0.0
    %1320 = vmatprep.subr.mxu0 0.0
    %1321 = vmatpush1.msra.mxu0 0.0
    %1322 = vmatprep.subr.mxu0 0.0
    %1323 = vmatpush1.msra.mxu0 0.0
    %1324 = vmatprep.subr.mxu0 0.0
    %1325 = vmatpush1.msra.mxu0 0.0
    %1326 = vmatprep.subr.mxu0 0.0
    %1327 = vmatpush1.msra.mxu0 0.0
    %1328 = vmatprep.mubr.f32.mxu0 0.0
    %1329 = vmatmul.mubr.f32.gmra.mrb[0].mxu0 %v1146
    %v1330 = vpop.f32.mrb[0].mxu0
    %v1331 = vadd.f32 0.0, %v1330
    %v1332 = vpop.f32.mrb[0].mxu0
    %v1333 = vadd.f32 0.0, %v1332
    %1334 = vdwg.mxu0
    %v1335 = vadd.f32 %v1182, %v1260
    %v1336 = vadd.f32 %v1183, %v1262
    %v1337 = vadd.f32 %v1184, %v1331
    %v1338 = vadd.f32 %v1185, %v1333
    %1339 = vmatprep.subr.mxu0 %v754
    %1340 = vmatpush1.msra.mxu0 %v753
    %1341 = vmatprep.subr.mxu0 %v758
    %1342 = vmatpush1.msra.mxu0 %v757
    %1343 = vmatprep.subr.mxu0 %v762
    %1344 = vmatpush1.msra.mxu0 %v761
    %1345 = vmatprep.subr.mxu0 %v766
    %1346 = vmatpush1.msra.mxu0 %v765
    %1347 = vmatprep.subr.mxu0 %v770
    %1348 = vmatpush1.msra.mxu0 %v769
    %1349 = vmatprep.subr.mxu0 %v774
    %1350 = vmatpush1.msra.mxu0 %v773
    %1351 = vmatprep.subr.mxu0 %v778
    %1352 = vmatpush1.msra.mxu0 %v777
    %1353 = vmatprep.subr.mxu0 %v782
    %1354 = vmatpush1.msra.mxu0 %v781
    %1355 = vmatprep.subr.mxu0 %v786
    %1356 = vmatpush1.msra.mxu0 %v785
    %1357 = vmatprep.subr.mxu0 %v790
    %1358 = vmatpush1.msra.mxu0 %v789
    %1359 = vmatprep.subr.mxu0 %v794
    %1360 = vmatpush1.msra.mxu0 %v793
    %1361 = vmatprep.subr.mxu0 %v798
    %1362 = vmatpush1.msra.mxu0 %v797
    %1363 = vmatprep.subr.mxu0 %v802
    %1364 = vmatpush1.msra.mxu0 %v801
    %1365 = vmatprep.subr.mxu0 %v806
    %1366 = vmatpush1.msra.mxu0 %v805
    %1367 = vmatprep.subr.mxu0 %v810
    %1368 = vmatpush1.msra.mxu0 %v809
    %1369 = vmatprep.subr.mxu0 %v814
    %1370 = vmatpush1.msra.mxu0 %v813
    %1371 = vmatprep.subr.mxu0 0.0
    %1372 = vmatpush1.msra.mxu0 0.0
    %1373 = vmatprep.subr.mxu0 0.0
    %1374 = vmatpush1.msra.mxu0 0.0
    %1375 = vmatprep.subr.mxu0 0.0
    %1376 = vmatpush1.msra.mxu0 0.0
    %1377 = vmatprep.subr.mxu0 0.0
    %1378 = vmatpush1.msra.mxu0 0.0
    %1379 = vmatprep.subr.mxu0 0.0
    %1380 = vmatpush1.msra.mxu0 0.0
    %1381 = vmatprep.subr.mxu0 0.0
    %1382 = vmatpush1.msra.mxu0 0.0
    %1383 = vmatprep.subr.mxu0 0.0
    %1384 = vmatpush1.msra.mxu0 0.0
    %1385 = vmatprep.subr.mxu0 0.0
    %1386 = vmatpush1.msra.mxu0 0.0
    %1387 = vmatprep.subr.mxu0 0.0
    %1388 = vmatpush1.msra.mxu0 0.0
    %1389 = vmatprep.subr.mxu0 0.0
    %1390 = vmatpush1.msra.mxu0 0.0
    %1391 = vmatprep.subr.mxu0 0.0
    %1392 = vmatpush1.msra.mxu0 0.0
    %1393 = vmatprep.subr.mxu0 0.0
    %1394 = vmatpush1.msra.mxu0 0.0
    %1395 = vmatprep.subr.mxu0 0.0
    %1396 = vmatpush1.msra.mxu0 0.0
    %1397 = vmatprep.subr.mxu0 0.0
    %1398 = vmatpush1.msra.mxu0 0.0
    %1399 = vmatprep.subr.mxu0 0.0
    %1400 = vmatpush1.msra.mxu0 0.0
    %1401 = vmatprep.subr.mxu0 0.0
    %1402 = vmatpush1.msra.mxu0 0.0
    %1403 = vmatprep.mubr.f32.mxu0 0.0
    %1404 = vmatmul.mubr.f32.gmra.mrb[0].mxu0 %v1170
    %v1405 = vpop.f32.mrb[0].mxu0
    %v1406 = vadd.f32 0.0, %v1405
    %v1407 = vpop.f32.mrb[0].mxu0
    %v1408 = vadd.f32 0.0, %v1407
    %1409 = vdwg.mxu0
    %1410 = vmatprep.subr.mxu0 %v756
    %1411 = vmatpush1.msra.mxu0 %v755
    %1412 = vmatprep.subr.mxu0 %v760
    %1413 = vmatpush1.msra.mxu0 %v759
    %1414 = vmatprep.subr.mxu0 %v764
    %1415 = vmatpush1.msra.mxu0 %v763
    %1416 = vmatprep.subr.mxu0 %v768
    %1417 = vmatpush1.msra.mxu0 %v767
    %1418 = vmatprep.subr.mxu0 %v772
    %1419 = vmatpush1.msra.mxu0 %v771
    %1420 = vmatprep.subr.mxu0 %v776
    %1421 = vmatpush1.msra.mxu0 %v775
    %1422 = vmatprep.subr.mxu0 %v780
    %1423 = vmatpush1.msra.mxu0 %v779
    %1424 = vmatprep.subr.mxu0 %v784
    %1425 = vmatpush1.msra.mxu0 %v783
    %1426 = vmatprep.subr.mxu0 %v788
    %1427 = vmatpush1.msra.mxu0 %v787
    %1428 = vmatprep.subr.mxu0 %v792
    %1429 = vmatpush1.msra.mxu0 %v791
    %1430 = vmatprep.subr.mxu0 %v796
    %1431 = vmatpush1.msra.mxu0 %v795
    %1432 = vmatprep.subr.mxu0 %v800
    %1433 = vmatpush1.msra.mxu0 %v799
    %1434 = vmatprep.subr.mxu0 %v804
    %1435 = vmatpush1.msra.mxu0 %v803
    %1436 = vmatprep.subr.mxu0 %v808
    %1437 = vmatpush1.msra.mxu0 %v807
    %1438 = vmatprep.subr.mxu0 %v812
    %1439 = vmatpush1.msra.mxu0 %v811
    %1440 = vmatprep.subr.mxu0 %v816
    %1441 = vmatpush1.msra.mxu0 %v815
    %1442 = vmatprep.subr.mxu0 0.0
    %1443 = vmatpush1.msra.mxu0 0.0
    %1444 = vmatprep.subr.mxu0 0.0
    %1445 = vmatpush1.msra.mxu0 0.0
    %1446 = vmatprep.subr.mxu0 0.0
    %1447 = vmatpush1.msra.mxu0 0.0
    %1448 = vmatprep.subr.mxu0 0.0
    %1449 = vmatpush1.msra.mxu0 0.0
    %1450 = vmatprep.subr.mxu0 0.0
    %1451 = vmatpush1.msra.mxu0 0.0
    %1452 = vmatprep.subr.mxu0 0.0
    %1453 = vmatpush1.msra.mxu0 0.0
    %1454 = vmatprep.subr.mxu0 0.0
    %1455 = vmatpush1.msra.mxu0 0.0
    %1456 = vmatprep.subr.mxu0 0.0
    %1457 = vmatpush1.msra.mxu0 0.0
    %1458 = vmatprep.subr.mxu0 0.0
    %1459 = vmatpush1.msra.mxu0 0.0
    %1460 = vmatprep.subr.mxu0 0.0
    %1461 = vmatpush1.msra.mxu0 0.0
    %1462 = vmatprep.subr.mxu0 0.0
    %1463 = vmatpush1.msra.mxu0 0.0
    %1464 = vmatprep.subr.mxu0 0.0
    %1465 = vmatpush1.msra.mxu0 0.0
    %1466 = vmatprep.subr.mxu0 0.0
    %1467 = vmatpush1.msra.mxu0 0.0
    %1468 = vmatprep.subr.mxu0 0.0
    %1469 = vmatpush1.msra.mxu0 0.0
    %1470 = vmatprep.subr.mxu0 0.0
    %1471 = vmatpush1.msra.mxu0 0.0
    %1472 = vmatprep.subr.mxu0 0.0
    %1473 = vmatpush1.msra.mxu0 0.0
    %1474 = vmatprep.mubr.f32.mxu0 0.0
    %1475 = vmatmul.mubr.f32.gmra.mrb[0].mxu0 %v1170
    %v1476 = vpop.f32.mrb[0].mxu0
    %v1477 = vadd.f32 0.0, %v1476
    %v1478 = vpop.f32.mrb[0].mxu0
    %v1479 = vadd.f32 0.0, %v1478
    %1480 = vdwg.mxu0
    %v1481 = vadd.f32 %v1189, %v1406
    %v1482 = vadd.f32 %v1190, %v1408
    %v1483 = vadd.f32 %v1191, %v1477
    %v1484 = vadd.f32 %v1192, %v1479
    %v1485 = vxor.u32 %v1335, 2147483648
    %v1486 = vmul.f32 %v1485, 1.442695
    %v1487 = vpow.pop %v1486
    %v1488 = vadd.f32 %v1487, 1.0
    %v1489 = vrcp.pop %v1488
    %v1490 = vmul.f32 1.0, %v1489
    %v1491 = vxor.u32 %v1336, 2147483648
    %v1492 = vmul.f32 %v1491, 1.442695
    %v1493 = vpow.pop %v1492
    %v1494 = vadd.f32 %v1493, 1.0
    %v1495 = vrcp.pop %v1494
    %v1496 = vmul.f32 1.0, %v1495
    %v1497 = vtanh.pop %v1337
    %v1498 = vxor.u32 %v1338, 2147483648
    %v1499 = vmul.f32 %v1498, 1.442695
    %v1500 = vpow.pop %v1499
    %v1501 = vadd.f32 %v1500, 1.0
    %v1502 = vrcp.pop %v1501
    %v1503 = vmul.f32 1.0, %v1502
    %v1504 = vmul.f32 %v1496, %v1144
    %v1505 = vmul.f32 %v1490, %v1497
    %v1506 = vadd.f32 %v1504, %v1505
    %v1507 = vtanh.pop %v1506
    %v1508 = vmul.f32 %v1503, %v1507
    %v1509 = vxor.u32 %v1481, 2147483648
    %v1510 = vmul.f32 %v1509, 1.442695
    %v1511 = vpow.pop %v1510
    %v1512 = vadd.f32 %v1511, 1.0
    %v1513 = vrcp.pop %v1512
    %v1514 = vmul.f32 1.0, %v1513
    %v1515 = vxor.u32 %v1482, 2147483648
    %v1516 = vmul.f32 %v1515, 1.442695
    %v1517 = vpow.pop %v1516
    %v1518 = vadd.f32 %v1517, 1.0
    %v1519 = vrcp.pop %v1518
    %v1520 = vmul.f32 1.0, %v1519
    %v1521 = vtanh.pop %v1483
    %v1522 = vxor.u32 %v1484, 2147483648
    %v1523 = vmul.f32 %v1522, 1.442695
    %v1524 = vpow.pop %v1523
    %v1525 = vadd.f32 %v1524, 1.0
    %v1526 = vrcp.pop %v1525
    %v1527 = vmul.f32 1.0, %v1526
    %v1528 = vmul.f32 %v1520, %v1168
    %v1529 = vmul.f32 %v1514, %v1521
    %v1530 = vadd.f32 %v1528, %v1529
    %v1531 = vtanh.pop %v1530
    %v1532 = vmul.f32 %v1527, %v1531
    %s1533 = smul.u32 1, 2
    %s1534 = smul.addr %s1533, 8
    %s1535 = scalar_lea.vmem [#allocation3], %s1534
    %1536 = vst [vmem:[%s1535] sm:$0xff] %v1508
    %s1537 = smul.u32 6, 2
    %s1538 = smul.addr %s1537, 8
    %s1539 = scalar_lea.vmem [#allocation3], %s1538
    %1540 = vst [vmem:[%s1539 + $0x8] sm:$0xff] %v1532
    %s1541 = smul.u32 2, 8
    %s1542 = smul.addr %s1541, 8
    %s1543 = scalar_lea.vmem [#allocation2], %s1542
    %v1544 = vld [vmem:[%s1543] sm:$0xff]
    %v1545 = vld [vmem:[%s1543 + $0x8] sm:$0xff]
    %v1546 = vld [vmem:[%s1543 + $0x10] sm:$0xff]
    %v1547 = vld [vmem:[%s1543 + $0x18] sm:$0xff]
    %s1548 = smul.u32 5, 8
    %s1549 = smul.addr %s1548, 8
    %s1550 = scalar_lea.vmem [#allocation2], %s1549
    %v1551 = vld [vmem:[%s1550 + $0x20] sm:$0xff]
    %v1552 = vld [vmem:[%s1550 + $0x28] sm:$0xff]
    %v1553 = vld [vmem:[%s1550 + $0x30] sm:$0xff]
    %v1554 = vld [vmem:[%s1550 + $0x38] sm:$0xff]
    %1555 = vmatprep.subr.mxu0 %v690
    %1556 = vmatpush1.msra.mxu0 %v689
    %1557 = vmatprep.subr.mxu0 %v694
    %1558 = vmatpush1.msra.mxu0 %v693
    %1559 = vmatprep.subr.mxu0 %v698
    %1560 = vmatpush1.msra.mxu0 %v697
    %1561 = vmatprep.subr.mxu0 %v702
    %1562 = vmatpush1.msra.mxu0 %v701
    %1563 = vmatprep.subr.mxu0 %v706
    %1564 = vmatpush1.msra.mxu0 %v705
    %1565 = vmatprep.subr.mxu0 %v710
    %1566 = vmatpush1.msra.mxu0 %v709
    %1567 = vmatprep.subr.mxu0 %v714
    %1568 = vmatpush1.msra.mxu0 %v713
    %1569 = vmatprep.subr.mxu0 %v718
    %1570 = vmatpush1.msra.mxu0 %v717
    %1571 = vmatprep.subr.mxu0 %v722
    %1572 = vmatpush1.msra.mxu0 %v721
    %1573 = vmatprep.subr.mxu0 %v726
    %1574 = vmatpush1.msra.mxu0 %v725
    %1575 = vmatprep.subr.mxu0 %v730
    %1576 = vmatpush1.msra.mxu0 %v729
    %1577 = vmatprep.subr.mxu0 %v734
    %1578 = vmatpush1.msra.mxu0 %v733
    %1579 = vmatprep.subr.mxu0 %v738
    %1580 = vmatpush1.msra.mxu0 %v737
    %1581 = vmatprep.subr.mxu0 %v742
    %1582 = vmatpush1.msra.mxu0 %v741
    %1583 = vmatprep.subr.mxu0 %v746
    %1584 = vmatpush1.msra.mxu0 %v745
    %1585 = vmatprep.subr.mxu0 %v750
    %1586 = vmatpush1.msra.mxu0 %v749
    %1587 = vmatprep.subr.mxu0 0.0
    %1588 = vmatpush1.msra.mxu0 0.0
    %1589 = vmatprep.subr.mxu0 0.0
    %1590 = vmatpush1.msra.mxu0 0.0
    %1591 = vmatprep.subr.mxu0 0.0
    %1592 = vmatpush1.msra.mxu0 0.0
    %1593 = vmatprep.subr.mxu0 0.0
    %1594 = vmatpush1.msra.mxu0 0.0
    %1595 = vmatprep.subr.mxu0 0.0
    %1596 = vmatpush1.msra.mxu0 0.0
    %1597 = vmatprep.subr.mxu0 0.0
    %1598 = vmatpush1.msra.mxu0 0.0
    %1599 = vmatprep.subr.mxu0 0.0
    %1600 = vmatpush1.msra.mxu0 0.0
    %1601 = vmatprep.subr.mxu0 0.0
    %1602 = vmatpush1.msra.mxu0 0.0
    %1603 = vmatprep.subr.mxu0 0.0
    %1604 = vmatpush1.msra.mxu0 0.0
    %1605 = vmatprep.subr.mxu0 0.0
    %1606 = vmatpush1.msra.mxu0 0.0
    %1607 = vmatprep.subr.mxu0 0.0
    %1608 = vmatpush1.msra.mxu0 0.0
    %1609 = vmatprep.subr.mxu0 0.0
    %1610 = vmatpush1.msra.mxu0 0.0
    %1611 = vmatprep.subr.mxu0 0.0
    %1612 = vmatpush1.msra.mxu0 0.0
    %1613 = vmatprep.subr.mxu0 0.0
    %1614 = vmatpush1.msra.mxu0 0.0
    %1615 = vmatprep.subr.mxu0 0.0
    %1616 = vmatpush1.msra.mxu0 0.0
    %1617 = vmatprep.subr.mxu0 0.0
    %1618 = vmatpush1.msra.mxu0 0.0
    %1619 = vmatprep.mubr.f32.mxu0 0.0
    %1620 = vmatmul.mubr.f32.gmra.mrb[0].mxu0 %v1508
    %v1621 = vpop.f32.mrb[0].mxu0
    %v1622 = vadd.f32 0.0, %v1621
    %v1623 = vpop.f32.mrb[0].mxu0
    %v1624 = vadd.f32 0.0, %v1623
    %1625 = vdwg.mxu0
    %1626 = vmatprep.subr.mxu0 %v692
    %1627 = vmatpush1.msra.mxu0 %v691
    %1628 = vmatprep.subr.mxu0 %v696
    %1629 = vmatpush1.msra.mxu0 %v695
    %1630 = vmatprep.subr.mxu0 %v700
    %1631 = vmatpush1.msra.mxu0 %v699
    %1632 = vmatprep.subr.mxu0 %v704
    %1633 = vmatpush1.msra.mxu0 %v703
    %1634 = vmatprep.subr.mxu0 %v708
    %1635 = vmatpush1.msra.mxu0 %v707
    %1636 = vmatprep.subr.mxu0 %v712
    %1637 = vmatpush1.msra.mxu0 %v711
    %1638 = vmatprep.subr.mxu0 %v716
    %1639 = vmatpush1.msra.mxu0 %v715
    %1640 = vmatprep.subr.mxu0 %v720
    %1641 = vmatpush1.msra.mxu0 %v719
    %1642 = vmatprep.subr.mxu0 %v724
    %1643 = vmatpush1.msra.mxu0 %v723
    %1644 = vmatprep.subr.mxu0 %v728
    %1645 = vmatpush1.msra.mxu0 %v727
    %1646 = vmatprep.subr.mxu0 %v732
    %1647 = vmatpush1.msra.mxu0 %v731
    %1648 = vmatprep.subr.mxu0 %v736
    %1649 = vmatpush1.msra.mxu0 %v735
    %1650 = vmatprep.subr.mxu0 %v740
    %1651 = vmatpush1.msra.mxu0 %v739
    %1652 = vmatprep.subr.mxu0 %v744
    %1653 = vmatpush1.msra.mxu0 %v743
    %1654 = vmatprep.subr.mxu0 %v748
    %1655 = vmatpush1.msra.mxu0 %v747
    %1656 = vmatprep.subr.mxu0 %v752
    %1657 = vmatpush1.msra.mxu0 %v751
    %1658 = vmatprep.subr.mxu0 0.0
    %1659 = vmatpush1.msra.mxu0 0.0
    %1660 = vmatprep.subr.mxu0 0.0
    %1661 = vmatpush1.msra.mxu0 0.0
    %1662 = vmatprep.subr.mxu0 0.0
    %1663 = vmatpush1.msra.mxu0 0.0
    %1664 = vmatprep.subr.mxu0 0.0
    %1665 = vmatpush1.msra.mxu0 0.0
    %1666 = vmatprep.subr.mxu0 0.0
    %1667 = vmatpush1.msra.mxu0 0.0
    %1668 = vmatprep.subr.mxu0 0.0
    %1669 = vmatpush1.msra.mxu0 0.0
    %1670 = vmatprep.subr.mxu0 0.0
    %1671 = vmatpush1.msra.mxu0 0.0
    %1672 = vmatprep.subr.mxu0 0.0
    %1673 = vmatpush1.msra.mxu0 0.0
    %1674 = vmatprep.subr.mxu0 0.0
    %1675 = vmatpush1.msra.mxu0 0.0
    %1676 = vmatprep.subr.mxu0 0.0
    %1677 = vmatpush1.msra.mxu0 0.0
    %1678 = vmatprep.subr.mxu0 0.0
    %1679 = vmatpush1.msra.mxu0 0.0
    %1680 = vmatprep.subr.mxu0 0.0
    %1681 = vmatpush1.msra.mxu0 0.0
    %1682 = vmatprep.subr.mxu0 0.0
    %1683 = vmatpush1.msra.mxu0 0.0
    %1684 = vmatprep.subr.mxu0 0.0
    %1685 = vmatpush1.msra.mxu0 0.0
    %1686 = vmatprep.subr.mxu0 0.0
    %1687 = vmatpush1.msra.mxu0 0.0
    %1688 = vmatprep.subr.mxu0 0.0
    %1689 = vmatpush1.msra.mxu0 0.0
    %1690 = vmatprep.mubr.f32.mxu0 0.0
    %1691 = vmatmul.mubr.f32.gmra.mrb[0].mxu0 %v1508
    %v1692 = vpop.f32.mrb[0].mxu0
    %v1693 = vadd.f32 0.0, %v1692
    %v1694 = vpop.f32.mrb[0].mxu0
    %v1695 = vadd.f32 0.0, %v1694
    %1696 = vdwg.mxu0
    %v1697 = vadd.f32 %v1544, %v1622
    %v1698 = vadd.f32 %v1545, %v1624
    %v1699 = vadd.f32 %v1546, %v1693
    %v1700 = vadd.f32 %v1547, %v1695
    %1701 = vmatprep.subr.mxu0 %v754
    %1702 = vmatpush1.msra.mxu0 %v753
    %1703 = vmatprep.subr.mxu0 %v758
    %1704 = vmatpush1.msra.mxu0 %v757
    %1705 = vmatprep.subr.mxu0 %v762
    %1706 = vmatpush1.msra.mxu0 %v761
    %1707 = vmatprep.subr.mxu0 %v766
    %1708 = vmatpush1.msra.mxu0 %v765
    %1709 = vmatprep.subr.mxu0 %v770
    %1710 = vmatpush1.msra.mxu0 %v769
    %1711 = vmatprep.subr.mxu0 %v774
    %1712 = vmatpush1.msra.mxu0 %v773
    %1713 = vmatprep.subr.mxu0 %v778
    %1714 = vmatpush1.msra.mxu0 %v777
    %1715 = vmatprep.subr.mxu0 %v782
    %1716 = vmatpush1.msra.mxu0 %v781
    %1717 = vmatprep.subr.mxu0 %v786
    %1718 = vmatpush1.msra.mxu0 %v785
    %1719 = vmatprep.subr.mxu0 %v790
    %1720 = vmatpush1.msra.mxu0 %v789
    %1721 = vmatprep.subr.mxu0 %v794
    %1722 = vmatpush1.msra.mxu0 %v793
    %1723 = vmatprep.subr.mxu0 %v798
    %1724 = vmatpush1.msra.mxu0 %v797
    %1725 = vmatprep.subr.mxu0 %v802
    %1726 = vmatpush1.msra.mxu0 %v801
    %1727 = vmatprep.subr.mxu0 %v806
    %1728 = vmatpush1.msra.mxu0 %v805
    %1729 = vmatprep.subr.mxu0 %v810
    %1730 = vmatpush1.msra.mxu0 %v809
    %1731 = vmatprep.subr.mxu0 %v814
    %1732 = vmatpush1.msra.mxu0 %v813
    %1733 = vmatprep.subr.mxu0 0.0
    %1734 = vmatpush1.msra.mxu0 0.0
    %1735 = vmatprep.subr.mxu0 0.0
    %1736 = vmatpush1.msra.mxu0 0.0
    %1737 = vmatprep.subr.mxu0 0.0
    %1738 = vmatpush1.msra.mxu0 0.0
    %1739 = vmatprep.subr.mxu0 0.0
    %1740 = vmatpush1.msra.mxu0 0.0
    %1741 = vmatprep.subr.mxu0 0.0
    %1742 = vmatpush1.msra.mxu0 0.0
    %1743 = vmatprep.subr.mxu0 0.0
    %1744 = vmatpush1.msra.mxu0 0.0
    %1745 = vmatprep.subr.mxu0 0.0
    %1746 = vmatpush1.msra.mxu0 0.0
    %1747 = vmatprep.subr.mxu0 0.0
    %1748 = vmatpush1.msra.mxu0 0.0
    %1749 = vmatprep.subr.mxu0 0.0
    %1750 = vmatpush1.msra.mxu0 0.0
    %1751 = vmatprep.subr.mxu0 0.0
    %1752 = vmatpush1.msra.mxu0 0.0
    %1753 = vmatprep.subr.mxu0 0.0
    %1754 = vmatpush1.msra.mxu0 0.0
    %1755 = vmatprep.subr.mxu0 0.0
    %1756 = vmatpush1.msra.mxu0 0.0
    %1757 = vmatprep.subr.mxu0 0.0
    %1758 = vmatpush1.msra.mxu0 0.0
    %1759 = vmatprep.subr.mxu0 0.0
    %1760 = vmatpush1.msra.mxu0 0.0
    %1761 = vmatprep.subr.mxu0 0.0
    %1762 = vmatpush1.msra.mxu0 0.0
    %1763 = vmatprep.subr.mxu0 0.0
    %1764 = vmatpush1.msra.mxu0 0.0
    %1765 = vmatprep.mubr.f32.mxu0 0.0
    %1766 = vmatmul.mubr.f32.gmra.mrb[0].mxu0 %v1532
    %v1767 = vpop.f32.mrb[0].mxu0
    %v1768 = vadd.f32 0.0, %v1767
    %v1769 = vpop.f32.mrb[0].mxu0
    %v1770 = vadd.f32 0.0, %v1769
    %1771 = vdwg.mxu0
    %1772 = vmatprep.subr.mxu0 %v756
    %1773 = vmatpush1.msra.mxu0 %v755
    %1774 = vmatprep.subr.mxu0 %v760
    %1775 = vmatpush1.msra.mxu0 %v759
    %1776 = vmatprep.subr.mxu0 %v764
    %1777 = vmatpush1.msra.mxu0 %v763
    %1778 = vmatprep.subr.mxu0 %v768
    %1779 = vmatpush1.msra.mxu0 %v767
    %1780 = vmatprep.subr.mxu0 %v772
    %1781 = vmatpush1.msra.mxu0 %v771
    %1782 = vmatprep.subr.mxu0 %v776
    %1783 = vmatpush1.msra.mxu0 %v775
    %1784 = vmatprep.subr.mxu0 %v780
    %1785 = vmatpush1.msra.mxu0 %v779
    %1786 = vmatprep.subr.mxu0 %v784
    %1787 = vmatpush1.msra.mxu0 %v783
    %1788 = vmatprep.subr.mxu0 %v788
    %1789 = vmatpush1.msra.mxu0 %v787
    %1790 = vmatprep.subr.mxu0 %v792
    %1791 = vmatpush1.msra.mxu0 %v791
    %1792 = vmatprep.subr.mxu0 %v796
    %1793 = vmatpush1.msra.mxu0 %v795
    %1794 = vmatprep.subr.mxu0 %v800
    %1795 = vmatpush1.msra.mxu0 %v799
    %1796 = vmatprep.subr.mxu0 %v804
    %1797 = vmatpush1.msra.mxu0 %v803
    %1798 = vmatprep.subr.mxu0 %v808
    %1799 = vmatpush1.msra.mxu0 %v807
    %1800 = vmatprep.subr.mxu0 %v812
    %1801 = vmatpush1.msra.mxu0 %v811
    %1802 = vmatprep.subr.mxu0 %v816
    %1803 = vmatpush1.msra.mxu0 %v815
    %1804 = vmatprep.subr.mxu0 0.0
    %1805 = vmatpush1.msra.mxu0 0.0
    %1806 = vmatprep.subr.mxu0 0.0
    %1807 = vmatpush1.msra.mxu0 0.0
    %1808 = vmatprep.subr.mxu0 0.0
    %1809 = vmatpush1.msra.mxu0 0.0
    %1810 = vmatprep.subr.mxu0 0.0
    %1811 = vmatpush1.msra.mxu0 0.0
    %1812 = vmatprep.subr.mxu0 0.0
    %1813 = vmatpush1.msra.mxu0 0.0
    %1814 = vmatprep.subr.mxu0 0.0
    %1815 = vmatpush1.msra.mxu0 0.0
    %1816 = vmatprep.subr.mxu0 0.0
    %1817 = vmatpush1.msra.mxu0 0.0
    %1818 = vmatprep.subr.mxu0 0.0
    %1819 = vmatpush1.msra.mxu0 0.0
    %1820 = vmatprep.subr.mxu0 0.0
    %1821 = vmatpush1.msra.mxu0 0.0
    %1822 = vmatprep.subr.mxu0 0.0
    %1823 = vmatpush1.msra.mxu0 0.0
    %1824 = vmatprep.subr.mxu0 0.0
    %1825 = vmatpush1.msra.mxu0 0.0
    %1826 = vmatprep.subr.mxu0 0.0
    %1827 = vmatpush1.msra.mxu0 0.0
    %1828 = vmatprep.subr.mxu0 0.0
    %1829 = vmatpush1.msra.mxu0 0.0
    %1830 = vmatprep.subr.mxu0 0.0
    %1831 = vmatpush1.msra.mxu0 0.0
    %1832 = vmatprep.subr.mxu0 0.0
    %1833 = vmatpush1.msra.mxu0 0.0
    %1834 = vmatprep.subr.mxu0 0.0
    %1835 = vmatpush1.msra.mxu0 0.0
    %1836 = vmatprep.mubr.f32.mxu0 0.0
    %1837 = vmatmul.mubr.f32.gmra.mrb[0].mxu0 %v1532
    %v1838 = vpop.f32.mrb[0].mxu0
    %v1839 = vadd.f32 0.0, %v1838
    %v1840 = vpop.f32.mrb[0].mxu0
    %v1841 = vadd.f32 0.0, %v1840
    %1842 = vdwg.mxu0
    %v1843 = vadd.f32 %v1551, %v1768
    %v1844 = vadd.f32 %v1552, %v1770
    %v1845 = vadd.f32 %v1553, %v1839
    %v1846 = vadd.f32 %v1554, %v1841
    %v1847 = vxor.u32 %v1697, 2147483648
    %v1848 = vmul.f32 %v1847, 1.442695
    %v1849 = vpow.pop %v1848
    %v1850 = vadd.f32 %v1849, 1.0
    %v1851 = vrcp.pop %v1850
    %v1852 = vmul.f32 1.0, %v1851
    %v1853 = vxor.u32 %v1698, 2147483648
    %v1854 = vmul.f32 %v1853, 1.442695
    %v1855 = vpow.pop %v1854
    %v1856 = vadd.f32 %v1855, 1.0
    %v1857 = vrcp.pop %v1856
    %v1858 = vmul.f32 1.0, %v1857
    %v1859 = vtanh.pop %v1699
    %v1860 = vxor.u32 %v1700, 2147483648
    %v1861 = vmul.f32 %v1860, 1.442695
    %v1862 = vpow.pop %v1861
    %v1863 = vadd.f32 %v1862, 1.0
    %v1864 = vrcp.pop %v1863
    %v1865 = vmul.f32 1.0, %v1864
    %v1866 = vmul.f32 %v1858, %v1506
    %v1867 = vmul.f32 %v1852, %v1859
    %v1868 = vadd.f32 %v1866, %v1867
    %v1869 = vtanh.pop %v1868
    %v1870 = vmul.f32 %v1865, %v1869
    %v1871 = vxor.u32 %v1843, 2147483648
    %v1872 = vmul.f32 %v1871, 1.442695
    %v1873 = vpow.pop %v1872
    %v1874 = vadd.f32 %v1873, 1.0
    %v1875 = vrcp.pop %v1874
    %v1876 = vmul.f32 1.0, %v1875
    %v1877 = vxor.u32 %v1844, 2147483648
    %v1878 = vmul.f32 %v1877, 1.442695
    %v1879 = vpow.pop %v1878
    %v1880 = vadd.f32 %v1879, 1.0
    %v1881 = vrcp.pop %v1880
    %v1882 = vmul.f32 1.0, %v1881
    %v1883 = vtanh.pop %v1845
    %v1884 = vxor.u32 %v1846, 2147483648
    %v1885 = vmul.f32 %v1884, 1.442695
    %v1886 = vpow.pop %v1885
    %v1887 = vadd.f32 %v1886, 1.0
    %v1888 = vrcp.pop %v1887
    %v1889 = vmul.f32 1.0, %v1888
    %v1890 = vmul.f32 %v1882, %v1530
    %v1891 = vmul.f32 %v1876, %v1883
    %v1892 = vadd.f32 %v1890, %v1891
    %v1893 = vtanh.pop %v1892
    %v1894 = vmul.f32 %v1889, %v1893
    %s1895 = smul.u32 2, 2
    %s1896 = smul.addr %s1895, 8
    %s1897 = scalar_lea.vmem [#allocation3], %s1896
    %1898 = vst [vmem:[%s1897] sm:$0xff] %v1870
    %s1899 = smul.u32 5, 2
    %s1900 = smul.addr %s1899, 8
    %s1901 = scalar_lea.vmem [#allocation3], %s1900
    %1902 = vst [vmem:[%s1901 + $0x8] sm:$0xff] %v1894
    %s1903 = smul.u32 3, 8
    %s1904 = smul.addr %s1903, 8
    %s1905 = scalar_lea.vmem [#allocation2], %s1904
    %v1906 = vld [vmem:[%s1905] sm:$0xff]
    %v1907 = vld [vmem:[%s1905 + $0x8] sm:$0xff]
    %v1908 = vld [vmem:[%s1905 + $0x10] sm:$0xff]
    %v1909 = vld [vmem:[%s1905 + $0x18] sm:$0xff]
    %s1910 = smul.u32 4, 8
    %s1911 = smul.addr %s1910, 8
    %s1912 = scalar_lea.vmem [#allocation2], %s1911
    %v1913 = vld [vmem:[%s1912 + $0x20] sm:$0xff]
    %v1914 = vld [vmem:[%s1912 + $0x28] sm:$0xff]
    %v1915 = vld [vmem:[%s1912 + $0x30] sm:$0xff]
    %v1916 = vld [vmem:[%s1912 + $0x38] sm:$0xff]
    %1917 = vmatprep.subr.mxu0 %v690
    %1918 = vmatpush1.msra.mxu0 %v689
    %1919 = vmatprep.subr.mxu0 %v694
    %1920 = vmatpush1.msra.mxu0 %v693
    %1921 = vmatprep.subr.mxu0 %v698
    %1922 = vmatpush1.msra.mxu0 %v697
    %1923 = vmatprep.subr.mxu0 %v702
    %1924 = vmatpush1.msra.mxu0 %v701
    %1925 = vmatprep.subr.mxu0 %v706
    %1926 = vmatpush1.msra.mxu0 %v705
    %1927 = vmatprep.subr.mxu0 %v710
    %1928 = vmatpush1.msra.mxu0 %v709
    %1929 = vmatprep.subr.mxu0 %v714
    %1930 = vmatpush1.msra.mxu0 %v713
    %1931 = vmatprep.subr.mxu0 %v718
    %1932 = vmatpush1.msra.mxu0 %v717
    %1933 = vmatprep.subr.mxu0 %v722
    %1934 = vmatpush1.msra.mxu0 %v721
    %1935 = vmatprep.subr.mxu0 %v726
    %1936 = vmatpush1.msra.mxu0 %v725
    %1937 = vmatprep.subr.mxu0 %v730
    %1938 = vmatpush1.msra.mxu0 %v729
    %1939 = vmatprep.subr.mxu0 %v734
    %1940 = vmatpush1.msra.mxu0 %v733
    %1941 = vmatprep.subr.mxu0 %v738
    %1942 = vmatpush1.msra.mxu0 %v737
    %1943 = vmatprep.subr.mxu0 %v742
    %1944 = vmatpush1.msra.mxu0 %v741
    %1945 = vmatprep.subr.mxu0 %v746
    %1946 = vmatpush1.msra.mxu0 %v745
    %1947 = vmatprep.subr.mxu0 %v750
    %1948 = vmatpush1.msra.mxu0 %v749
    %1949 = vmatprep.subr.mxu0 0.0
    %1950 = vmatpush1.msra.mxu0 0.0
    %1951 = vmatprep.subr.mxu0 0.0
    %1952 = vmatpush1.msra.mxu0 0.0
    %1953 = vmatprep.subr.mxu0 0.0
    %1954 = vmatpush1.msra.mxu0 0.0
    %1955 = vmatprep.subr.mxu0 0.0
    %1956 = vmatpush1.msra.mxu0 0.0
    %1957 = vmatprep.subr.mxu0 0.0
    %1958 = vmatpush1.msra.mxu0 0.0
    %1959 = vmatprep.subr.mxu0 0.0
    %1960 = vmatpush1.msra.mxu0 0.0
    %1961 = vmatprep.subr.mxu0 0.0
    %1962 = vmatpush1.msra.mxu0 0.0
    %1963 = vmatprep.subr.mxu0 0.0
    %1964 = vmatpush1.msra.mxu0 0.0
    %1965 = vmatprep.subr.mxu0 0.0
    %1966 = vmatpush1.msra.mxu0 0.0
    %1967 = vmatprep.subr.mxu0 0.0
    %1968 = vmatpush1.msra.mxu0 0.0
    %1969 = vmatprep.subr.mxu0 0.0
    %1970 = vmatpush1.msra.mxu0 0.0
    %1971 = vmatprep.subr.mxu0 0.0
    %1972 = vmatpush1.msra.mxu0 0.0
    %1973 = vmatprep.subr.mxu0 0.0
    %1974 = vmatpush1.msra.mxu0 0.0
    %1975 = vmatprep.subr.mxu0 0.0
    %1976 = vmatpush1.msra.mxu0 0.0
    %1977 = vmatprep.subr.mxu0 0.0
    %1978 = vmatpush1.msra.mxu0 0.0
    %1979 = vmatprep.subr.mxu0 0.0
    %1980 = vmatpush1.msra.mxu0 0.0
    %1981 = vmatprep.mubr.f32.mxu0 0.0
    %1982 = vmatmul.mubr.f32.gmra.mrb[0].mxu0 %v1870
    %v1983 = vpop.f32.mrb[0].mxu0
    %v1984 = vadd.f32 0.0, %v1983
    %v1985 = vpop.f32.mrb[0].mxu0
    %v1986 = vadd.f32 0.0, %v1985
    %1987 = vdwg.mxu0
    %1988 = vmatprep.subr.mxu0 %v692
    %1989 = vmatpush1.msra.mxu0 %v691
    %1990 = vmatprep.subr.mxu0 %v696
    %1991 = vmatpush1.msra.mxu0 %v695
    %1992 = vmatprep.subr.mxu0 %v700
    %1993 = vmatpush1.msra.mxu0 %v699
    %1994 = vmatprep.subr.mxu0 %v704
    %1995 = vmatpush1.msra.mxu0 %v703
    %1996 = vmatprep.subr.mxu0 %v708
    %1997 = vmatpush1.msra.mxu0 %v707
    %1998 = vmatprep.subr.mxu0 %v712
    %1999 = vmatpush1.msra.mxu0 %v711
    %2000 = vmatprep.subr.mxu0 %v716
    %2001 = vmatpush1.msra.mxu0 %v715
    %2002 = vmatprep.subr.mxu0 %v720
    %2003 = vmatpush1.msra.mxu0 %v719
    %2004 = vmatprep.subr.mxu0 %v724
    %2005 = vmatpush1.msra.mxu0 %v723
    %2006 = vmatprep.subr.mxu0 %v728
    %2007 = vmatpush1.msra.mxu0 %v727
    %2008 = vmatprep.subr.mxu0 %v732
    %2009 = vmatpush1.msra.mxu0 %v731
    %2010 = vmatprep.subr.mxu0 %v736
    %2011 = vmatpush1.msra.mxu0 %v735
    %2012 = vmatprep.subr.mxu0 %v740
    %2013 = vmatpush1.msra.mxu0 %v739
    %2014 = vmatprep.subr.mxu0 %v744
    %2015 = vmatpush1.msra.mxu0 %v743
    %2016 = vmatprep.subr.mxu0 %v748
    %2017 = vmatpush1.msra.mxu0 %v747
    %2018 = vmatprep.subr.mxu0 %v752
    %2019 = vmatpush1.msra.mxu0 %v751
    %2020 = vmatprep.subr.mxu0 0.0
    %2021 = vmatpush1.msra.mxu0 0.0
    %2022 = vmatprep.subr.mxu0 0.0
    %2023 = vmatpush1.msra.mxu0 0.0
    %2024 = vmatprep.subr.mxu0 0.0
    %2025 = vmatpush1.msra.mxu0 0.0
    %2026 = vmatprep.subr.mxu0 0.0
    %2027 = vmatpush1.msra.mxu0 0.0
    %2028 = vmatprep.subr.mxu0 0.0
    %2029 = vmatpush1.msra.mxu0 0.0
    %2030 = vmatprep.subr.mxu0 0.0
    %2031 = vmatpush1.msra.mxu0 0.0
    %2032 = vmatprep.subr.mxu0 0.0
    %2033 = vmatpush1.msra.mxu0 0.0
    %2034 = vmatprep.subr.mxu0 0.0
    %2035 = vmatpush1.msra.mxu0 0.0
    %2036 = vmatprep.subr.mxu0 0.0
    %2037 = vmatpush1.msra.mxu0 0.0
    %2038 = vmatprep.subr.mxu0 0.0
    %2039 = vmatpush1.msra.mxu0 0.0
    %2040 = vmatprep.subr.mxu0 0.0
    %2041 = vmatpush1.msra.mxu0 0.0
    %2042 = vmatprep.subr.mxu0 0.0
    %2043 = vmatpush1.msra.mxu0 0.0
    %2044 = vmatprep.subr.mxu0 0.0
    %2045 = vmatpush1.msra.mxu0 0.0
    %2046 = vmatprep.subr.mxu0 0.0
    %2047 = vmatpush1.msra.mxu0 0.0
    %2048 = vmatprep.subr.mxu0 0.0
    %2049 = vmatpush1.msra.mxu0 0.0
    %2050 = vmatprep.subr.mxu0 0.0
    %2051 = vmatpush1.msra.mxu0 0.0
    %2052 = vmatprep.mubr.f32.mxu0 0.0
    %2053 = vmatmul.mubr.f32.gmra.mrb[0].mxu0 %v1870
    %v2054 = vpop.f32.mrb[0].mxu0
    %v2055 = vadd.f32 0.0, %v2054
    %v2056 = vpop.f32.mrb[0].mxu0
    %v2057 = vadd.f32 0.0, %v2056
    %2058 = vdwg.mxu0
    %v2059 = vadd.f32 %v1906, %v1984
    %v2060 = vadd.f32 %v1907, %v1986
    %v2061 = vadd.f32 %v1908, %v2055
    %v2062 = vadd.f32 %v1909, %v2057
    %2063 = vmatprep.subr.mxu0 %v754
    %2064 = vmatpush1.msra.mxu0 %v753
    %2065 = vmatprep.subr.mxu0 %v758
    %2066 = vmatpush1.msra.mxu0 %v757
    %2067 = vmatprep.subr.mxu0 %v762
    %2068 = vmatpush1.msra.mxu0 %v761
    %2069 = vmatprep.subr.mxu0 %v766
    %2070 = vmatpush1.msra.mxu0 %v765
    %2071 = vmatprep.subr.mxu0 %v770
    %2072 = vmatpush1.msra.mxu0 %v769
    %2073 = vmatprep.subr.mxu0 %v774
    %2074 = vmatpush1.msra.mxu0 %v773
    %2075 = vmatprep.subr.mxu0 %v778
    %2076 = vmatpush1.msra.mxu0 %v777
    %2077 = vmatprep.subr.mxu0 %v782
    %2078 = vmatpush1.msra.mxu0 %v781
    %2079 = vmatprep.subr.mxu0 %v786
    %2080 = vmatpush1.msra.mxu0 %v785
    %2081 = vmatprep.subr.mxu0 %v790
    %2082 = vmatpush1.msra.mxu0 %v789
    %2083 = vmatprep.subr.mxu0 %v794
    %2084 = vmatpush1.msra.mxu0 %v793
    %2085 = vmatprep.subr.mxu0 %v798
    %2086 = vmatpush1.msra.mxu0 %v797
    %2087 = vmatprep.subr.mxu0 %v802
    %2088 = vmatpush1.msra.mxu0 %v801
    %2089 = vmatprep.subr.mxu0 %v806
    %2090 = vmatpush1.msra.mxu0 %v805
    %2091 = vmatprep.subr.mxu0 %v810
    %2092 = vmatpush1.msra.mxu0 %v809
    %2093 = vmatprep.subr.mxu0 %v814
    %2094 = vmatpush1.msra.mxu0 %v813
    %2095 = vmatprep.subr.mxu0 0.0
    %2096 = vmatpush1.msra.mxu0 0.0
    %2097 = vmatprep.subr.mxu0 0.0
    %2098 = vmatpush1.msra.mxu0 0.0
    %2099 = vmatprep.subr.mxu0 0.0
    %2100 = vmatpush1.msra.mxu0 0.0
    %2101 = vmatprep.subr.mxu0 0.0
    %2102 = vmatpush1.msra.mxu0 0.0
    %2103 = vmatprep.subr.mxu0 0.0
    %2104 = vmatpush1.msra.mxu0 0.0
    %2105 = vmatprep.subr.mxu0 0.0
    %2106 = vmatpush1.msra.mxu0 0.0
    %2107 = vmatprep.subr.mxu0 0.0
    %2108 = vmatpush1.msra.mxu0 0.0
    %2109 = vmatprep.subr.mxu0 0.0
    %2110 = vmatpush1.msra.mxu0 0.0
    %2111 = vmatprep.subr.mxu0 0.0
    %2112 = vmatpush1.msra.mxu0 0.0
    %2113 = vmatprep.subr.mxu0 0.0
    %2114 = vmatpush1.msra.mxu0 0.0
    %2115 = vmatprep.subr.mxu0 0.0
    %2116 = vmatpush1.msra.mxu0 0.0
    %2117 = vmatprep.subr.mxu0 0.0
    %2118 = vmatpush1.msra.mxu0 0.0
    %2119 = vmatprep.subr.mxu0 0.0
    %2120 = vmatpush1.msra.mxu0 0.0
    %2121 = vmatprep.subr.mxu0 0.0
    %2122 = vmatpush1.msra.mxu0 0.0
    %2123 = vmatprep.subr.mxu0 0.0
    %2124 = vmatpush1.msra.mxu0 0.0
    %2125 = vmatprep.subr.mxu0 0.0
    %2126 = vmatpush1.msra.mxu0 0.0
    %2127 = vmatprep.mubr.f32.mxu0 0.0
    %2128 = vmatmul.mubr.f32.gmra.mrb[0].mxu0 %v1894
    %v2129 = vpop.f32.mrb[0].mxu0
    %v2130 = vadd.f32 0.0, %v2129
    %v2131 = vpop.f32.mrb[0].mxu0
    %v2132 = vadd.f32 0.0, %v2131
    %2133 = vdwg.mxu0
    %2134 = vmatprep.subr.mxu0 %v756
    %2135 = vmatpush1.msra.mxu0 %v755
    %2136 = vmatprep.subr.mxu0 %v760
    %2137 = vmatpush1.msra.mxu0 %v759
    %2138 = vmatprep.subr.mxu0 %v764
    %2139 = vmatpush1.msra.mxu0 %v763
    %2140 = vmatprep.subr.mxu0 %v768
    %2141 = vmatpush1.msra.mxu0 %v767
    %2142 = vmatprep.subr.mxu0 %v772
    %2143 = vmatpush1.msra.mxu0 %v771
    %2144 = vmatprep.subr.mxu0 %v776
    %2145 = vmatpush1.msra.mxu0 %v775
    %2146 = vmatprep.subr.mxu0 %v780
    %2147 = vmatpush1.msra.mxu0 %v779
    %2148 = vmatprep.subr.mxu0 %v784
    %2149 = vmatpush1.msra.mxu0 %v783
    %2150 = vmatprep.subr.mxu0 %v788
    %2151 = vmatpush1.msra.mxu0 %v787
    %2152 = vmatprep.subr.mxu0 %v792
    %2153 = vmatpush1.msra.mxu0 %v791
    %2154 = vmatprep.subr.mxu0 %v796
    %2155 = vmatpush1.msra.mxu0 %v795
    %2156 = vmatprep.subr.mxu0 %v800
    %2157 = vmatpush1.msra.mxu0 %v799
    %2158 = vmatprep.subr.mxu0 %v804
    %2159 = vmatpush1.msra.mxu0 %v803
    %2160 = vmatprep.subr.mxu0 %v808
    %2161 = vmatpush1.msra.mxu0 %v807
    %2162 = vmatprep.subr.mxu0 %v812
    %2163 = vmatpush1.msra.mxu0 %v811
    %2164 = vmatprep.subr.mxu0 %v816
    %2165 = vmatpush1.msra.mxu0 %v815
    %2166 = vmatprep.subr.mxu0 0.0
    %2167 = vmatpush1.msra.mxu0 0.0
    %2168 = vmatprep.subr.mxu0 0.0
    %2169 = vmatpush1.msra.mxu0 0.0
    %2170 = vmatprep.subr.mxu0 0.0
    %2171 = vmatpush1.msra.mxu0 0.0
    %2172 = vmatprep.subr.mxu0 0.0
    %2173 = vmatpush1.msra.mxu0 0.0
    %2174 = vmatprep.subr.mxu0 0.0
    %2175 = vmatpush1.msra.mxu0 0.0
    %2176 = vmatprep.subr.mxu0 0.0
    %2177 = vmatpush1.msra.mxu0 0.0
    %2178 = vmatprep.subr.mxu0 0.0
    %2179 = vmatpush1.msra.mxu0 0.0
    %2180 = vmatprep.subr.mxu0 0.0
    %2181 = vmatpush1.msra.mxu0 0.0
    %2182 = vmatprep.subr.mxu0 0.0
    %2183 = vmatpush1.msra.mxu0 0.0
    %2184 = vmatprep.subr.mxu0 0.0
    %2185 = vmatpush1.msra.mxu0 0.0
    %2186 = vmatprep.subr.mxu0 0.0
    %2187 = vmatpush1.msra.mxu0 0.0
    %2188 = vmatprep.subr.mxu0 0.0
    %2189 = vmatpush1.msra.mxu0 0.0
    %2190 = vmatprep.subr.mxu0 0.0
    %2191 = vmatpush1.msra.mxu0 0.0
    %2192 = vmatprep.subr.mxu0 0.0
    %2193 = vmatpush1.msra.mxu0 0.0
    %2194 = vmatprep.subr.mxu0 0.0
    %2195 = vmatpush1.msra.mxu0 0.0
    %2196 = vmatprep.subr.mxu0 0.0
    %2197 = vmatpush1.msra.mxu0 0.0
    %2198 = vmatprep.mubr.f32.mxu0 0.0
    %2199 = vmatmul.mubr.f32.gmra.mrb[0].mxu0 %v1894
    %v2200 = vpop.f32.mrb[0].mxu0
    %v2201 = vadd.f32 0.0, %v2200
    %v2202 = vpop.f32.mrb[0].mxu0
    %v2203 = vadd.f32 0.0, %v2202
    %2204 = vdwg.mxu0
    %v2205 = vadd.f32 %v1913, %v2130
    %v2206 = vadd.f32 %v1914, %v2132
    %v2207 = vadd.f32 %v1915, %v2201
    %v2208 = vadd.f32 %v1916, %v2203
    %v2209 = vxor.u32 %v2059, 2147483648
    %v2210 = vmul.f32 %v2209, 1.442695
    %v2211 = vpow.pop %v2210
    %v2212 = vadd.f32 %v2211, 1.0
    %v2213 = vrcp.pop %v2212
    %v2214 = vmul.f32 1.0, %v2213
    %v2215 = vxor.u32 %v2060, 2147483648
    %v2216 = vmul.f32 %v2215, 1.442695
    %v2217 = vpow.pop %v2216
    %v2218 = vadd.f32 %v2217, 1.0
    %v2219 = vrcp.pop %v2218
    %v2220 = vmul.f32 1.0, %v2219
    %v2221 = vtanh.pop %v2061
    %v2222 = vxor.u32 %v2062, 2147483648
    %v2223 = vmul.f32 %v2222, 1.442695
    %v2224 = vpow.pop %v2223
    %v2225 = vadd.f32 %v2224, 1.0
    %v2226 = vrcp.pop %v2225
    %v2227 = vmul.f32 1.0, %v2226
    %v2228 = vmul.f32 %v2220, %v1868
    %v2229 = vmul.f32 %v2214, %v2221
    %v2230 = vadd.f32 %v2228, %v2229
    %v2231 = vtanh.pop %v2230
    %v2232 = vmul.f32 %v2227, %v2231
    %v2233 = vxor.u32 %v2205, 2147483648
    %v2234 = vmul.f32 %v2233, 1.442695
    %v2235 = vpow.pop %v2234
    %v2236 = vadd.f32 %v2235, 1.0
    %v2237 = vrcp.pop %v2236
    %v2238 = vmul.f32 1.0, %v2237
    %v2239 = vxor.u32 %v2206, 2147483648
    %v2240 = vmul.f32 %v2239, 1.442695
    %v2241 = vpow.pop %v2240
    %v2242 = vadd.f32 %v2241, 1.0
    %v2243 = vrcp.pop %v2242
    %v2244 = vmul.f32 1.0, %v2243
    %v2245 = vtanh.pop %v2207
    %v2246 = vxor.u32 %v2208, 2147483648
    %v2247 = vmul.f32 %v2246, 1.442695
    %v2248 = vpow.pop %v2247
    %v2249 = vadd.f32 %v2248, 1.0
    %v2250 = vrcp.pop %v2249
    %v2251 = vmul.f32 1.0, %v2250
    %v2252 = vmul.f32 %v2244, %v1892
    %v2253 = vmul.f32 %v2238, %v2245
    %v2254 = vadd.f32 %v2252, %v2253
    %v2255 = vtanh.pop %v2254
    %v2256 = vmul.f32 %v2251, %v2255
    %s2257 = smul.u32 3, 2
    %s2258 = smul.addr %s2257, 8
    %s2259 = scalar_lea.vmem [#allocation3], %s2258
    %2260 = vst [vmem:[%s2259] sm:$0xff] %v2232
    %s2261 = smul.u32 4, 2
    %s2262 = smul.addr %s2261, 8
    %s2263 = scalar_lea.vmem [#allocation3], %s2262
    %2264 = vst [vmem:[%s2263 + $0x8] sm:$0xff] %v2256
    %v2265 = vld [vmem:[%s1912] sm:$0xff]
    %v2266 = vld [vmem:[%s1912 + $0x8] sm:$0xff]
    %v2267 = vld [vmem:[%s1912 + $0x10] sm:$0xff]
    %v2268 = vld [vmem:[%s1912 + $0x18] sm:$0xff]
    %v2269 = vld [vmem:[%s1905 + $0x20] sm:$0xff]
    %v2270 = vld [vmem:[%s1905 + $0x28] sm:$0xff]
    %v2271 = vld [vmem:[%s1905 + $0x30] sm:$0xff]
    %v2272 = vld [vmem:[%s1905 + $0x38] sm:$0xff]
    %2273 = vmatprep.subr.mxu0 %v690
    %2274 = vmatpush1.msra.mxu0 %v689
    %2275 = vmatprep.subr.mxu0 %v694
    %2276 = vmatpush1.msra.mxu0 %v693
    %2277 = vmatprep.subr.mxu0 %v698
    %2278 = vmatpush1.msra.mxu0 %v697
    %2279 = vmatprep.subr.mxu0 %v702
    %2280 = vmatpush1.msra.mxu0 %v701
    %2281 = vmatprep.subr.mxu0 %v706
    %2282 = vmatpush1.msra.mxu0 %v705
    %2283 = vmatprep.subr.mxu0 %v710
    %2284 = vmatpush1.msra.mxu0 %v709
    %2285 = vmatprep.subr.mxu0 %v714
    %2286 = vmatpush1.msra.mxu0 %v713
    %2287 = vmatprep.subr.mxu0 %v718
    %2288 = vmatpush1.msra.mxu0 %v717
    %2289 = vmatprep.subr.mxu0 %v722
    %2290 = vmatpush1.msra.mxu0 %v721
    %2291 = vmatprep.subr.mxu0 %v726
    %2292 = vmatpush1.msra.mxu0 %v725
    %2293 = vmatprep.subr.mxu0 %v730
    %2294 = vmatpush1.msra.mxu0 %v729
    %2295 = vmatprep.subr.mxu0 %v734
    %2296 = vmatpush1.msra.mxu0 %v733
    %2297 = vmatprep.subr.mxu0 %v738
    %2298 = vmatpush1.msra.mxu0 %v737
    %2299 = vmatprep.subr.mxu0 %v742
    %2300 = vmatpush1.msra.mxu0 %v741
    %2301 = vmatprep.subr.mxu0 %v746
    %2302 = vmatpush1.msra.mxu0 %v745
    %2303 = vmatprep.subr.mxu0 %v750
    %2304 = vmatpush1.msra.mxu0 %v749
    %2305 = vmatprep.subr.mxu0 0.0
    %2306 = vmatpush1.msra.mxu0 0.0
    %2307 = vmatprep.subr.mxu0 0.0
    %2308 = vmatpush1.msra.mxu0 0.0
    %2309 = vmatprep.subr.mxu0 0.0
    %2310 = vmatpush1.msra.mxu0 0.0
    %2311 = vmatprep.subr.mxu0 0.0
    %2312 = vmatpush1.msra.mxu0 0.0
    %2313 = vmatprep.subr.mxu0 0.0
    %2314 = vmatpush1.msra.mxu0 0.0
    %2315 = vmatprep.subr.mxu0 0.0
    %2316 = vmatpush1.msra.mxu0 0.0
    %2317 = vmatprep.subr.mxu0 0.0
    %2318 = vmatpush1.msra.mxu0 0.0
    %2319 = vmatprep.subr.mxu0 0.0
    %2320 = vmatpush1.msra.mxu0 0.0
    %2321 = vmatprep.subr.mxu0 0.0
    %2322 = vmatpush1.msra.mxu0 0.0
    %2323 = vmatprep.subr.mxu0 0.0
    %2324 = vmatpush1.msra.mxu0 0.0
    %2325 = vmatprep.subr.mxu0 0.0
    %2326 = vmatpush1.msra.mxu0 0.0
    %2327 = vmatprep.subr.mxu0 0.0
    %2328 = vmatpush1.msra.mxu0 0.0
    %2329 = vmatprep.subr.mxu0 0.0
    %2330 = vmatpush1.msra.mxu0 0.0
    %2331 = vmatprep.subr.mxu0 0.0
    %2332 = vmatpush1.msra.mxu0 0.0
    %2333 = vmatprep.subr.mxu0 0.0
    %2334 = vmatpush1.msra.mxu0 0.0
    %2335 = vmatprep.subr.mxu0 0.0
    %2336 = vmatpush1.msra.mxu0 0.0
    %2337 = vmatprep.mubr.f32.mxu0 0.0
    %2338 = vmatmul.mubr.f32.gmra.mrb[0].mxu0 %v2232
    %v2339 = vpop.f32.mrb[0].mxu0
    %v2340 = vadd.f32 0.0, %v2339
    %v2341 = vpop.f32.mrb[0].mxu0
    %v2342 = vadd.f32 0.0, %v2341
    %2343 = vdwg.mxu0
    %2344 = vmatprep.subr.mxu0 %v692
    %2345 = vmatpush1.msra.mxu0 %v691
    %2346 = vmatprep.subr.mxu0 %v696
    %2347 = vmatpush1.msra.mxu0 %v695
    %2348 = vmatprep.subr.mxu0 %v700
    %2349 = vmatpush1.msra.mxu0 %v699
    %2350 = vmatprep.subr.mxu0 %v704
    %2351 = vmatpush1.msra.mxu0 %v703
    %2352 = vmatprep.subr.mxu0 %v708
    %2353 = vmatpush1.msra.mxu0 %v707
    %2354 = vmatprep.subr.mxu0 %v712
    %2355 = vmatpush1.msra.mxu0 %v711
    %2356 = vmatprep.subr.mxu0 %v716
    %2357 = vmatpush1.msra.mxu0 %v715
    %2358 = vmatprep.subr.mxu0 %v720
    %2359 = vmatpush1.msra.mxu0 %v719
    %2360 = vmatprep.subr.mxu0 %v724
    %2361 = vmatpush1.msra.mxu0 %v723
    %2362 = vmatprep.subr.mxu0 %v728
    %2363 = vmatpush1.msra.mxu0 %v727
    %2364 = vmatprep.subr.mxu0 %v732
    %2365 = vmatpush1.msra.mxu0 %v731
    %2366 = vmatprep.subr.mxu0 %v736
    %2367 = vmatpush1.msra.mxu0 %v735
    %2368 = vmatprep.subr.mxu0 %v740
    %2369 = vmatpush1.msra.mxu0 %v739
    %2370 = vmatprep.subr.mxu0 %v744
    %2371 = vmatpush1.msra.mxu0 %v743
    %2372 = vmatprep.subr.mxu0 %v748
    %2373 = vmatpush1.msra.mxu0 %v747
    %2374 = vmatprep.subr.mxu0 %v752
    %2375 = vmatpush1.msra.mxu0 %v751
    %2376 = vmatprep.subr.mxu0 0.0
    %2377 = vmatpush1.msra.mxu0 0.0
    %2378 = vmatprep.subr.mxu0 0.0
    %2379 = vmatpush1.msra.mxu0 0.0
    %2380 = vmatprep.subr.mxu0 0.0
    %2381 = vmatpush1.msra.mxu0 0.0
    %2382 = vmatprep.subr.mxu0 0.0
    %2383 = vmatpush1.msra.mxu0 0.0
    %2384 = vmatprep.subr.mxu0 0.0
    %2385 = vmatpush1.msra.mxu0 0.0
    %2386 = vmatprep.subr.mxu0 0.0
    %2387 = vmatpush1.msra.mxu0 0.0
    %2388 = vmatprep.subr.mxu0 0.0
    %2389 = vmatpush1.msra.mxu0 0.0
    %2390 = vmatprep.subr.mxu0 0.0
    %2391 = vmatpush1.msra.mxu0 0.0
    %2392 = vmatprep.subr.mxu0 0.0
    %2393 = vmatpush1.msra.mxu0 0.0
    %2394 = vmatprep.subr.mxu0 0.0
    %2395 = vmatpush1.msra.mxu0 0.0
    %2396 = vmatprep.subr.mxu0 0.0
    %2397 = vmatpush1.msra.mxu0 0.0
    %2398 = vmatprep.subr.mxu0 0.0
    %2399 = vmatpush1.msra.mxu0 0.0
    %2400 = vmatprep.subr.mxu0 0.0
    %2401 = vmatpush1.msra.mxu0 0.0
    %2402 = vmatprep.subr.mxu0 0.0
    %2403 = vmatpush1.msra.mxu0 0.0
    %2404 = vmatprep.subr.mxu0 0.0
    %2405 = vmatpush1.msra.mxu0 0.0
    %2406 = vmatprep.subr.mxu0 0.0
    %2407 = vmatpush1.msra.mxu0 0.0
    %2408 = vmatprep.mubr.f32.mxu0 0.0
    %2409 = vmatmul.mubr.f32.gmra.mrb[0].mxu0 %v2232
    %v2410 = vpop.f32.mrb[0].mxu0
    %v2411 = vadd.f32 0.0, %v2410
    %v2412 = vpop.f32.mrb[0].mxu0
    %v2413 = vadd.f32 0.0, %v2412
    %2414 = vdwg.mxu0
    %v2415 = vadd.f32 %v2265, %v2340
    %v2416 = vadd.f32 %v2266, %v2342
    %v2417 = vadd.f32 %v2267, %v2411
    %v2418 = vadd.f32 %v2268, %v2413
    %2419 = vmatprep.subr.mxu0 %v754
    %2420 = vmatpush1.msra.mxu0 %v753
    %2421 = vmatprep.subr.mxu0 %v758
    %2422 = vmatpush1.msra.mxu0 %v757
    %2423 = vmatprep.subr.mxu0 %v762
    %2424 = vmatpush1.msra.mxu0 %v761
    %2425 = vmatprep.subr.mxu0 %v766
    %2426 = vmatpush1.msra.mxu0 %v765
    %2427 = vmatprep.subr.mxu0 %v770
    %2428 = vmatpush1.msra.mxu0 %v769
    %2429 = vmatprep.subr.mxu0 %v774
    %2430 = vmatpush1.msra.mxu0 %v773
    %2431 = vmatprep.subr.mxu0 %v778
    %2432 = vmatpush1.msra.mxu0 %v777
    %2433 = vmatprep.subr.mxu0 %v782
    %2434 = vmatpush1.msra.mxu0 %v781
    %2435 = vmatprep.subr.mxu0 %v786
    %2436 = vmatpush1.msra.mxu0 %v785
    %2437 = vmatprep.subr.mxu0 %v790
    %2438 = vmatpush1.msra.mxu0 %v789
    %2439 = vmatprep.subr.mxu0 %v794
    %2440 = vmatpush1.msra.mxu0 %v793
    %2441 = vmatprep.subr.mxu0 %v798
    %2442 = vmatpush1.msra.mxu0 %v797
    %2443 = vmatprep.subr.mxu0 %v802
    %2444 = vmatpush1.msra.mxu0 %v801
    %2445 = vmatprep.subr.mxu0 %v806
    %2446 = vmatpush1.msra.mxu0 %v805
    %2447 = vmatprep.subr.mxu0 %v810
    %2448 = vmatpush1.msra.mxu0 %v809
    %2449 = vmatprep.subr.mxu0 %v814
    %2450 = vmatpush1.msra.mxu0 %v813
    %2451 = vmatprep.subr.mxu0 0.0
    %2452 = vmatpush1.msra.mxu0 0.0
    %2453 = vmatprep.subr.mxu0 0.0
    %2454 = vmatpush1.msra.mxu0 0.0
    %2455 = vmatprep.subr.mxu0 0.0
    %2456 = vmatpush1.msra.mxu0 0.0
    %2457 = vmatprep.subr.mxu0 0.0
    %2458 = vmatpush1.msra.mxu0 0.0
    %2459 = vmatprep.subr.mxu0 0.0
    %2460 = vmatpush1.msra.mxu0 0.0
    %2461 = vmatprep.subr.mxu0 0.0
    %2462 = vmatpush1.msra.mxu0 0.0
    %2463 = vmatprep.subr.mxu0 0.0
    %2464 = vmatpush1.msra.mxu0 0.0
    %2465 = vmatprep.subr.mxu0 0.0
    %2466 = vmatpush1.msra.mxu0 0.0
    %2467 = vmatprep.subr.mxu0 0.0
    %2468 = vmatpush1.msra.mxu0 0.0
    %2469 = vmatprep.subr.mxu0 0.0
    %2470 = vmatpush1.msra.mxu0 0.0
    %2471 = vmatprep.subr.mxu0 0.0
    %2472 = vmatpush1.msra.mxu0 0.0
    %2473 = vmatprep.subr.mxu0 0.0
    %2474 = vmatpush1.msra.mxu0 0.0
    %2475 = vmatprep.subr.mxu0 0.0
    %2476 = vmatpush1.msra.mxu0 0.0
    %2477 = vmatprep.subr.mxu0 0.0
    %2478 = vmatpush1.msra.mxu0 0.0
    %2479 = vmatprep.subr.mxu0 0.0
    %2480 = vmatpush1.msra.mxu0 0.0
    %2481 = vmatprep.subr.mxu0 0.0
    %2482 = vmatpush1.msra.mxu0 0.0
    %2483 = vmatprep.mubr.f32.mxu0 0.0
    %2484 = vmatmul.mubr.f32.gmra.mrb[0].mxu0 %v2256
    %v2485 = vpop.f32.mrb[0].mxu0
    %v2486 = vadd.f32 0.0, %v2485
    %v2487 = vpop.f32.mrb[0].mxu0
    %v2488 = vadd.f32 0.0, %v2487
    %2489 = vdwg.mxu0
    %2490 = vmatprep.subr.mxu0 %v756
    %2491 = vmatpush1.msra.mxu0 %v755
    %2492 = vmatprep.subr.mxu0 %v760
    %2493 = vmatpush1.msra.mxu0 %v759
    %2494 = vmatprep.subr.mxu0 %v764
    %2495 = vmatpush1.msra.mxu0 %v763
    %2496 = vmatprep.subr.mxu0 %v768
    %2497 = vmatpush1.msra.mxu0 %v767
    %2498 = vmatprep.subr.mxu0 %v772
    %2499 = vmatpush1.msra.mxu0 %v771
    %2500 = vmatprep.subr.mxu0 %v776
    %2501 = vmatpush1.msra.mxu0 %v775
    %2502 = vmatprep.subr.mxu0 %v780
    %2503 = vmatpush1.msra.mxu0 %v779
    %2504 = vmatprep.subr.mxu0 %v784
    %2505 = vmatpush1.msra.mxu0 %v783
    %2506 = vmatprep.subr.mxu0 %v788
    %2507 = vmatpush1.msra.mxu0 %v787
    %2508 = vmatprep.subr.mxu0 %v792
    %2509 = vmatpush1.msra.mxu0 %v791
    %2510 = vmatprep.subr.mxu0 %v796
    %2511 = vmatpush1.msra.mxu0 %v795
    %2512 = vmatprep.subr.mxu0 %v800
    %2513 = vmatpush1.msra.mxu0 %v799
    %2514 = vmatprep.subr.mxu0 %v804
    %2515 = vmatpush1.msra.mxu0 %v803
    %2516 = vmatprep.subr.mxu0 %v808
    %2517 = vmatpush1.msra.mxu0 %v807
    %2518 = vmatprep.subr.mxu0 %v812
    %2519 = vmatpush1.msra.mxu0 %v811
    %2520 = vmatprep.subr.mxu0 %v816
    %2521 = vmatpush1.msra.mxu0 %v815
    %2522 = vmatprep.subr.mxu0 0.0
    %2523 = vmatpush1.msra.mxu0 0.0
    %2524 = vmatprep.subr.mxu0 0.0
    %2525 = vmatpush1.msra.mxu0 0.0
    %2526 = vmatprep.subr.mxu0 0.0
    %2527 = vmatpush1.msra.mxu0 0.0
    %2528 = vmatprep.subr.mxu0 0.0
    %2529 = vmatpush1.msra.mxu0 0.0
    %2530 = vmatprep.subr.mxu0 0.0
    %2531 = vmatpush1.msra.mxu0 0.0
    %2532 = vmatprep.subr.mxu0 0.0
    %2533 = vmatpush1.msra.mxu0 0.0
    %2534 = vmatprep.subr.mxu0 0.0
    %2535 = vmatpush1.msra.mxu0 0.0
    %2536 = vmatprep.subr.mxu0 0.0
    %2537 = vmatpush1.msra.mxu0 0.0
    %2538 = vmatprep.subr.mxu0 0.0
    %2539 = vmatpush1.msra.mxu0 0.0
    %2540 = vmatprep.subr.mxu0 0.0
    %2541 = vmatpush1.msra.mxu0 0.0
    %2542 = vmatprep.subr.mxu0 0.0
    %2543 = vmatpush1.msra.mxu0 0.0
    %2544 = vmatprep.subr.mxu0 0.0
    %2545 = vmatpush1.msra.mxu0 0.0
    %2546 = vmatprep.subr.mxu0 0.0
    %2547 = vmatpush1.msra.mxu0 0.0
    %2548 = vmatprep.subr.mxu0 0.0
    %2549 = vmatpush1.msra.mxu0 0.0
    %2550 = vmatprep.subr.mxu0 0.0
    %2551 = vmatpush1.msra.mxu0 0.0
    %2552 = vmatprep.subr.mxu0 0.0
    %2553 = vmatpush1.msra.mxu0 0.0
    %2554 = vmatprep.mubr.f32.mxu0 0.0
    %2555 = vmatmul.mubr.f32.gmra.mrb[0].mxu0 %v2256
    %v2556 = vpop.f32.mrb[0].mxu0
    %v2557 = vadd.f32 0.0, %v2556
    %v2558 = vpop.f32.mrb[0].mxu0
    %v2559 = vadd.f32 0.0, %v2558
    %2560 = vdwg.mxu0
    %v2561 = vadd.f32 %v2269, %v2486
    %v2562 = vadd.f32 %v2270, %v2488
    %v2563 = vadd.f32 %v2271, %v2557
    %v2564 = vadd.f32 %v2272, %v2559
    %v2565 = vxor.u32 %v2415, 2147483648
    %v2566 = vmul.f32 %v2565, 1.442695
    %v2567 = vpow.pop %v2566
    %v2568 = vadd.f32 %v2567, 1.0
    %v2569 = vrcp.pop %v2568
    %v2570 = vmul.f32 1.0, %v2569
    %v2571 = vxor.u32 %v2416, 2147483648
    %v2572 = vmul.f32 %v2571, 1.442695
    %v2573 = vpow.pop %v2572
    %v2574 = vadd.f32 %v2573, 1.0
    %v2575 = vrcp.pop %v2574
    %v2576 = vmul.f32 1.0, %v2575
    %v2577 = vtanh.pop %v2417
    %v2578 = vxor.u32 %v2418, 2147483648
    %v2579 = vmul.f32 %v2578, 1.442695
    %v2580 = vpow.pop %v2579
    %v2581 = vadd.f32 %v2580, 1.0
    %v2582 = vrcp.pop %v2581
    %v2583 = vmul.f32 1.0, %v2582
    %v2584 = vmul.f32 %v2576, %v2230
    %v2585 = vmul.f32 %v2570, %v2577
    %v2586 = vadd.f32 %v2584, %v2585
    %v2587 = vtanh.pop %v2586
    %v2588 = vmul.f32 %v2583, %v2587
    %v2589 = vxor.u32 %v2561, 2147483648
    %v2590 = vmul.f32 %v2589, 1.442695
    %v2591 = vpow.pop %v2590
    %v2592 = vadd.f32 %v2591, 1.0
    %v2593 = vrcp.pop %v2592
    %v2594 = vmul.f32 1.0, %v2593
    %v2595 = vxor.u32 %v2562, 2147483648
    %v2596 = vmul.f32 %v2595, 1.442695
    %v2597 = vpow.pop %v2596
    %v2598 = vadd.f32 %v2597, 1.0
    %v2599 = vrcp.pop %v2598
    %v2600 = vmul.f32 1.0, %v2599
    %v2601 = vtanh.pop %v2563
    %v2602 = vxor.u32 %v2564, 2147483648
    %v2603 = vmul.f32 %v2602, 1.442695
    %v2604 = vpow.pop %v2603
    %v2605 = vadd.f32 %v2604, 1.0
    %v2606 = vrcp.pop %v2605
    %v2607 = vmul.f32 1.0, %v2606
    %v2608 = vmul.f32 %v2600, %v2254
    %v2609 = vmul.f32 %v2594, %v2601
    %v2610 = vadd.f32 %v2608, %v2609
    %v2611 = vtanh.pop %v2610
    %v2612 = vmul.f32 %v2607, %v2611
    %2613 = vst [vmem:[%s2263] sm:$0xff] %v2588
    %2614 = vst [vmem:[%s2259 + $0x8] sm:$0xff] %v2612
    %v2615 = vld [vmem:[%s1550] sm:$0xff]
    %v2616 = vld [vmem:[%s1550 + $0x8] sm:$0xff]
    %v2617 = vld [vmem:[%s1550 + $0x10] sm:$0xff]
    %v2618 = vld [vmem:[%s1550 + $0x18] sm:$0xff]
    %v2619 = vld [vmem:[%s1543 + $0x20] sm:$0xff]
    %v2620 = vld [vmem:[%s1543 + $0x28] sm:$0xff]
    %v2621 = vld [vmem:[%s1543 + $0x30] sm:$0xff]
    %v2622 = vld [vmem:[%s1543 + $0x38] sm:$0xff]
    %2623 = vmatprep.subr.mxu0 %v690
    %2624 = vmatpush1.msra.mxu0 %v689
    %2625 = vmatprep.subr.mxu0 %v694
    %2626 = vmatpush1.msra.mxu0 %v693
    %2627 = vmatprep.subr.mxu0 %v698
    %2628 = vmatpush1.msra.mxu0 %v697
    %2629 = vmatprep.subr.mxu0 %v702
    %2630 = vmatpush1.msra.mxu0 %v701
    %2631 = vmatprep.subr.mxu0 %v706
    %2632 = vmatpush1.msra.mxu0 %v705
    %2633 = vmatprep.subr.mxu0 %v710
    %2634 = vmatpush1.msra.mxu0 %v709
    %2635 = vmatprep.subr.mxu0 %v714
    %2636 = vmatpush1.msra.mxu0 %v713
    %2637 = vmatprep.subr.mxu0 %v718
    %2638 = vmatpush1.msra.mxu0 %v717
    %2639 = vmatprep.subr.mxu0 %v722
    %2640 = vmatpush1.msra.mxu0 %v721
    %2641 = vmatprep.subr.mxu0 %v726
    %2642 = vmatpush1.msra.mxu0 %v725
    %2643 = vmatprep.subr.mxu0 %v730
    %2644 = vmatpush1.msra.mxu0 %v729
    %2645 = vmatprep.subr.mxu0 %v734
    %2646 = vmatpush1.msra.mxu0 %v733
    %2647 = vmatprep.subr.mxu0 %v738
    %2648 = vmatpush1.msra.mxu0 %v737
    %2649 = vmatprep.subr.mxu0 %v742
    %2650 = vmatpush1.msra.mxu0 %v741
    %2651 = vmatprep.subr.mxu0 %v746
    %2652 = vmatpush1.msra.mxu0 %v745
    %2653 = vmatprep.subr.mxu0 %v750
    %2654 = vmatpush1.msra.mxu0 %v749
    %2655 = vmatprep.subr.mxu0 0.0
    %2656 = vmatpush1.msra.mxu0 0.0
    %2657 = vmatprep.subr.mxu0 0.0
    %2658 = vmatpush1.msra.mxu0 0.0
    %2659 = vmatprep.subr.mxu0 0.0
    %2660 = vmatpush1.msra.mxu0 0.0
    %2661 = vmatprep.subr.mxu0 0.0
    %2662 = vmatpush1.msra.mxu0 0.0
    %2663 = vmatprep.subr.mxu0 0.0
    %2664 = vmatpush1.msra.mxu0 0.0
    %2665 = vmatprep.subr.mxu0 0.0
    %2666 = vmatpush1.msra.mxu0 0.0
    %2667 = vmatprep.subr.mxu0 0.0
    %2668 = vmatpush1.msra.mxu0 0.0
    %2669 = vmatprep.subr.mxu0 0.0
    %2670 = vmatpush1.msra.mxu0 0.0
    %2671 = vmatprep.subr.mxu0 0.0
    %2672 = vmatpush1.msra.mxu0 0.0
    %2673 = vmatprep.subr.mxu0 0.0
    %2674 = vmatpush1.msra.mxu0 0.0
    %2675 = vmatprep.subr.mxu0 0.0
    %2676 = vmatpush1.msra.mxu0 0.0
    %2677 = vmatprep.subr.mxu0 0.0
    %2678 = vmatpush1.msra.mxu0 0.0
    %2679 = vmatprep.subr.mxu0 0.0
    %2680 = vmatpush1.msra.mxu0 0.0
    %2681 = vmatprep.subr.mxu0 0.0
    %2682 = vmatpush1.msra.mxu0 0.0
    %2683 = vmatprep.subr.mxu0 0.0
    %2684 = vmatpush1.msra.mxu0 0.0
    %2685 = vmatprep.subr.mxu0 0.0
    %2686 = vmatpush1.msra.mxu0 0.0
    %2687 = vmatprep.mubr.f32.mxu0 0.0
    %2688 = vmatmul.mubr.f32.gmra.mrb[0].mxu0 %v2588
    %v2689 = vpop.f32.mrb[0].mxu0
    %v2690 = vadd.f32 0.0, %v2689
    %v2691 = vpop.f32.mrb[0].mxu0
    %v2692 = vadd.f32 0.0, %v2691
    %2693 = vdwg.mxu0
    %2694 = vmatprep.subr.mxu0 %v692
    %2695 = vmatpush1.msra.mxu0 %v691
    %2696 = vmatprep.subr.mxu0 %v696
    %2697 = vmatpush1.msra.mxu0 %v695
    %2698 = vmatprep.subr.mxu0 %v700
    %2699 = vmatpush1.msra.mxu0 %v699
    %2700 = vmatprep.subr.mxu0 %v704
    %2701 = vmatpush1.msra.mxu0 %v703
    %2702 = vmatprep.subr.mxu0 %v708
    %2703 = vmatpush1.msra.mxu0 %v707
    %2704 = vmatprep.subr.mxu0 %v712
    %2705 = vmatpush1.msra.mxu0 %v711
    %2706 = vmatprep.subr.mxu0 %v716
    %2707 = vmatpush1.msra.mxu0 %v715
    %2708 = vmatprep.subr.mxu0 %v720
    %2709 = vmatpush1.msra.mxu0 %v719
    %2710 = vmatprep.subr.mxu0 %v724
    %2711 = vmatpush1.msra.mxu0 %v723
    %2712 = vmatprep.subr.mxu0 %v728
    %2713 = vmatpush1.msra.mxu0 %v727
    %2714 = vmatprep.subr.mxu0 %v732
    %2715 = vmatpush1.msra.mxu0 %v731
    %2716 = vmatprep.subr.mxu0 %v736
    %2717 = vmatpush1.msra.mxu0 %v735
    %2718 = vmatprep.subr.mxu0 %v740
    %2719 = vmatpush1.msra.mxu0 %v739
    %2720 = vmatprep.subr.mxu0 %v744
    %2721 = vmatpush1.msra.mxu0 %v743
    %2722 = vmatprep.subr.mxu0 %v748
    %2723 = vmatpush1.msra.mxu0 %v747
    %2724 = vmatprep.subr.mxu0 %v752
    %2725 = vmatpush1.msra.mxu0 %v751
    %2726 = vmatprep.subr.mxu0 0.0
    %2727 = vmatpush1.msra.mxu0 0.0
    %2728 = vmatprep.subr.mxu0 0.0
    %2729 = vmatpush1.msra.mxu0 0.0
    %2730 = vmatprep.subr.mxu0 0.0
    %2731 = vmatpush1.msra.mxu0 0.0
    %2732 = vmatprep.subr.mxu0 0.0
    %2733 = vmatpush1.msra.mxu0 0.0
    %2734 = vmatprep.subr.mxu0 0.0
    %2735 = vmatpush1.msra.mxu0 0.0
    %2736 = vmatprep.subr.mxu0 0.0
    %2737 = vmatpush1.msra.mxu0 0.0
    %2738 = vmatprep.subr.mxu0 0.0
    %2739 = vmatpush1.msra.mxu0 0.0
    %2740 = vmatprep.subr.mxu0 0.0
    %2741 = vmatpush1.msra.mxu0 0.0
    %2742 = vmatprep.subr.mxu0 0.0
    %2743 = vmatpush1.msra.mxu0 0.0
    %2744 = vmatprep.subr.mxu0 0.0
    %2745 = vmatpush1.msra.mxu0 0.0
    %2746 = vmatprep.subr.mxu0 0.0
    %2747 = vmatpush1.msra.mxu0 0.0
    %2748 = vmatprep.subr.mxu0 0.0
    %2749 = vmatpush1.msra.mxu0 0.0
    %2750 = vmatprep.subr.mxu0 0.0
    %2751 = vmatpush1.msra.mxu0 0.0
    %2752 = vmatprep.subr.mxu0 0.0
    %2753 = vmatpush1.msra.mxu0 0.0
    %2754 = vmatprep.subr.mxu0 0.0
    %2755 = vmatpush1.msra.mxu0 0.0
    %2756 = vmatprep.subr.mxu0 0.0
    %2757 = vmatpush1.msra.mxu0 0.0
    %2758 = vmatprep.mubr.f32.mxu0 0.0
    %2759 = vmatmul.mubr.f32.gmra.mrb[0].mxu0 %v2588
    %v2760 = vpop.f32.mrb[0].mxu0
    %v2761 = vadd.f32 0.0, %v2760
    %v2762 = vpop.f32.mrb[0].mxu0
    %v2763 = vadd.f32 0.0, %v2762
    %2764 = vdwg.mxu0
    %v2765 = vadd.f32 %v2615, %v2690
    %v2766 = vadd.f32 %v2616, %v2692
    %v2767 = vadd.f32 %v2617, %v2761
    %v2768 = vadd.f32 %v2618, %v2763
    %2769 = vmatprep.subr.mxu0 %v754
    %2770 = vmatpush1.msra.mxu0 %v753
    %2771 = vmatprep.subr.mxu0 %v758
    %2772 = vmatpush1.msra.mxu0 %v757
    %2773 = vmatprep.subr.mxu0 %v762
    %2774 = vmatpush1.msra.mxu0 %v761
    %2775 = vmatprep.subr.mxu0 %v766
    %2776 = vmatpush1.msra.mxu0 %v765
    %2777 = vmatprep.subr.mxu0 %v770
    %2778 = vmatpush1.msra.mxu0 %v769
    %2779 = vmatprep.subr.mxu0 %v774
    %2780 = vmatpush1.msra.mxu0 %v773
    %2781 = vmatprep.subr.mxu0 %v778
    %2782 = vmatpush1.msra.mxu0 %v777
    %2783 = vmatprep.subr.mxu0 %v782
    %2784 = vmatpush1.msra.mxu0 %v781
    %2785 = vmatprep.subr.mxu0 %v786
    %2786 = vmatpush1.msra.mxu0 %v785
    %2787 = vmatprep.subr.mxu0 %v790
    %2788 = vmatpush1.msra.mxu0 %v789
    %2789 = vmatprep.subr.mxu0 %v794
    %2790 = vmatpush1.msra.mxu0 %v793
    %2791 = vmatprep.subr.mxu0 %v798
    %2792 = vmatpush1.msra.mxu0 %v797
    %2793 = vmatprep.subr.mxu0 %v802
    %2794 = vmatpush1.msra.mxu0 %v801
    %2795 = vmatprep.subr.mxu0 %v806
    %2796 = vmatpush1.msra.mxu0 %v805
    %2797 = vmatprep.subr.mxu0 %v810
    %2798 = vmatpush1.msra.mxu0 %v809
    %2799 = vmatprep.subr.mxu0 %v814
    %2800 = vmatpush1.msra.mxu0 %v813
    %2801 = vmatprep.subr.mxu0 0.0
    %2802 = vmatpush1.msra.mxu0 0.0
    %2803 = vmatprep.subr.mxu0 0.0
    %2804 = vmatpush1.msra.mxu0 0.0
    %2805 = vmatprep.subr.mxu0 0.0
    %2806 = vmatpush1.msra.mxu0 0.0
    %2807 = vmatprep.subr.mxu0 0.0
    %2808 = vmatpush1.msra.mxu0 0.0
    %2809 = vmatprep.subr.mxu0 0.0
    %2810 = vmatpush1.msra.mxu0 0.0
    %2811 = vmatprep.subr.mxu0 0.0
    %2812 = vmatpush1.msra.mxu0 0.0
    %2813 = vmatprep.subr.mxu0 0.0
    %2814 = vmatpush1.msra.mxu0 0.0
    %2815 = vmatprep.subr.mxu0 0.0
    %2816 = vmatpush1.msra.mxu0 0.0
    %2817 = vmatprep.subr.mxu0 0.0
    %2818 = vmatpush1.msra.mxu0 0.0
    %2819 = vmatprep.subr.mxu0 0.0
    %2820 = vmatpush1.msra.mxu0 0.0
    %2821 = vmatprep.subr.mxu0 0.0
    %2822 = vmatpush1.msra.mxu0 0.0
    %2823 = vmatprep.subr.mxu0 0.0
    %2824 = vmatpush1.msra.mxu0 0.0
    %2825 = vmatprep.subr.mxu0 0.0
    %2826 = vmatpush1.msra.mxu0 0.0
    %2827 = vmatprep.subr.mxu0 0.0
    %2828 = vmatpush1.msra.mxu0 0.0
    %2829 = vmatprep.subr.mxu0 0.0
    %2830 = vmatpush1.msra.mxu0 0.0
    %2831 = vmatprep.subr.mxu0 0.0
    %2832 = vmatpush1.msra.mxu0 0.0
    %2833 = vmatprep.mubr.f32.mxu0 0.0
    %2834 = vmatmul.mubr.f32.gmra.mrb[0].mxu0 %v2612
    %v2835 = vpop.f32.mrb[0].mxu0
    %v2836 = vadd.f32 0.0, %v2835
    %v2837 = vpop.f32.mrb[0].mxu0
    %v2838 = vadd.f32 0.0, %v2837
    %2839 = vdwg.mxu0
    %2840 = vmatprep.subr.mxu0 %v756
    %2841 = vmatpush1.msra.mxu0 %v755
    %2842 = vmatprep.subr.mxu0 %v760
    %2843 = vmatpush1.msra.mxu0 %v759
    %2844 = vmatprep.subr.mxu0 %v764
    %2845 = vmatpush1.msra.mxu0 %v763
    %2846 = vmatprep.subr.mxu0 %v768
    %2847 = vmatpush1.msra.mxu0 %v767
    %2848 = vmatprep.subr.mxu0 %v772
    %2849 = vmatpush1.msra.mxu0 %v771
    %2850 = vmatprep.subr.mxu0 %v776
    %2851 = vmatpush1.msra.mxu0 %v775
    %2852 = vmatprep.subr.mxu0 %v780
    %2853 = vmatpush1.msra.mxu0 %v779
    %2854 = vmatprep.subr.mxu0 %v784
    %2855 = vmatpush1.msra.mxu0 %v783
    %2856 = vmatprep.subr.mxu0 %v788
    %2857 = vmatpush1.msra.mxu0 %v787
    %2858 = vmatprep.subr.mxu0 %v792
    %2859 = vmatpush1.msra.mxu0 %v791
    %2860 = vmatprep.subr.mxu0 %v796
    %2861 = vmatpush1.msra.mxu0 %v795
    %2862 = vmatprep.subr.mxu0 %v800
    %2863 = vmatpush1.msra.mxu0 %v799
    %2864 = vmatprep.subr.mxu0 %v804
    %2865 = vmatpush1.msra.mxu0 %v803
    %2866 = vmatprep.subr.mxu0 %v808
    %2867 = vmatpush1.msra.mxu0 %v807
    %2868 = vmatprep.subr.mxu0 %v812
    %2869 = vmatpush1.msra.mxu0 %v811
    %2870 = vmatprep.subr.mxu0 %v816
    %2871 = vmatpush1.msra.mxu0 %v815
    %2872 = vmatprep.subr.mxu0 0.0
    %2873 = vmatpush1.msra.mxu0 0.0
    %2874 = vmatprep.subr.mxu0 0.0
    %2875 = vmatpush1.msra.mxu0 0.0
    %2876 = vmatprep.subr.mxu0 0.0
    %2877 = vmatpush1.msra.mxu0 0.0
    %2878 = vmatprep.subr.mxu0 0.0
    %2879 = vmatpush1.msra.mxu0 0.0
    %2880 = vmatprep.subr.mxu0 0.0
    %2881 = vmatpush1.msra.mxu0 0.0
    %2882 = vmatprep.subr.mxu0 0.0
    %2883 = vmatpush1.msra.mxu0 0.0
    %2884 = vmatprep.subr.mxu0 0.0
    %2885 = vmatpush1.msra.mxu0 0.0
    %2886 = vmatprep.subr.mxu0 0.0
    %2887 = vmatpush1.msra.mxu0 0.0
    %2888 = vmatprep.subr.mxu0 0.0
    %2889 = vmatpush1.msra.mxu0 0.0
    %2890 = vmatprep.subr.mxu0 0.0
    %2891 = vmatpush1.msra.mxu0 0.0
    %2892 = vmatprep.subr.mxu0 0.0
    %2893 = vmatpush1.msra.mxu0 0.0
    %2894 = vmatprep.subr.mxu0 0.0
    %2895 = vmatpush1.msra.mxu0 0.0
    %2896 = vmatprep.subr.mxu0 0.0
    %2897 = vmatpush1.msra.mxu0 0.0
    %2898 = vmatprep.subr.mxu0 0.0
    %2899 = vmatpush1.msra.mxu0 0.0
    %2900 = vmatprep.subr.mxu0 0.0
    %2901 = vmatpush1.msra.mxu0 0.0
    %2902 = vmatprep.subr.mxu0 0.0
    %2903 = vmatpush1.msra.mxu0 0.0
    %2904 = vmatprep.mubr.f32.mxu0 0.0
    %2905 = vmatmul.mubr.f32.gmra.mrb[0].mxu0 %v2612
    %v2906 = vpop.f32.mrb[0].mxu0
    %v2907 = vadd.f32 0.0, %v2906
    %v2908 = vpop.f32.mrb[0].mxu0
    %v2909 = vadd.f32 0.0, %v2908
    %2910 = vdwg.mxu0
    %v2911 = vadd.f32 %v2619, %v2836
    %v2912 = vadd.f32 %v2620, %v2838
    %v2913 = vadd.f32 %v2621, %v2907
    %v2914 = vadd.f32 %v2622, %v2909
    %v2915 = vxor.u32 %v2765, 2147483648
    %v2916 = vmul.f32 %v2915, 1.442695
    %v2917 = vpow.pop %v2916
    %v2918 = vadd.f32 %v2917, 1.0
    %v2919 = vrcp.pop %v2918
    %v2920 = vmul.f32 1.0, %v2919
    %v2921 = vxor.u32 %v2766, 2147483648
    %v2922 = vmul.f32 %v2921, 1.442695
    %v2923 = vpow.pop %v2922
    %v2924 = vadd.f32 %v2923, 1.0
    %v2925 = vrcp.pop %v2924
    %v2926 = vmul.f32 1.0, %v2925
    %v2927 = vtanh.pop %v2767
    %v2928 = vxor.u32 %v2768, 2147483648
    %v2929 = vmul.f32 %v2928, 1.442695
    %v2930 = vpow.pop %v2929
    %v2931 = vadd.f32 %v2930, 1.0
    %v2932 = vrcp.pop %v2931
    %v2933 = vmul.f32 1.0, %v2932
    %v2934 = vmul.f32 %v2926, %v2586
    %v2935 = vmul.f32 %v2920, %v2927
    %v2936 = vadd.f32 %v2934, %v2935
    %v2937 = vtanh.pop %v2936
    %v2938 = vmul.f32 %v2933, %v2937
    %v2939 = vxor.u32 %v2911, 2147483648
    %v2940 = vmul.f32 %v2939, 1.442695
    %v2941 = vpow.pop %v2940
    %v2942 = vadd.f32 %v2941, 1.0
    %v2943 = vrcp.pop %v2942
    %v2944 = vmul.f32 1.0, %v2943
    %v2945 = vxor.u32 %v2912, 2147483648
    %v2946 = vmul.f32 %v2945, 1.442695
    %v2947 = vpow.pop %v2946
    %v2948 = vadd.f32 %v2947, 1.0
    %v2949 = vrcp.pop %v2948
    %v2950 = vmul.f32 1.0, %v2949
    %v2951 = vtanh.pop %v2913
    %v2952 = vxor.u32 %v2914, 2147483648
    %v2953 = vmul.f32 %v2952, 1.442695
    %v2954 = vpow.pop %v2953
    %v2955 = vadd.f32 %v2954, 1.0
    %v2956 = vrcp.pop %v2955
    %v2957 = vmul.f32 1.0, %v2956
    %v2958 = vmul.f32 %v2950, %v2610
    %v2959 = vmul.f32 %v2944, %v2951
    %v2960 = vadd.f32 %v2958, %v2959
    %v2961 = vtanh.pop %v2960
    %v2962 = vmul.f32 %v2957, %v2961
    %2963 = vst [vmem:[%s1901] sm:$0xff] %v2938
    %2964 = vst [vmem:[%s1897 + $0x8] sm:$0xff] %v2962
    %v2965 = vld [vmem:[%s1188] sm:$0xff]
    %v2966 = vld [vmem:[%s1188 + $0x8] sm:$0xff]
    %v2967 = vld [vmem:[%s1188 + $0x10] sm:$0xff]
    %v2968 = vld [vmem:[%s1188 + $0x18] sm:$0xff]
    %v2969 = vld [vmem:[%s1181 + $0x20] sm:$0xff]
    %v2970 = vld [vmem:[%s1181 + $0x28] sm:$0xff]
    %v2971 = vld [vmem:[%s1181 + $0x30] sm:$0xff]
    %v2972 = vld [vmem:[%s1181 + $0x38] sm:$0xff]
    %2973 = vmatprep.subr.mxu0 %v690
    %2974 = vmatpush1.msra.mxu0 %v689
    %2975 = vmatprep.subr.mxu0 %v694
    %2976 = vmatpush1.msra.mxu0 %v693
    %2977 = vmatprep.subr.mxu0 %v698
    %2978 = vmatpush1.msra.mxu0 %v697
    %2979 = vmatprep.subr.mxu0 %v702
    %2980 = vmatpush1.msra.mxu0 %v701
    %2981 = vmatprep.subr.mxu0 %v706
    %2982 = vmatpush1.msra.mxu0 %v705
    %2983 = vmatprep.subr.mxu0 %v710
    %2984 = vmatpush1.msra.mxu0 %v709
    %2985 = vmatprep.subr.mxu0 %v714
    %2986 = vmatpush1.msra.mxu0 %v713
    %2987 = vmatprep.subr.mxu0 %v718
    %2988 = vmatpush1.msra.mxu0 %v717
    %2989 = vmatprep.subr.mxu0 %v722
    %2990 = vmatpush1.msra.mxu0 %v721
    %2991 = vmatprep.subr.mxu0 %v726
    %2992 = vmatpush1.msra.mxu0 %v725
    %2993 = vmatprep.subr.mxu0 %v730
    %2994 = vmatpush1.msra.mxu0 %v729
    %2995 = vmatprep.subr.mxu0 %v734
    %2996 = vmatpush1.msra.mxu0 %v733
    %2997 = vmatprep.subr.mxu0 %v738
    %2998 = vmatpush1.msra.mxu0 %v737
    %2999 = vmatprep.subr.mxu0 %v742
    %3000 = vmatpush1.msra.mxu0 %v741
    %3001 = vmatprep.subr.mxu0 %v746
    %3002 = vmatpush1.msra.mxu0 %v745
    %3003 = vmatprep.subr.mxu0 %v750
    %3004 = vmatpush1.msra.mxu0 %v749
    %3005 = vmatprep.subr.mxu0 0.0
    %3006 = vmatpush1.msra.mxu0 0.0
    %3007 = vmatprep.subr.mxu0 0.0
    %3008 = vmatpush1.msra.mxu0 0.0
    %3009 = vmatprep.subr.mxu0 0.0
    %3010 = vmatpush1.msra.mxu0 0.0
    %3011 = vmatprep.subr.mxu0 0.0
    %3012 = vmatpush1.msra.mxu0 0.0
    %3013 = vmatprep.subr.mxu0 0.0
    %3014 = vmatpush1.msra.mxu0 0.0
    %3015 = vmatprep.subr.mxu0 0.0
    %3016 = vmatpush1.msra.mxu0 0.0
    %3017 = vmatprep.subr.mxu0 0.0
    %3018 = vmatpush1.msra.mxu0 0.0
    %3019 = vmatprep.subr.mxu0 0.0
    %3020 = vmatpush1.msra.mxu0 0.0
    %3021 = vmatprep.subr.mxu0 0.0
    %3022 = vmatpush1.msra.mxu0 0.0
    %3023 = vmatprep.subr.mxu0 0.0
    %3024 = vmatpush1.msra.mxu0 0.0
    %3025 = vmatprep.subr.mxu0 0.0
    %3026 = vmatpush1.msra.mxu0 0.0
    %3027 = vmatprep.subr.mxu0 0.0
    %3028 = vmatpush1.msra.mxu0 0.0
    %3029 = vmatprep.subr.mxu0 0.0
    %3030 = vmatpush1.msra.mxu0 0.0
    %3031 = vmatprep.subr.mxu0 0.0
    %3032 = vmatpush1.msra.mxu0 0.0
    %3033 = vmatprep.subr.mxu0 0.0
    %3034 = vmatpush1.msra.mxu0 0.0
    %3035 = vmatprep.subr.mxu0 0.0
    %3036 = vmatpush1.msra.mxu0 0.0
    %3037 = vmatprep.mubr.f32.mxu0 0.0
    %3038 = vmatmul.mubr.f32.gmra.mrb[0].mxu0 %v2938
    %v3039 = vpop.f32.mrb[0].mxu0
    %v3040 = vadd.f32 0.0, %v3039
    %v3041 = vpop.f32.mrb[0].mxu0
    %v3042 = vadd.f32 0.0, %v3041
    %3043 = vdwg.mxu0
    %3044 = vmatprep.subr.mxu0 %v692
    %3045 = vmatpush1.msra.mxu0 %v691
    %3046 = vmatprep.subr.mxu0 %v696
    %3047 = vmatpush1.msra.mxu0 %v695
    %3048 = vmatprep.subr.mxu0 %v700
    %3049 = vmatpush1.msra.mxu0 %v699
    %3050 = vmatprep.subr.mxu0 %v704
    %3051 = vmatpush1.msra.mxu0 %v703
    %3052 = vmatprep.subr.mxu0 %v708
    %3053 = vmatpush1.msra.mxu0 %v707
    %3054 = vmatprep.subr.mxu0 %v712
    %3055 = vmatpush1.msra.mxu0 %v711
    %3056 = vmatprep.subr.mxu0 %v716
    %3057 = vmatpush1.msra.mxu0 %v715
    %3058 = vmatprep.subr.mxu0 %v720
    %3059 = vmatpush1.msra.mxu0 %v719
    %3060 = vmatprep.subr.mxu0 %v724
    %3061 = vmatpush1.msra.mxu0 %v723
    %3062 = vmatprep.subr.mxu0 %v728
    %3063 = vmatpush1.msra.mxu0 %v727
    %3064 = vmatprep.subr.mxu0 %v732
    %3065 = vmatpush1.msra.mxu0 %v731
    %3066 = vmatprep.subr.mxu0 %v736
    %3067 = vmatpush1.msra.mxu0 %v735
    %3068 = vmatprep.subr.mxu0 %v740
    %3069 = vmatpush1.msra.mxu0 %v739
    %3070 = vmatprep.subr.mxu0 %v744
    %3071 = vmatpush1.msra.mxu0 %v743
    %3072 = vmatprep.subr.mxu0 %v748
    %3073 = vmatpush1.msra.mxu0 %v747
    %3074 = vmatprep.subr.mxu0 %v752
    %3075 = vmatpush1.msra.mxu0 %v751
    %3076 = vmatprep.subr.mxu0 0.0
    %3077 = vmatpush1.msra.mxu0 0.0
    %3078 = vmatprep.subr.mxu0 0.0
    %3079 = vmatpush1.msra.mxu0 0.0
    %3080 = vmatprep.subr.mxu0 0.0
    %3081 = vmatpush1.msra.mxu0 0.0
    %3082 = vmatprep.subr.mxu0 0.0
    %3083 = vmatpush1.msra.mxu0 0.0
    %3084 = vmatprep.subr.mxu0 0.0
    %3085 = vmatpush1.msra.mxu0 0.0
    %3086 = vmatprep.subr.mxu0 0.0
    %3087 = vmatpush1.msra.mxu0 0.0
    %3088 = vmatprep.subr.mxu0 0.0
    %3089 = vmatpush1.msra.mxu0 0.0
    %3090 = vmatprep.subr.mxu0 0.0
    %3091 = vmatpush1.msra.mxu0 0.0
    %3092 = vmatprep.subr.mxu0 0.0
    %3093 = vmatpush1.msra.mxu0 0.0
    %3094 = vmatprep.subr.mxu0 0.0
    %3095 = vmatpush1.msra.mxu0 0.0
    %3096 = vmatprep.subr.mxu0 0.0
    %3097 = vmatpush1.msra.mxu0 0.0
    %3098 = vmatprep.subr.mxu0 0.0
    %3099 = vmatpush1.msra.mxu0 0.0
    %3100 = vmatprep.subr.mxu0 0.0
    %3101 = vmatpush1.msra.mxu0 0.0
    %3102 = vmatprep.subr.mxu0 0.0
    %3103 = vmatpush1.msra.mxu0 0.0
    %3104 = vmatprep.subr.mxu0 0.0
    %3105 = vmatpush1.msra.mxu0 0.0
    %3106 = vmatprep.subr.mxu0 0.0
    %3107 = vmatpush1.msra.mxu0 0.0
    %3108 = vmatprep.mubr.f32.mxu0 0.0
    %3109 = vmatmul.mubr.f32.gmra.mrb[0].mxu0 %v2938
    %v3110 = vpop.f32.mrb[0].mxu0
    %v3111 = vadd.f32 0.0, %v3110
    %v3112 = vpop.f32.mrb[0].mxu0
    %v3113 = vadd.f32 0.0, %v3112
    %3114 = vdwg.mxu0
    %v3115 = vadd.f32 %v2965, %v3040
    %v3116 = vadd.f32 %v2966, %v3042
    %v3117 = vadd.f32 %v2967, %v3111
    %v3118 = vadd.f32 %v2968, %v3113
    %3119 = vmatprep.subr.mxu0 %v754
    %3120 = vmatpush1.msra.mxu0 %v753
    %3121 = vmatprep.subr.mxu0 %v758
    %3122 = vmatpush1.msra.mxu0 %v757
    %3123 = vmatprep.subr.mxu0 %v762
    %3124 = vmatpush1.msra.mxu0 %v761
    %3125 = vmatprep.subr.mxu0 %v766
    %3126 = vmatpush1.msra.mxu0 %v765
    %3127 = vmatprep.subr.mxu0 %v770
    %3128 = vmatpush1.msra.mxu0 %v769
    %3129 = vmatprep.subr.mxu0 %v774
    %3130 = vmatpush1.msra.mxu0 %v773
    %3131 = vmatprep.subr.mxu0 %v778
    %3132 = vmatpush1.msra.mxu0 %v777
    %3133 = vmatprep.subr.mxu0 %v782
    %3134 = vmatpush1.msra.mxu0 %v781
    %3135 = vmatprep.subr.mxu0 %v786
    %3136 = vmatpush1.msra.mxu0 %v785
    %3137 = vmatprep.subr.mxu0 %v790
    %3138 = vmatpush1.msra.mxu0 %v789
    %3139 = vmatprep.subr.mxu0 %v794
    %3140 = vmatpush1.msra.mxu0 %v793
    %3141 = vmatprep.subr.mxu0 %v798
    %3142 = vmatpush1.msra.mxu0 %v797
    %3143 = vmatprep.subr.mxu0 %v802
    %3144 = vmatpush1.msra.mxu0 %v801
    %3145 = vmatprep.subr.mxu0 %v806
    %3146 = vmatpush1.msra.mxu0 %v805
    %3147 = vmatprep.subr.mxu0 %v810
    %3148 = vmatpush1.msra.mxu0 %v809
    %3149 = vmatprep.subr.mxu0 %v814
    %3150 = vmatpush1.msra.mxu0 %v813
    %3151 = vmatprep.subr.mxu0 0.0
    %3152 = vmatpush1.msra.mxu0 0.0
    %3153 = vmatprep.subr.mxu0 0.0
    %3154 = vmatpush1.msra.mxu0 0.0
    %3155 = vmatprep.subr.mxu0 0.0
    %3156 = vmatpush1.msra.mxu0 0.0
    %3157 = vmatprep.subr.mxu0 0.0
    %3158 = vmatpush1.msra.mxu0 0.0
    %3159 = vmatprep.subr.mxu0 0.0
    %3160 = vmatpush1.msra.mxu0 0.0
    %3161 = vmatprep.subr.mxu0 0.0
    %3162 = vmatpush1.msra.mxu0 0.0
    %3163 = vmatprep.subr.mxu0 0.0
    %3164 = vmatpush1.msra.mxu0 0.0
    %3165 = vmatprep.subr.mxu0 0.0
    %3166 = vmatpush1.msra.mxu0 0.0
    %3167 = vmatprep.subr.mxu0 0.0
    %3168 = vmatpush1.msra.mxu0 0.0
    %3169 = vmatprep.subr.mxu0 0.0
    %3170 = vmatpush1.msra.mxu0 0.0
    %3171 = vmatprep.subr.mxu0 0.0
    %3172 = vmatpush1.msra.mxu0 0.0
    %3173 = vmatprep.subr.mxu0 0.0
    %3174 = vmatpush1.msra.mxu0 0.0
    %3175 = vmatprep.subr.mxu0 0.0
    %3176 = vmatpush1.msra.mxu0 0.0
    %3177 = vmatprep.subr.mxu0 0.0
    %3178 = vmatpush1.msra.mxu0 0.0
    %3179 = vmatprep.subr.mxu0 0.0
    %3180 = vmatpush1.msra.mxu0 0.0
    %3181 = vmatprep.subr.mxu0 0.0
    %3182 = vmatpush1.msra.mxu0 0.0
    %3183 = vmatprep.mubr.f32.mxu0 0.0
    %3184 = vmatmul.mubr.f32.gmra.mrb[0].mxu0 %v2962
    %v3185 = vpop.f32.mrb[0].mxu0
    %v3186 = vadd.f32 0.0, %v3185
    %v3187 = vpop.f32.mrb[0].mxu0
    %v3188 = vadd.f32 0.0, %v3187
    %3189 = vdwg.mxu0
    %3190 = vmatprep.subr.mxu0 %v756
    %3191 = vmatpush1.msra.mxu0 %v755
    %3192 = vmatprep.subr.mxu0 %v760
    %3193 = vmatpush1.msra.mxu0 %v759
    %3194 = vmatprep.subr.mxu0 %v764
    %3195 = vmatpush1.msra.mxu0 %v763
    %3196 = vmatprep.subr.mxu0 %v768
    %3197 = vmatpush1.msra.mxu0 %v767
    %3198 = vmatprep.subr.mxu0 %v772
    %3199 = vmatpush1.msra.mxu0 %v771
    %3200 = vmatprep.subr.mxu0 %v776
    %3201 = vmatpush1.msra.mxu0 %v775
    %3202 = vmatprep.subr.mxu0 %v780
    %3203 = vmatpush1.msra.mxu0 %v779
    %3204 = vmatprep.subr.mxu0 %v784
    %3205 = vmatpush1.msra.mxu0 %v783
    %3206 = vmatprep.subr.mxu0 %v788
    %3207 = vmatpush1.msra.mxu0 %v787
    %3208 = vmatprep.subr.mxu0 %v792
    %3209 = vmatpush1.msra.mxu0 %v791
    %3210 = vmatprep.subr.mxu0 %v796
    %3211 = vmatpush1.msra.mxu0 %v795
    %3212 = vmatprep.subr.mxu0 %v800
    %3213 = vmatpush1.msra.mxu0 %v799
    %3214 = vmatprep.subr.mxu0 %v804
    %3215 = vmatpush1.msra.mxu0 %v803
    %3216 = vmatprep.subr.mxu0 %v808
    %3217 = vmatpush1.msra.mxu0 %v807
    %3218 = vmatprep.subr.mxu0 %v812
    %3219 = vmatpush1.msra.mxu0 %v811
    %3220 = vmatprep.subr.mxu0 %v816
    %3221 = vmatpush1.msra.mxu0 %v815
    %3222 = vmatprep.subr.mxu0 0.0
    %3223 = vmatpush1.msra.mxu0 0.0
    %3224 = vmatprep.subr.mxu0 0.0
    %3225 = vmatpush1.msra.mxu0 0.0
    %3226 = vmatprep.subr.mxu0 0.0
    %3227 = vmatpush1.msra.mxu0 0.0
    %3228 = vmatprep.subr.mxu0 0.0
    %3229 = vmatpush1.msra.mxu0 0.0
    %3230 = vmatprep.subr.mxu0 0.0
    %3231 = vmatpush1.msra.mxu0 0.0
    %3232 = vmatprep.subr.mxu0 0.0
    %3233 = vmatpush1.msra.mxu0 0.0
    %3234 = vmatprep.subr.mxu0 0.0
    %3235 = vmatpush1.msra.mxu0 0.0
    %3236 = vmatprep.subr.mxu0 0.0
    %3237 = vmatpush1.msra.mxu0 0.0
    %3238 = vmatprep.subr.mxu0 0.0
    %3239 = vmatpush1.msra.mxu0 0.0
    %3240 = vmatprep.subr.mxu0 0.0
    %3241 = vmatpush1.msra.mxu0 0.0
    %3242 = vmatprep.subr.mxu0 0.0
    %3243 = vmatpush1.msra.mxu0 0.0
    %3244 = vmatprep.subr.mxu0 0.0
    %3245 = vmatpush1.msra.mxu0 0.0
    %3246 = vmatprep.subr.mxu0 0.0
    %3247 = vmatpush1.msra.mxu0 0.0
    %3248 = vmatprep.subr.mxu0 0.0
    %3249 = vmatpush1.msra.mxu0 0.0
    %3250 = vmatprep.subr.mxu0 0.0
    %3251 = vmatpush1.msra.mxu0 0.0
    %3252 = vmatprep.subr.mxu0 0.0
    %3253 = vmatpush1.msra.mxu0 0.0
    %3254 = vmatprep.mubr.f32.mxu0 0.0
    %3255 = vmatmul.mubr.f32.gmra.mrb[0].mxu0 %v2962
    %v3256 = vpop.f32.mrb[0].mxu0
    %v3257 = vadd.f32 0.0, %v3256
    %v3258 = vpop.f32.mrb[0].mxu0
    %v3259 = vadd.f32 0.0, %v3258
    %3260 = vdwg.mxu0
    %v3261 = vadd.f32 %v2969, %v3186
    %v3262 = vadd.f32 %v2970, %v3188
    %v3263 = vadd.f32 %v2971, %v3257
    %v3264 = vadd.f32 %v2972, %v3259
    %v3265 = vxor.u32 %v3115, 2147483648
    %v3266 = vmul.f32 %v3265, 1.442695
    %v3267 = vpow.pop %v3266
    %v3268 = vadd.f32 %v3267, 1.0
    %v3269 = vrcp.pop %v3268
    %v3270 = vmul.f32 1.0, %v3269
    %v3271 = vxor.u32 %v3116, 2147483648
    %v3272 = vmul.f32 %v3271, 1.442695
    %v3273 = vpow.pop %v3272
    %v3274 = vadd.f32 %v3273, 1.0
    %v3275 = vrcp.pop %v3274
    %v3276 = vmul.f32 1.0, %v3275
    %v3277 = vtanh.pop %v3117
    %v3278 = vxor.u32 %v3118, 2147483648
    %v3279 = vmul.f32 %v3278, 1.442695
    %v3280 = vpow.pop %v3279
    %v3281 = vadd.f32 %v3280, 1.0
    %v3282 = vrcp.pop %v3281
    %v3283 = vmul.f32 1.0, %v3282
    %v3284 = vmul.f32 %v3276, %v2936
    %v3285 = vmul.f32 %v3270, %v3277
    %v3286 = vadd.f32 %v3284, %v3285
    %v3287 = vtanh.pop %v3286
    %v3288 = vmul.f32 %v3283, %v3287
    %v3289 = vxor.u32 %v3261, 2147483648
    %v3290 = vmul.f32 %v3289, 1.442695
    %v3291 = vpow.pop %v3290
    %v3292 = vadd.f32 %v3291, 1.0
    %v3293 = vrcp.pop %v3292
    %v3294 = vmul.f32 1.0, %v3293
    %v3295 = vxor.u32 %v3262, 2147483648
    %v3296 = vmul.f32 %v3295, 1.442695
    %v3297 = vpow.pop %v3296
    %v3298 = vadd.f32 %v3297, 1.0
    %v3299 = vrcp.pop %v3298
    %v3300 = vmul.f32 1.0, %v3299
    %v3301 = vtanh.pop %v3263
    %v3302 = vxor.u32 %v3264, 2147483648
    %v3303 = vmul.f32 %v3302, 1.442695
    %v3304 = vpow.pop %v3303
    %v3305 = vadd.f32 %v3304, 1.0
    %v3306 = vrcp.pop %v3305
    %v3307 = vmul.f32 1.0, %v3306
    %v3308 = vmul.f32 %v3300, %v2960
    %v3309 = vmul.f32 %v3294, %v3301
    %v3310 = vadd.f32 %v3308, %v3309
    %v3311 = vtanh.pop %v3310
    %v3312 = vmul.f32 %v3307, %v3311
    %3313 = vst [vmem:[%s1539] sm:$0xff] %v3288
    %3314 = vst [vmem:[%s1535 + $0x8] sm:$0xff] %v3312
    %v3315 = vld [vmem:[%s826] sm:$0xff]
    %v3316 = vld [vmem:[%s826 + $0x8] sm:$0xff]
    %v3317 = vld [vmem:[%s826 + $0x10] sm:$0xff]
    %v3318 = vld [vmem:[%s826 + $0x18] sm:$0xff]
    %v3319 = vld [vmem:[%s819 + $0x20] sm:$0xff]
    %v3320 = vld [vmem:[%s819 + $0x28] sm:$0xff]
    %v3321 = vld [vmem:[%s819 + $0x30] sm:$0xff]
    %v3322 = vld [vmem:[%s819 + $0x38] sm:$0xff]
    %3323 = vmatprep.subr.mxu0 %v690
    %3324 = vmatpush1.msra.mxu0 %v689
    %3325 = vmatprep.subr.mxu0 %v694
    %3326 = vmatpush1.msra.mxu0 %v693
    %3327 = vmatprep.subr.mxu0 %v698
    %3328 = vmatpush1.msra.mxu0 %v697
    %3329 = vmatprep.subr.mxu0 %v702
    %3330 = vmatpush1.msra.mxu0 %v701
    %3331 = vmatprep.subr.mxu0 %v706
    %3332 = vmatpush1.msra.mxu0 %v705
    %3333 = vmatprep.subr.mxu0 %v710
    %3334 = vmatpush1.msra.mxu0 %v709
    %3335 = vmatprep.subr.mxu0 %v714
    %3336 = vmatpush1.msra.mxu0 %v713
    %3337 = vmatprep.subr.mxu0 %v718
    %3338 = vmatpush1.msra.mxu0 %v717
    %3339 = vmatprep.subr.mxu0 %v722
    %3340 = vmatpush1.msra.mxu0 %v721
    %3341 = vmatprep.subr.mxu0 %v726
    %3342 = vmatpush1.msra.mxu0 %v725
    %3343 = vmatprep.subr.mxu0 %v730
    %3344 = vmatpush1.msra.mxu0 %v729
    %3345 = vmatprep.subr.mxu0 %v734
    %3346 = vmatpush1.msra.mxu0 %v733
    %3347 = vmatprep.subr.mxu0 %v738
    %3348 = vmatpush1.msra.mxu0 %v737
    %3349 = vmatprep.subr.mxu0 %v742
    %3350 = vmatpush1.msra.mxu0 %v741
    %3351 = vmatprep.subr.mxu0 %v746
    %3352 = vmatpush1.msra.mxu0 %v745
    %3353 = vmatprep.subr.mxu0 %v750
    %3354 = vmatpush1.msra.mxu0 %v749
    %3355 = vmatprep.subr.mxu0 0.0
    %3356 = vmatpush1.msra.mxu0 0.0
    %3357 = vmatprep.subr.mxu0 0.0
    %3358 = vmatpush1.msra.mxu0 0.0
    %3359 = vmatprep.subr.mxu0 0.0
    %3360 = vmatpush1.msra.mxu0 0.0
    %3361 = vmatprep.subr.mxu0 0.0
    %3362 = vmatpush1.msra.mxu0 0.0
    %3363 = vmatprep.subr.mxu0 0.0
    %3364 = vmatpush1.msra.mxu0 0.0
    %3365 = vmatprep.subr.mxu0 0.0
    %3366 = vmatpush1.msra.mxu0 0.0
    %3367 = vmatprep.subr.mxu0 0.0
    %3368 = vmatpush1.msra.mxu0 0.0
    %3369 = vmatprep.subr.mxu0 0.0
    %3370 = vmatpush1.msra.mxu0 0.0
    %3371 = vmatprep.subr.mxu0 0.0
    %3372 = vmatpush1.msra.mxu0 0.0
    %3373 = vmatprep.subr.mxu0 0.0
    %3374 = vmatpush1.msra.mxu0 0.0
    %3375 = vmatprep.subr.mxu0 0.0
    %3376 = vmatpush1.msra.mxu0 0.0
    %3377 = vmatprep.subr.mxu0 0.0
    %3378 = vmatpush1.msra.mxu0 0.0
    %3379 = vmatprep.subr.mxu0 0.0
    %3380 = vmatpush1.msra.mxu0 0.0
    %3381 = vmatprep.subr.mxu0 0.0
    %3382 = vmatpush1.msra.mxu0 0.0
    %3383 = vmatprep.subr.mxu0 0.0
    %3384 = vmatpush1.msra.mxu0 0.0
    %3385 = vmatprep.subr.mxu0 0.0
    %3386 = vmatpush1.msra.mxu0 0.0
    %3387 = vmatprep.mubr.f32.mxu0 0.0
    %3388 = vmatmul.mubr.f32.gmra.mrb[0].mxu0 %v3288
    %v3389 = vpop.f32.mrb[0].mxu0
    %v3390 = vadd.f32 0.0, %v3389
    %v3391 = vpop.f32.mrb[0].mxu0
    %v3392 = vadd.f32 0.0, %v3391
    %3393 = vdwg.mxu0
    %3394 = vmatprep.subr.mxu0 %v692
    %3395 = vmatpush1.msra.mxu0 %v691
    %3396 = vmatprep.subr.mxu0 %v696
    %3397 = vmatpush1.msra.mxu0 %v695
    %3398 = vmatprep.subr.mxu0 %v700
    %3399 = vmatpush1.msra.mxu0 %v699
    %3400 = vmatprep.subr.mxu0 %v704
    %3401 = vmatpush1.msra.mxu0 %v703
    %3402 = vmatprep.subr.mxu0 %v708
    %3403 = vmatpush1.msra.mxu0 %v707
    %3404 = vmatprep.subr.mxu0 %v712
    %3405 = vmatpush1.msra.mxu0 %v711
    %3406 = vmatprep.subr.mxu0 %v716
    %3407 = vmatpush1.msra.mxu0 %v715
    %3408 = vmatprep.subr.mxu0 %v720
    %3409 = vmatpush1.msra.mxu0 %v719
    %3410 = vmatprep.subr.mxu0 %v724
    %3411 = vmatpush1.msra.mxu0 %v723
    %3412 = vmatprep.subr.mxu0 %v728
    %3413 = vmatpush1.msra.mxu0 %v727
    %3414 = vmatprep.subr.mxu0 %v732
    %3415 = vmatpush1.msra.mxu0 %v731
    %3416 = vmatprep.subr.mxu0 %v736
    %3417 = vmatpush1.msra.mxu0 %v735
    %3418 = vmatprep.subr.mxu0 %v740
    %3419 = vmatpush1.msra.mxu0 %v739
    %3420 = vmatprep.subr.mxu0 %v744
    %3421 = vmatpush1.msra.mxu0 %v743
    %3422 = vmatprep.subr.mxu0 %v748
    %3423 = vmatpush1.msra.mxu0 %v747
    %3424 = vmatprep.subr.mxu0 %v752
    %3425 = vmatpush1.msra.mxu0 %v751
    %3426 = vmatprep.subr.mxu0 0.0
    %3427 = vmatpush1.msra.mxu0 0.0
    %3428 = vmatprep.subr.mxu0 0.0
    %3429 = vmatpush1.msra.mxu0 0.0
    %3430 = vmatprep.subr.mxu0 0.0
    %3431 = vmatpush1.msra.mxu0 0.0
    %3432 = vmatprep.subr.mxu0 0.0
    %3433 = vmatpush1.msra.mxu0 0.0
    %3434 = vmatprep.subr.mxu0 0.0
    %3435 = vmatpush1.msra.mxu0 0.0
    %3436 = vmatprep.subr.mxu0 0.0
    %3437 = vmatpush1.msra.mxu0 0.0
    %3438 = vmatprep.subr.mxu0 0.0
    %3439 = vmatpush1.msra.mxu0 0.0
    %3440 = vmatprep.subr.mxu0 0.0
    %3441 = vmatpush1.msra.mxu0 0.0
    %3442 = vmatprep.subr.mxu0 0.0
    %3443 = vmatpush1.msra.mxu0 0.0
    %3444 = vmatprep.subr.mxu0 0.0
    %3445 = vmatpush1.msra.mxu0 0.0
    %3446 = vmatprep.subr.mxu0 0.0
    %3447 = vmatpush1.msra.mxu0 0.0
    %3448 = vmatprep.subr.mxu0 0.0
    %3449 = vmatpush1.msra.mxu0 0.0
    %3450 = vmatprep.subr.mxu0 0.0
    %3451 = vmatpush1.msra.mxu0 0.0
    %3452 = vmatprep.subr.mxu0 0.0
    %3453 = vmatpush1.msra.mxu0 0.0
    %3454 = vmatprep.subr.mxu0 0.0
    %3455 = vmatpush1.msra.mxu0 0.0
    %3456 = vmatprep.subr.mxu0 0.0
    %3457 = vmatpush1.msra.mxu0 0.0
    %3458 = vmatprep.mubr.f32.mxu0 0.0
    %3459 = vmatmul.mubr.f32.gmra.mrb[0].mxu0 %v3288
    %v3460 = vpop.f32.mrb[0].mxu0
    %v3461 = vadd.f32 0.0, %v3460
    %v3462 = vpop.f32.mrb[0].mxu0
    %v3463 = vadd.f32 0.0, %v3462
    %3464 = vdwg.mxu0
    %v3465 = vadd.f32 %v3315, %v3390
    %v3466 = vadd.f32 %v3316, %v3392
    %v3467 = vadd.f32 %v3317, %v3461
    %v3468 = vadd.f32 %v3318, %v3463
    %3469 = vmatprep.subr.mxu0 %v754
    %3470 = vmatpush1.msra.mxu0 %v753
    %3471 = vmatprep.subr.mxu0 %v758
    %3472 = vmatpush1.msra.mxu0 %v757
    %3473 = vmatprep.subr.mxu0 %v762
    %3474 = vmatpush1.msra.mxu0 %v761
    %3475 = vmatprep.subr.mxu0 %v766
    %3476 = vmatpush1.msra.mxu0 %v765
    %3477 = vmatprep.subr.mxu0 %v770
    %3478 = vmatpush1.msra.mxu0 %v769
    %3479 = vmatprep.subr.mxu0 %v774
    %3480 = vmatpush1.msra.mxu0 %v773
    %3481 = vmatprep.subr.mxu0 %v778
    %3482 = vmatpush1.msra.mxu0 %v777
    %3483 = vmatprep.subr.mxu0 %v782
    %3484 = vmatpush1.msra.mxu0 %v781
    %3485 = vmatprep.subr.mxu0 %v786
    %3486 = vmatpush1.msra.mxu0 %v785
    %3487 = vmatprep.subr.mxu0 %v790
    %3488 = vmatpush1.msra.mxu0 %v789
    %3489 = vmatprep.subr.mxu0 %v794
    %3490 = vmatpush1.msra.mxu0 %v793
    %3491 = vmatprep.subr.mxu0 %v798
    %3492 = vmatpush1.msra.mxu0 %v797
    %3493 = vmatprep.subr.mxu0 %v802
    %3494 = vmatpush1.msra.mxu0 %v801
    %3495 = vmatprep.subr.mxu0 %v806
    %3496 = vmatpush1.msra.mxu0 %v805
    %3497 = vmatprep.subr.mxu0 %v810
    %3498 = vmatpush1.msra.mxu0 %v809
    %3499 = vmatprep.subr.mxu0 %v814
    %3500 = vmatpush1.msra.mxu0 %v813
    %3501 = vmatprep.subr.mxu0 0.0
    %3502 = vmatpush1.msra.mxu0 0.0
    %3503 = vmatprep.subr.mxu0 0.0
    %3504 = vmatpush1.msra.mxu0 0.0
    %3505 = vmatprep.subr.mxu0 0.0
    %3506 = vmatpush1.msra.mxu0 0.0
    %3507 = vmatprep.subr.mxu0 0.0
    %3508 = vmatpush1.msra.mxu0 0.0
    %3509 = vmatprep.subr.mxu0 0.0
    %3510 = vmatpush1.msra.mxu0 0.0
    %3511 = vmatprep.subr.mxu0 0.0
    %3512 = vmatpush1.msra.mxu0 0.0
    %3513 = vmatprep.subr.mxu0 0.0
    %3514 = vmatpush1.msra.mxu0 0.0
    %3515 = vmatprep.subr.mxu0 0.0
    %3516 = vmatpush1.msra.mxu0 0.0
    %3517 = vmatprep.subr.mxu0 0.0
    %3518 = vmatpush1.msra.mxu0 0.0
    %3519 = vmatprep.subr.mxu0 0.0
    %3520 = vmatpush1.msra.mxu0 0.0
    %3521 = vmatprep.subr.mxu0 0.0
    %3522 = vmatpush1.msra.mxu0 0.0
    %3523 = vmatprep.subr.mxu0 0.0
    %3524 = vmatpush1.msra.mxu0 0.0
    %3525 = vmatprep.subr.mxu0 0.0
    %3526 = vmatpush1.msra.mxu0 0.0
    %3527 = vmatprep.subr.mxu0 0.0
    %3528 = vmatpush1.msra.mxu0 0.0
    %3529 = vmatprep.subr.mxu0 0.0
    %3530 = vmatpush1.msra.mxu0 0.0
    %3531 = vmatprep.subr.mxu0 0.0
    %3532 = vmatpush1.msra.mxu0 0.0
    %3533 = vmatprep.mubr.f32.mxu0 0.0
    %3534 = vmatmul.mubr.f32.gmra.mrb[0].mxu0 %v3312
    %v3535 = vpop.f32.mrb[0].mxu0
    %v3536 = vadd.f32 0.0, %v3535
    %v3537 = vpop.f32.mrb[0].mxu0
    %v3538 = vadd.f32 0.0, %v3537
    %3539 = vdwg.mxu0
    %3540 = vmatprep.subr.mxu0 %v756
    %3541 = vmatpush1.msra.mxu0 %v755
    %3542 = vmatprep.subr.mxu0 %v760
    %3543 = vmatpush1.msra.mxu0 %v759
    %3544 = vmatprep.subr.mxu0 %v764
    %3545 = vmatpush1.msra.mxu0 %v763
    %3546 = vmatprep.subr.mxu0 %v768
    %3547 = vmatpush1.msra.mxu0 %v767
    %3548 = vmatprep.subr.mxu0 %v772
    %3549 = vmatpush1.msra.mxu0 %v771
    %3550 = vmatprep.subr.mxu0 %v776
    %3551 = vmatpush1.msra.mxu0 %v775
    %3552 = vmatprep.subr.mxu0 %v780
    %3553 = vmatpush1.msra.mxu0 %v779
    %3554 = vmatprep.subr.mxu0 %v784
    %3555 = vmatpush1.msra.mxu0 %v783
    %3556 = vmatprep.subr.mxu0 %v788
    %3557 = vmatpush1.msra.mxu0 %v787
    %3558 = vmatprep.subr.mxu0 %v792
    %3559 = vmatpush1.msra.mxu0 %v791
    %3560 = vmatprep.subr.mxu0 %v796
    %3561 = vmatpush1.msra.mxu0 %v795
    %3562 = vmatprep.subr.mxu0 %v800
    %3563 = vmatpush1.msra.mxu0 %v799
    %3564 = vmatprep.subr.mxu0 %v804
    %3565 = vmatpush1.msra.mxu0 %v803
    %3566 = vmatprep.subr.mxu0 %v808
    %3567 = vmatpush1.msra.mxu0 %v807
    %3568 = vmatprep.subr.mxu0 %v812
    %3569 = vmatpush1.msra.mxu0 %v811
    %3570 = vmatprep.subr.mxu0 %v816
    %3571 = vmatpush1.msra.mxu0 %v815
    %3572 = vmatprep.subr.mxu0 0.0
    %3573 = vmatpush1.msra.mxu0 0.0
    %3574 = vmatprep.subr.mxu0 0.0
    %3575 = vmatpush1.msra.mxu0 0.0
    %3576 = vmatprep.subr.mxu0 0.0
    %3577 = vmatpush1.msra.mxu0 0.0
    %3578 = vmatprep.subr.mxu0 0.0
    %3579 = vmatpush1.msra.mxu0 0.0
    %3580 = vmatprep.subr.mxu0 0.0
    %3581 = vmatpush1.msra.mxu0 0.0
    %3582 = vmatprep.subr.mxu0 0.0
    %3583 = vmatpush1.msra.mxu0 0.0
    %3584 = vmatprep.subr.mxu0 0.0
    %3585 = vmatpush1.msra.mxu0 0.0
    %3586 = vmatprep.subr.mxu0 0.0
    %3587 = vmatpush1.msra.mxu0 0.0
    %3588 = vmatprep.subr.mxu0 0.0
    %3589 = vmatpush1.msra.mxu0 0.0
    %3590 = vmatprep.subr.mxu0 0.0
    %3591 = vmatpush1.msra.mxu0 0.0
    %3592 = vmatprep.subr.mxu0 0.0
    %3593 = vmatpush1.msra.mxu0 0.0
    %3594 = vmatprep.subr.mxu0 0.0
    %3595 = vmatpush1.msra.mxu0 0.0
    %3596 = vmatprep.subr.mxu0 0.0
    %3597 = vmatpush1.msra.mxu0 0.0
    %3598 = vmatprep.subr.mxu0 0.0
    %3599 = vmatpush1.msra.mxu0 0.0
    %3600 = vmatprep.subr.mxu0 0.0
    %3601 = vmatpush1.msra.mxu0 0.0
    %3602 = vmatprep.subr.mxu0 0.0
    %3603 = vmatpush1.msra.mxu0 0.0
    %3604 = vmatprep.mubr.f32.mxu0 0.0
    %3605 = vmatmul.mubr.f32.gmra.mrb[0].mxu0 %v3312
    %v3606 = vpop.f32.mrb[0].mxu0
    %v3607 = vadd.f32 0.0, %v3606
    %v3608 = vpop.f32.mrb[0].mxu0
    %v3609 = vadd.f32 0.0, %v3608
    %3610 = vdwg.mxu0
    %v3611 = vadd.f32 %v3319, %v3536
    %v3612 = vadd.f32 %v3320, %v3538
    %v3613 = vadd.f32 %v3321, %v3607
    %v3614 = vadd.f32 %v3322, %v3609
    %v3615 = vxor.u32 %v3465, 2147483648
    %v3616 = vmul.f32 %v3615, 1.442695
    %v3617 = vpow.pop %v3616
    %v3618 = vadd.f32 %v3617, 1.0
    %v3619 = vrcp.pop %v3618
    %v3620 = vmul.f32 1.0, %v3619
    %v3621 = vxor.u32 %v3466, 2147483648
    %v3622 = vmul.f32 %v3621, 1.442695
    %v3623 = vpow.pop %v3622
    %v3624 = vadd.f32 %v3623, 1.0
    %v3625 = vrcp.pop %v3624
    %v3626 = vmul.f32 1.0, %v3625
    %v3627 = vtanh.pop %v3467
    %v3628 = vxor.u32 %v3468, 2147483648
    %v3629 = vmul.f32 %v3628, 1.442695
    %v3630 = vpow.pop %v3629
    %v3631 = vadd.f32 %v3630, 1.0
    %v3632 = vrcp.pop %v3631
    %v3633 = vmul.f32 1.0, %v3632
    %v3634 = vmul.f32 %v3626, %v3286
    %v3635 = vmul.f32 %v3620, %v3627
    %v3636 = vadd.f32 %v3634, %v3635
    %v3637 = vtanh.pop %v3636
    %v3638 = vmul.f32 %v3633, %v3637
    %v3639 = vxor.u32 %v3611, 2147483648
    %v3640 = vmul.f32 %v3639, 1.442695
    %v3641 = vpow.pop %v3640
    %v3642 = vadd.f32 %v3641, 1.0
    %v3643 = vrcp.pop %v3642
    %v3644 = vmul.f32 1.0, %v3643
    %v3645 = vxor.u32 %v3612, 2147483648
    %v3646 = vmul.f32 %v3645, 1.442695
    %v3647 = vpow.pop %v3646
    %v3648 = vadd.f32 %v3647, 1.0
    %v3649 = vrcp.pop %v3648
    %v3650 = vmul.f32 1.0, %v3649
    %v3651 = vtanh.pop %v3613
    %v3652 = vxor.u32 %v3614, 2147483648
    %v3653 = vmul.f32 %v3652, 1.442695
    %v3654 = vpow.pop %v3653
    %v3655 = vadd.f32 %v3654, 1.0
    %v3656 = vrcp.pop %v3655
    %v3657 = vmul.f32 1.0, %v3656
    %v3658 = vmul.f32 %v3650, %v3310
    %v3659 = vmul.f32 %v3644, %v3651
    %v3660 = vadd.f32 %v3658, %v3659
    %v3661 = vtanh.pop %v3660
    %v3662 = vmul.f32 %v3657, %v3661
    %3663 = vst [vmem:[%s1177] sm:$0xff] %v3638
    %3664 = vst [vmem:[%s1173 + $0x8] sm:$0xff] %v3662
    %v3665 = vld [vmem:[#allocation3] sm:$0xff]
    %v3666 = vld [vmem:[#allocation3 + $0x8] sm:$0xff]
    %v3667 = vld [vmem:[#allocation3 + $0x10] sm:$0xff]
    %v3668 = vld [vmem:[#allocation3 + $0x18] sm:$0xff]
    %v3669 = vld [vmem:[#allocation3 + $0x20] sm:$0xff]
    %v3670 = vld [vmem:[#allocation3 + $0x28] sm:$0xff]
    %v3671 = vld [vmem:[#allocation3 + $0x30] sm:$0xff]
    %v3672 = vld [vmem:[#allocation3 + $0x38] sm:$0xff]
    %v3673 = vld [vmem:[#allocation3 + $0x40] sm:$0xff]
    %v3674 = vld [vmem:[#allocation3 + $0x48] sm:$0xff]
    %v3675 = vld [vmem:[#allocation3 + $0x50] sm:$0xff]
    %v3676 = vld [vmem:[#allocation3 + $0x58] sm:$0xff]
    %v3677 = vld [vmem:[#allocation3 + $0x60] sm:$0xff]
    %v3678 = vld [vmem:[#allocation3 + $0x68] sm:$0xff]
    %v3679 = vld [vmem:[#allocation3 + $0x70] sm:$0xff]
    %v3680 = vld [vmem:[#allocation3 + $0x78] sm:$0xff]
    %v3681 = vld [vmem:[#allocation10] sm:$0xff]
    %v3682 = vld [vmem:[#allocation10 + $0x8] sm:$0xff]
    %v3683 = vld [vmem:[#allocation10 + $0x10] sm:$0xff]
    %v3684 = vld [vmem:[#allocation10 + $0x18] sm:$0xff]
    %v3685 = vld [vmem:[#allocation10 + $0x20] sm:$0xff]
    %v3686 = vld [vmem:[#allocation10 + $0x28] sm:$0xff]
    %v3687 = vld [vmem:[#allocation10 + $0x30] sm:$0xff]
    %v3688 = vld [vmem:[#allocation10 + $0x38] sm:$0xff]
    %v3689 = vld [vmem:[#allocation10 + $0x40] sm:$0xff]
    %v3690 = vld [vmem:[#allocation10 + $0x48] sm:$0xff]
    %v3691 = vld [vmem:[#allocation10 + $0x50] sm:$0xff]
    %v3692 = vld [vmem:[#allocation10 + $0x58] sm:$0xff]
    %v3693 = vld [vmem:[#allocation10 + $0x60] sm:$0xff]
    %v3694 = vld [vmem:[#allocation10 + $0x68] sm:$0xff]
    %v3695 = vld [vmem:[#allocation10 + $0x70] sm:$0xff]
    %v3696 = vld [vmem:[#allocation10 + $0x78] sm:$0xff]
    %v3697 = vld [vmem:[#allocation10 + $0x80] sm:$0xff]
    %v3698 = vld [vmem:[#allocation10 + $0x88] sm:$0xff]
    %v3699 = vld [vmem:[#allocation10 + $0x90] sm:$0xff]
    %v3700 = vld [vmem:[#allocation10 + $0x98] sm:$0xff]
    %v3701 = vld [vmem:[#allocation10 + $0xa0] sm:$0xff]
    %v3702 = vld [vmem:[#allocation10 + $0xa8] sm:$0xff]
    %v3703 = vld [vmem:[#allocation10 + $0xb0] sm:$0xff]
    %v3704 = vld [vmem:[#allocation10 + $0xb8] sm:$0xff]
    %v3705 = vld [vmem:[#allocation10 + $0xc0] sm:$0xff]
    %v3706 = vld [vmem:[#allocation10 + $0xc8] sm:$0xff]
    %v3707 = vld [vmem:[#allocation10 + $0xd0] sm:$0xff]
    %v3708 = vld [vmem:[#allocation10 + $0xd8] sm:$0xff]
    %v3709 = vld [vmem:[#allocation10 + $0xe0] sm:$0xff]
    %v3710 = vld [vmem:[#allocation10 + $0xe8] sm:$0xff]
    %v3711 = vld [vmem:[#allocation10 + $0xf0] sm:$0xff]
    %v3712 = vld [vmem:[#allocation10 + $0xf8] sm:$0xff]
    %v3713 = vld [vmem:[%s6] sm:$0x1]
    %v3715 = vlaneseq
    %v3716 = vshrl.u32 %v3715, 7
    %v3717 = vsub.s32 0, %v3716
    %v3718 = vrot.slane %v3713, %v3717
    %3720 = vmatprep.subr.mxu0 0.0
    %3721 = vmatpush1.msra.mxu0 %v3681
    %3722 = vmatprep.subr.mxu0 0.0
    %3723 = vmatpush1.msra.mxu0 %v3682
    %3724 = vmatprep.subr.mxu0 0.0
    %3725 = vmatpush1.msra.mxu0 %v3683
    %3726 = vmatprep.subr.mxu0 0.0
    %3727 = vmatpush1.msra.mxu0 %v3684
    %3728 = vmatprep.subr.mxu0 0.0
    %3729 = vmatpush1.msra.mxu0 %v3685
    %3730 = vmatprep.subr.mxu0 0.0
    %3731 = vmatpush1.msra.mxu0 %v3686
    %3732 = vmatprep.subr.mxu0 0.0
    %3733 = vmatpush1.msra.mxu0 %v3687
    %3734 = vmatprep.subr.mxu0 0.0
    %3735 = vmatpush1.msra.mxu0 %v3688
    %3736 = vmatprep.subr.mxu0 0.0
    %3737 = vmatpush1.msra.mxu0 %v3689
    %3738 = vmatprep.subr.mxu0 0.0
    %3739 = vmatpush1.msra.mxu0 %v3690
    %3740 = vmatprep.subr.mxu0 0.0
    %3741 = vmatpush1.msra.mxu0 %v3691
    %3742 = vmatprep.subr.mxu0 0.0
    %3743 = vmatpush1.msra.mxu0 %v3692
    %3744 = vmatprep.subr.mxu0 0.0
    %3745 = vmatpush1.msra.mxu0 %v3693
    %3746 = vmatprep.subr.mxu0 0.0
    %3747 = vmatpush1.msra.mxu0 %v3694
    %3748 = vmatprep.subr.mxu0 0.0
    %3749 = vmatpush1.msra.mxu0 %v3695
    %3750 = vmatprep.subr.mxu0 0.0
    %3751 = vmatpush1.msra.mxu0 %v3696
    %3752 = vmatprep.subr.mxu0 0.0
    %3753 = vmatpush1.msra.mxu0 %v3697
    %3754 = vmatprep.subr.mxu0 0.0
    %3755 = vmatpush1.msra.mxu0 %v3698
    %3756 = vmatprep.subr.mxu0 0.0
    %3757 = vmatpush1.msra.mxu0 %v3699
    %3758 = vmatprep.subr.mxu0 0.0
    %3759 = vmatpush1.msra.mxu0 %v3700
    %3760 = vmatprep.subr.mxu0 0.0
    %3761 = vmatpush1.msra.mxu0 %v3701
    %3762 = vmatprep.subr.mxu0 0.0
    %3763 = vmatpush1.msra.mxu0 %v3702
    %3764 = vmatprep.subr.mxu0 0.0
    %3765 = vmatpush1.msra.mxu0 %v3703
    %3766 = vmatprep.subr.mxu0 0.0
    %3767 = vmatpush1.msra.mxu0 %v3704
    %3768 = vmatprep.subr.mxu0 0.0
    %3769 = vmatpush1.msra.mxu0 %v3705
    %3770 = vmatprep.subr.mxu0 0.0
    %3771 = vmatpush1.msra.mxu0 %v3706
    %3772 = vmatprep.subr.mxu0 0.0
    %3773 = vmatpush1.msra.mxu0 %v3707
    %3774 = vmatprep.subr.mxu0 0.0
    %3775 = vmatpush1.msra.mxu0 %v3708
    %3776 = vmatprep.subr.mxu0 0.0
    %3777 = vmatpush1.msra.mxu0 %v3709
    %3778 = vmatprep.subr.mxu0 0.0
    %3779 = vmatpush1.msra.mxu0 %v3710
    %3780 = vmatprep.subr.mxu0 0.0
    %3781 = vmatpush1.msra.mxu0 %v3711
    %3782 = vmatprep.subr.mxu0 0.0
    %3783 = vmatpush1.msra.mxu0 %v3712
    %3784 = vmatprep.mubr.f32.mxu0 %v3666
    %3785 = vmatmul.mubr.f32.gmra.mrb[0].mxu0 %v3665
    %v3786 = vpop.f32.mrb[0].mxu0
    %v3787 = vadd.f32 %v3718, %v3786
    %v3788 = vpop.f32.mrb[0].mxu0
    %3789 = vmatprep.mubr.f32.mxu0 %v3668
    %3790 = vmatmul.mubr.f32.gmra.mrb[0].mxu0 %v3667
    %v3791 = vpop.f32.mrb[0].mxu0
    %v3792 = vadd.f32 %v3718, %v3791
    %v3793 = vpop.f32.mrb[0].mxu0
    %3794 = vmatprep.mubr.f32.mxu0 %v3670
    %3795 = vmatmul.mubr.f32.gmra.mrb[0].mxu0 %v3669
    %v3796 = vpop.f32.mrb[0].mxu0
    %v3797 = vadd.f32 %v3718, %v3796
    %v3798 = vpop.f32.mrb[0].mxu0
    %3799 = vmatprep.mubr.f32.mxu0 %v3672
    %3800 = vmatmul.mubr.f32.gmra.mrb[0].mxu0 %v3671
    %v3801 = vpop.f32.mrb[0].mxu0
    %v3802 = vadd.f32 %v3718, %v3801
    %v3803 = vpop.f32.mrb[0].mxu0
    %3804 = vmatprep.mubr.f32.mxu0 %v3674
    %3805 = vmatmul.mubr.f32.gmra.mrb[0].mxu0 %v3673
    %v3806 = vpop.f32.mrb[0].mxu0
    %v3807 = vadd.f32 %v3718, %v3806
    %v3808 = vpop.f32.mrb[0].mxu0
    %3809 = vmatprep.mubr.f32.mxu0 %v3676
    %3810 = vmatmul.mubr.f32.gmra.mrb[0].mxu0 %v3675
    %v3811 = vpop.f32.mrb[0].mxu0
    %v3812 = vadd.f32 %v3718, %v3811
    %v3813 = vpop.f32.mrb[0].mxu0
    %3814 = vmatprep.mubr.f32.mxu0 %v3678
    %3815 = vmatmul.mubr.f32.gmra.mrb[0].mxu0 %v3677
    %v3816 = vpop.f32.mrb[0].mxu0
    %v3817 = vadd.f32 %v3718, %v3816
    %v3818 = vpop.f32.mrb[0].mxu0
    %3819 = vmatprep.mubr.f32.mxu0 %v3680
    %3820 = vmatmul.mubr.f32.gmra.mrb[0].mxu0 %v3679
    %v3821 = vpop.f32.mrb[0].mxu0
    %v3822 = vadd.f32 %v3718, %v3821
    %v3823 = vpop.f32.mrb[0].mxu0
    %3824 = vdwg.mxu0
    %3825 = vst [vmem:[#allocation12] sm:$0xff] %v3787
    %3826 = vst [vmem:[#allocation12 + $0x8] sm:$0xff] %v3792
    %3827 = vst [vmem:[#allocation12 + $0x10] sm:$0xff] %v3797
    %3828 = vst [vmem:[#allocation12 + $0x18] sm:$0xff] %v3802
    %3829 = vst [vmem:[#allocation12 + $0x20] sm:$0xff] %v3807
    %3830 = vst [vmem:[#allocation12 + $0x28] sm:$0xff] %v3812
    %3831 = vst [vmem:[#allocation12 + $0x30] sm:$0xff] %v3817
    %3832 = vst [vmem:[#allocation12 + $0x38] sm:$0xff] %v3822
    // Predicated region
    $region46: #{tpu_custom_call.1} parent=1 // pred_check
      _
    $region47: #{tpu_custom_call.1} parent=1 // pred_check_branch
      %3834 = sbr.rel (0) target = $region49
    $region48: #{tpu_custom_call.1} parent=1 // pred_region
      %s3836 = ssub.s32 1024, 1024
      %3837 = vsyncadd [#allocation6], %s3836
      %s3838 = sshll.u32 [#allocation12], 4
      %s3839 = int_to_ptr.vmem [resolvable:$true] %s3838
      %3844 = dma.vmem_to_hbm [thread:$0]  %s3839, 1024, %s7, [#allocation6], 128, 128, 8
    $region49: #{tpu_custom_call.1} parent=1 // pred_fallthru
      _
    // Predicated region
    $region50: #{tpu_custom_call.1} parent=1 // pred_check
      _
    $region51: #{tpu_custom_call.1} parent=1 // pred_check_branch
      %3846 = sbr.rel (0) target = $region53
    $region52: #{tpu_custom_call.1} parent=1 // pred_region
      %3847 = dma.done [#allocation6], 1024
    $region53: #{tpu_custom_call.1} parent=1 // pred_fallthru
      _
    %3848 = vsyncpa [#allocation5], 1
    %3849 = vsyncpa [#allocation8], 1
    %3850 = vsyncpa [#allocation11], 1
    %3851 = vsyncpa [#allocation6], 1

</llo_original>
